<compile_context>
chip_gen: v7x
topology: tpu7x:2x2x1
jax: 0.10.0
libtpu: 0.0.40
codegen_flags: <defaults>
</compile_context>

<pallas_src>
import numpy as np
import jax
import jax.numpy as jnp
from jax.experimental import pallas as pl
from jax.experimental.pallas import tpu as pltpu

NEG_SLOPE = 0.01      # F.leaky_relu default negative_slope
NOISE_DIM = 3
KH = 3                # all convs are 3x3, stride 2, padding 0
H3 = W3 = 7           # final spatial extent (fc1 expects 32*7*7 -> 64x64 input)


def _leaky(x):
    return jnp.where(x > 0, x, NEG_SLOPE * x)


def spectral_normalize(w_hwio, n_iter=50):
    """Divide a conv weight (HWIO) by its spectral norm (converged power iteration).

    # TODO(synk): the original SpectralNorm wrapper keeps a persistent `u` vector and
    # runs one power iteration per forward; here we use the converged fixed point,
    # applied once as setup-time parameter preprocessing (same reparametrization).
    """
    w = np.asarray(w_hwio, np.float64)
    kh, kw, cin, cout = w.shape
    wm = w.transpose(3, 0, 1, 2).reshape(cout, -1)
    u = np.ones((cout,), np.float64)
    v = wm.T @ u
    for _ in range(n_iter):
        v = wm.T @ u
        v /= (np.linalg.norm(v) + 1e-12)
        u = wm @ v
        u /= (np.linalg.norm(u) + 1e-12)
    sigma = float(u @ wm @ v)
    return (w / sigma).astype(np.float32)


def make_discriminator(w1, b1, w2, b2, w3, b3, wfc, bfc, batch):
    """One-time setup for the Pallas Discriminator forward.

    w1/w2/w3: HWIO conv weights (w1, w2 already spectral-normalized, see
    spectral_normalize).  wfc: (7, 7, 32) fc weight in NHWC-flatten order; bfc scalar.
    Returns a jitted forward(x_nchw: (batch, 3, 64, 64) f32) -> (batch, 1) f32.

    # TODO(synk): the original forward feeds the (B,32,7,7) tensor to nn.Linear(32*7*7,1)
    # with no explicit flatten (would error in PyTorch); we implement the intended
    # flatten + Linear.  Matching a torch checkpoint additionally needs permuting the
    # fc weight from CHW-flatten to HWC-flatten order (pure re-indexing).
    """
    w1 = np.asarray(w1, np.float32); b1 = np.asarray(b1, np.float32)
    w2 = np.asarray(w2, np.float32); b2 = np.asarray(b2, np.float32)
    w3 = np.asarray(w3, np.float32); b3 = np.asarray(b3, np.float32)
    wfc = np.asarray(wfc, np.float32); bfc = np.asarray(bfc, np.float32)

    cin = w1.shape[2]
    c1, c2, c3 = w1.shape[-1], w2.shape[-1], w3.shape[-1]
    assert wfc.shape == (H3, W3, c3)

    nr = batch * H3 * W3                  # real output rows (b, oh3, ow3)
    nrp = ((nr + 15) // 16) * 16          # pad to a bf16 sublane-tile multiple
    kp = 9 * KH * KH * cin                # conv1 K: (dx3, dx2, dy1, dx1, cin) = 243
    n1 = 9 * c1                           # conv1 N: (dx3, dx2, c1)            = 288
    n2 = KH * c2                          # conv2 N: (dx3, c2)                 = 96
    m1 = KH * KH * nrp                    # conv1 M: (dy2, dy3, b, oh3, ow3)
    m2 = KH * nrp                         # conv2 M: (dy3, b, oh3, ow3)

    # -------------------- constant operands (built once, on device) --------------------
    # conv1: 9 copies of the compact (27, c1) weight on the block diagonal, one per
    # (dx3, dx2) width-offset pair baked into the lane layout of P1 / Y1.
    w1c = w1.reshape(KH * KH * cin, c1)
    w1blk = np.zeros((kp, n1), np.float32)
    for g in range(9):
        w1blk[g * KH * KH * cin:(g + 1) * KH * KH * cin, g * c1:(g + 1) * c1] = w1c
    b1big = np.tile(b1, 9)[None, :]

    # conv2: per kernel row dy2, 3 copies of the compact (3*c1, c2) weight (one per dx3).
    w2blk = np.zeros((KH, n1, n2), np.float32)
    for dy2 in range(KH):
        blk = w2[dy2].reshape(KH * c1, c2)
        for j in range(KH):
            w2blk[dy2, j * KH * c1:(j + 1) * KH * c1, j * c2:(j + 1) * c2] = blk
    b2big = np.tile(b2, KH)[None, :]

    # conv3: fully compact, one (3*c2, c3) block per kernel row dy3.
    w3c = w3.reshape(KH, KH * c2, c3)
    b3row = b3[None, :]

    # fc1: NHWC-flatten weight tiled over batch + per-image row-sum selector.
    wfc_big = np.zeros((nrp, c3), np.float32)
    wfc_big[:nr] = np.tile(wfc.reshape(H3 * W3, c3), (batch, 1))
    gsum = np.zeros((batch, nrp), np.float32)
    for b in range(batch):
        gsum[b, b * H3 * W3:(b + 1) * H3 * W3] = 1.0
    bfc2 = bfc.reshape(1, 1)

    # gather tables for the composite-receptive-field im2col of x (15x15, stride 8)
    d = np.arange(KH)
    o = np.arange(H3)
    # hh[dy2, dy3, oh3, dy1] = 8*oh3 + 4*dy3 + 2*dy2 + dy1
    hh = (2 * d[:, None, None, None] + 4 * d[None, :, None, None]
          + 8 * o[None, None, :, None] + d[None, None, None, :]).astype(np.int32)
    # ww[ow3, dx3, dx2, dx1] = 8*ow3 + 4*dx3 + 2*dx2 + dx1
    ww = (8 * o[:, None, None, None] + 4 * d[None, :, None, None]
          + 2 * d[None, None, :, None] + d[None, None, None, :]).astype(np.int32)

    ops = dict(
        w1blk=jnp.asarray(w1blk, jnp.bfloat16), b1big=jnp.asarray(b1big),
        w2blk=jnp.asarray(w2blk, jnp.bfloat16), b2big=jnp.asarray(b2big),
        w3c=jnp.asarray(w3c, jnp.bfloat16),     b3row=jnp.asarray(b3row),
        wfc=jnp.asarray(wfc_big), gsum=jnp.asarray(gsum), bfc=jnp.asarray(bfc2),
    )

    # ------------------------------------ kernel ------------------------------------
    def kernel(p1_ref, w1_ref, b1_ref, w2_ref, b2_ref, w3_ref, b3_ref,
               wfc_ref, g_ref, bfc_ref, o_ref):
        f32 = jnp.float32
        bf16 = jnp.bfloat16

        # conv1 + leaky_relu: single MXU pass (dy1/dx1 and the conv2 width offsets
        # are folded into K via the block-diagonal weight).
        y1 = jnp.dot(p1_ref[...], w1_ref[...], preferred_element_type=f32)
        y1 = _leaky(y1 + b1_ref[...]).astype(bf16)                       # (m1, n1)

        # conv2 + leaky_relu: three independent matmuls (one per kernel row dy2) on
        # contiguous, tile-aligned row groups of y1; compact weights, no Toeplitz.
        acc = jnp.dot(y1[0 * m2:1 * m2], w2_ref[0], preferred_element_type=f32)
        acc = acc + jnp.dot(y1[1 * m2:2 * m2], w2_ref[1], preferred_element_type=f32)
        acc = acc + jnp.dot(y1[2 * m2:3 * m2], w2_ref[2], preferred_element_type=f32)
        y2 = _leaky(acc + b2_ref[...]).astype(bf16)                      # (m2, n2)

        # conv3 + leaky_relu: three matmuls with the raw per-row (96, 32) weights.
        acc = jnp.dot(y2[0 * nrp:1 * nrp], w3_ref[0], preferred_element_type=f32)
        acc = acc + jnp.dot(y2[1 * nrp:2 * nrp], w3_ref[1], preferred_element_type=f32)
        acc = acc + jnp.dot(y2[2 * nrp:3 * nrp], w3_ref[2], preferred_element_type=f32)
        y3 = _leaky(acc + b3_ref[...])                                   # (nrp, c3) f32

        # fc1 + leaky_relu: per-image <y3, wfc> via lane reduction + tiny group-sum
        # matmul; fc bias arrives as an SMEM scalar.
        row_sums = jnp.sum(y3 * wfc_ref[...], axis=1, keepdims=True)     # (nrp, 1)
        out = jnp.dot(g_ref[...], row_sums, preferred_element_type=f32) + bfc_ref[0, 0]
        o_ref[...] = _leaky(out)                                         # (batch, 1)

    def vmem(shape):
        n = len(shape)
        return pl.BlockSpec(shape, lambda i, _n=n: (0,) * _n)

    call = pl.pallas_call(
        kernel,
        out_shape=jax.ShapeDtypeStruct((batch, 1), jnp.float32),
        grid_spec=pltpu.PrefetchScalarGridSpec(
            num_scalar_prefetch=0,
            grid=(1,),                                   # whole batch in one step
            in_specs=[
                vmem((m1, kp)),                          # P1 (input im2col)
                vmem((kp, n1)),                          # conv1 block-diag weight
                vmem((1, n1)),                           # conv1 bias
                vmem((KH, n1, n2)),                      # conv2 block-diag weights
                vmem((1, n2)),                           # conv2 bias
                vmem((KH, n2, c3)),                      # conv3 weights
                vmem((1, c3)),                           # conv3 bias
                vmem((nrp, c3)),                         # fc weight (batch-tiled)
                vmem((batch, nrp)),                      # per-image row-sum selector
                pl.BlockSpec(memory_space=pltpu.MemorySpace.SMEM),   # fc bias scalar
            ],
            out_specs=vmem((batch, 1)),
        ),
        compiler_params=pltpu.CompilerParams(
            dimension_semantics=("arbitrary",),
            vmem_limit_bytes=16 * 1024 * 1024,
        ),
    )

    # ----------------------------- per-call wrapper (jitted) -----------------------------
    def forward(x_nchw):
        # Layout plumbing only: gather the composite-receptive-field im2col of x so the
        # kernel sees rows (dy2, dy3, b, oh3, ow3) and lanes (dx3, dx2, dy1, dx1, c).
        x = jnp.transpose(x_nchw, (0, 2, 3, 1)).astype(jnp.float32)      # NHWC
        xh = x[:, hh]                       # (B, dy2, dy3, oh3, dy1, W, C)
        xhw = xh[:, :, :, :, :, ww]         # (B, dy2, dy3, oh3, dy1, ow3, dx3, dx2, dx1, C)
        p = jnp.transpose(xhw, (1, 2, 0, 3, 5, 6, 7, 4, 8, 9))
        p = p.reshape(KH * KH, nr, kp)
        p = jnp.pad(p, ((0, 0), (0, nrp - nr), (0, 0)))
        p1 = p.reshape(m1, kp).astype(jnp.bfloat16)
        return call(p1, ops['w1blk'], ops['b1big'], ops['w2blk'], ops['b2big'],
                    ops['w3c'], ops['b3row'], ops['wfc'], ops['gsum'], ops['bfc'])

    return jax.jit(forward)


# ----------------------------- pure-JAX reference -----------------------------
def ref_forward(x_nchw, w1, b1, w2, b2, w3, b3, wfc, bfc):
    dn = ('NHWC', 'HWIO', 'NHWC')
    bf16 = jnp.bfloat16

    def conv(x, w, b):
        y = jax.lax.conv_general_dilated(
            x.astype(bf16), jnp.asarray(w).astype(bf16), (2, 2), 'VALID',
            dimension_numbers=dn, preferred_element_type=jnp.float32)
        y = y + jnp.asarray(b, jnp.float32)
        return jnp.where(y > 0, y, NEG_SLOPE * y)

    x = jnp.transpose(x_nchw, (0, 2, 3, 1)).astype(jnp.float32)
    y = conv(x, w1, b1)
    y = conv(y, w2, b2)
    y = conv(y, w3, b3)
    Bz = y.shape[0]
    flat = y.reshape(Bz, -1)                                     # NHWC flatten (h, w, c)
    v = jnp.sum(flat * jnp.asarray(wfc, jnp.float32).reshape(1, -1),
                axis=1, keepdims=True) + jnp.asarray(bfc, jnp.float32)
    return jnp.where(v > 0, v, NEG_SLOPE * v)


if __name__ == "__main__":
    key = jax.random.PRNGKey(0)
    kx, kw1, kb1, kw2, kb2, kw3, kb3, kwf, kbf = jax.random.split(key, 9)

    # NOISE_DIM = 3 input channels; 64x64 spatial -> 31 -> 15 -> 7, matching fc1(32*7*7, 1).
    B, Cin, H, W = 2, NOISE_DIM, 64, 64
    C = 32

    x = jax.random.normal(kx, (B, Cin, H, W), jnp.float32)
    w1 = jax.random.normal(kw1, (3, 3, Cin, C), jnp.float32) / np.sqrt(9 * Cin)
    b1 = jax.random.normal(kb1, (C,), jnp.float32) * 0.05
    w2 = jax.random.normal(kw2, (3, 3, C, C), jnp.float32) / np.sqrt(9 * C)
    b2 = jax.random.normal(kb2, (C,), jnp.float32) * 0.05
    w3 = jax.random.normal(kw3, (3, 3, C, C), jnp.float32) / np.sqrt(9 * C)
    b3 = jax.random.normal(kb3, (C,), jnp.float32) * 0.05
    wfc = jax.random.normal(kwf, (7, 7, C), jnp.float32) / np.sqrt(7 * 7 * C)
    bfc = jax.random.normal(kbf, (), jnp.float32) * 0.05

    # SpectralNorm wraps conv1 and conv2: pure weight reparametrization (setup-time).
    w1 = jnp.asarray(spectral_normalize(np.asarray(w1)))
    w2 = jnp.asarray(spectral_normalize(np.asarray(w2)))

    # One-time setup (all constant operands built & transferred here, not per call).
    forward = make_discriminator(np.asarray(w1), np.asarray(b1),
                                 np.asarray(w2), np.asarray(b2),
                                 np.asarray(w3), np.asarray(b3),
                                 np.asarray(wfc), np.asarray(bfc), batch=B)

    out = jax.block_until_ready(forward(x))

    ref = ref_forward(x, w1, b1, w2, b2, w3, b3, wfc, bfc)
    np.testing.assert_allclose(np.asarray(out), np.asarray(ref), rtol=2e-2, atol=2e-2)

    print("KERNEL_OK")
</pallas_src>

<mosaic_0001>
module attributes {stable_mosaic.version = 11 : i64} {
  func.func @kernel(%arg0: i32, %arg1: memref<1008x243xbf16, #tpu.memory_space<vmem>>, %arg2: memref<243x288xbf16, #tpu.memory_space<vmem>>, %arg3: memref<1x288xf32, #tpu.memory_space<vmem>>, %arg4: memref<3x288x96xbf16, #tpu.memory_space<vmem>>, %arg5: memref<1x96xf32, #tpu.memory_space<vmem>>, %arg6: memref<3x96x32xbf16, #tpu.memory_space<vmem>>, %arg7: memref<1x32xf32, #tpu.memory_space<vmem>>, %arg8: memref<112x32xf32, #tpu.memory_space<vmem>>, %arg9: memref<2x112xf32, #tpu.memory_space<vmem>>, %arg10: memref<1x1xf32, #tpu.memory_space<smem>>, %arg11: memref<2x1xf32, #tpu.memory_space<vmem>>) attributes {dimension_semantics = [#tpu.dimension_semantics<arbitrary>], iteration_bounds = array<i64: 1>, scalar_prefetch = 0 : i64, scratch_operands = 0 : i64, tpu.core_type = #tpu.core_type<tc>, window_params = [{pipeline_mode = #tpu.pipeline_mode<synchronous>, transform_indices = @transform_0, window_bounds = array<i64: 1008, 243>}, {pipeline_mode = #tpu.pipeline_mode<synchronous>, transform_indices = @transform_1, window_bounds = array<i64: 243, 288>}, {pipeline_mode = #tpu.pipeline_mode<synchronous>, transform_indices = @transform_2, window_bounds = array<i64: 1, 288>}, {pipeline_mode = #tpu.pipeline_mode<synchronous>, transform_indices = @transform_3, window_bounds = array<i64: 3, 288, 96>}, {pipeline_mode = #tpu.pipeline_mode<synchronous>, transform_indices = @transform_4, window_bounds = array<i64: 1, 96>}, {pipeline_mode = #tpu.pipeline_mode<synchronous>, transform_indices = @transform_5, window_bounds = array<i64: 3, 96, 32>}, {pipeline_mode = #tpu.pipeline_mode<synchronous>, transform_indices = @transform_6, window_bounds = array<i64: 1, 32>}, {pipeline_mode = #tpu.pipeline_mode<synchronous>, transform_indices = @transform_7, window_bounds = array<i64: 112, 32>}, {pipeline_mode = #tpu.pipeline_mode<synchronous>, transform_indices = @transform_8, window_bounds = array<i64: 2, 112>}, {transform_indices = @transform_9, window_bounds = array<i64: 1, 1>}, {pipeline_mode = #tpu.pipeline_mode<synchronous>, transform_indices = @transform_10, window_bounds = array<i64: 2, 1>}]} {
    %c0 = arith.constant 0 : index
    %c0_0 = arith.constant 0 : index
    %0 = vector.load %arg1[%c0, %c0_0] : memref<1008x243xbf16, #tpu.memory_space<vmem>>, vector<1008x243xbf16>
    %c0_1 = arith.constant 0 : index
    %c0_2 = arith.constant 0 : index
    %1 = vector.load %arg2[%c0_1, %c0_2] : memref<243x288xbf16, #tpu.memory_space<vmem>>, vector<243x288xbf16>
    %cst = arith.constant dense<0.000000e+00> : vector<1008x288xf32>
    %2 = tpu.matmul %0, %1, %cst {dimension_numbers = #tpu.dot_dimension_numbers<[1], [0], [0], [1], [0, 0, 1, 1], [], []>} : vector<1008x243xbf16>, vector<243x288xbf16>, vector<1008x288xf32> -> vector<1008x288xf32>
    %c0_3 = arith.constant 0 : index
    %c0_4 = arith.constant 0 : index
    %3 = vector.load %arg3[%c0_3, %c0_4] : memref<1x288xf32, #tpu.memory_space<vmem>>, vector<1x288xf32>
    %4 = vector.broadcast %3 : vector<1x288xf32> to vector<1008x288xf32>
    %5 = arith.addf %2, %4 : vector<1008x288xf32>
    %cst_5 = arith.constant 0.000000e+00 : f32
    %6 = vector.broadcast %cst_5 : f32 to vector<1008x288xf32>
    %7 = arith.cmpf ogt, %5, %6 : vector<1008x288xf32>
    %cst_6 = arith.constant 0.00999999977 : f32
    %8 = vector.broadcast %cst_6 : f32 to vector<1008x288xf32>
    %9 = arith.mulf %8, %5 : vector<1008x288xf32>
    %10 = arith.select %7, %5, %9 : vector<1008x288xi1>, vector<1008x288xf32>
    %11 = arith.truncf %10 : vector<1008x288xf32> to vector<1008x288xbf16>
    %12 = vector.extract_strided_slice %11 {offsets = [0, 0], sizes = [336, 288], strides = [1, 1]} : vector<1008x288xbf16> to vector<336x288xbf16>
    %c0_7 = arith.constant 0 : index
    %c0_8 = arith.constant 0 : index
    %c0_9 = arith.constant 0 : index
    %13 = vector.load %arg4[%c0_7, %c0_8, %c0_9] : memref<3x288x96xbf16, #tpu.memory_space<vmem>>, vector<1x288x96xbf16>
    %14 = vector.shape_cast %13 : vector<1x288x96xbf16> to vector<288x96xbf16>
    %cst_10 = arith.constant dense<0.000000e+00> : vector<336x96xf32>
    %15 = tpu.matmul %12, %14, %cst_10 {dimension_numbers = #tpu.dot_dimension_numbers<[1], [0], [0], [1], [0, 0, 1, 1], [], []>} : vector<336x288xbf16>, vector<288x96xbf16>, vector<336x96xf32> -> vector<336x96xf32>
    %16 = vector.extract_strided_slice %11 {offsets = [336, 0], sizes = [336, 288], strides = [1, 1]} : vector<1008x288xbf16> to vector<336x288xbf16>
    %c1 = arith.constant 1 : index
    %c0_11 = arith.constant 0 : index
    %c0_12 = arith.constant 0 : index
    %17 = vector.load %arg4[%c1, %c0_11, %c0_12] : memref<3x288x96xbf16, #tpu.memory_space<vmem>>, vector<1x288x96xbf16>
    %18 = vector.shape_cast %17 : vector<1x288x96xbf16> to vector<288x96xbf16>
    %cst_13 = arith.constant dense<0.000000e+00> : vector<336x96xf32>
    %19 = tpu.matmul %16, %18, %cst_13 {dimension_numbers = #tpu.dot_dimension_numbers<[1], [0], [0], [1], [0, 0, 1, 1], [], []>} : vector<336x288xbf16>, vector<288x96xbf16>, vector<336x96xf32> -> vector<336x96xf32>
    %20 = arith.addf %15, %19 : vector<336x96xf32>
    %21 = vector.extract_strided_slice %11 {offsets = [672, 0], sizes = [336, 288], strides = [1, 1]} : vector<1008x288xbf16> to vector<336x288xbf16>
    %c2 = arith.constant 2 : index
    %c0_14 = arith.constant 0 : index
    %c0_15 = arith.constant 0 : index
    %22 = vector.load %arg4[%c2, %c0_14, %c0_15] : memref<3x288x96xbf16, #tpu.memory_space<vmem>>, vector<1x288x96xbf16>
    %23 = vector.shape_cast %22 : vector<1x288x96xbf16> to vector<288x96xbf16>
    %cst_16 = arith.constant dense<0.000000e+00> : vector<336x96xf32>
    %24 = tpu.matmul %21, %23, %cst_16 {dimension_numbers = #tpu.dot_dimension_numbers<[1], [0], [0], [1], [0, 0, 1, 1], [], []>} : vector<336x288xbf16>, vector<288x96xbf16>, vector<336x96xf32> -> vector<336x96xf32>
    %25 = arith.addf %20, %24 : vector<336x96xf32>
    %c0_17 = arith.constant 0 : index
    %c0_18 = arith.constant 0 : index
    %26 = vector.load %arg5[%c0_17, %c0_18] : memref<1x96xf32, #tpu.memory_space<vmem>>, vector<1x96xf32>
    %27 = vector.broadcast %26 : vector<1x96xf32> to vector<336x96xf32>
    %28 = arith.addf %25, %27 : vector<336x96xf32>
    %cst_19 = arith.constant 0.000000e+00 : f32
    %29 = vector.broadcast %cst_19 : f32 to vector<336x96xf32>
    %30 = arith.cmpf ogt, %28, %29 : vector<336x96xf32>
    %cst_20 = arith.constant 0.00999999977 : f32
    %31 = vector.broadcast %cst_20 : f32 to vector<336x96xf32>
    %32 = arith.mulf %31, %28 : vector<336x96xf32>
    %33 = arith.select %30, %28, %32 : vector<336x96xi1>, vector<336x96xf32>
    %34 = arith.truncf %33 : vector<336x96xf32> to vector<336x96xbf16>
    %35 = vector.extract_strided_slice %34 {offsets = [0, 0], sizes = [112, 96], strides = [1, 1]} : vector<336x96xbf16> to vector<112x96xbf16>
    %c0_21 = arith.constant 0 : index
    %c0_22 = arith.constant 0 : index
    %c0_23 = arith.constant 0 : index
    %36 = vector.load %arg6[%c0_21, %c0_22, %c0_23] : memref<3x96x32xbf16, #tpu.memory_space<vmem>>, vector<1x96x32xbf16>
    %37 = vector.shape_cast %36 : vector<1x96x32xbf16> to vector<96x32xbf16>
    %cst_24 = arith.constant dense<0.000000e+00> : vector<112x32xf32>
    %38 = tpu.matmul %35, %37, %cst_24 {dimension_numbers = #tpu.dot_dimension_numbers<[1], [0], [0], [1], [0, 0, 1, 1], [], []>} : vector<112x96xbf16>, vector<96x32xbf16>, vector<112x32xf32> -> vector<112x32xf32>
    %39 = vector.extract_strided_slice %34 {offsets = [112, 0], sizes = [112, 96], strides = [1, 1]} : vector<336x96xbf16> to vector<112x96xbf16>
    %c1_25 = arith.constant 1 : index
    %c0_26 = arith.constant 0 : index
    %c0_27 = arith.constant 0 : index
    %40 = vector.load %arg6[%c1_25, %c0_26, %c0_27] : memref<3x96x32xbf16, #tpu.memory_space<vmem>>, vector<1x96x32xbf16>
    %41 = vector.shape_cast %40 : vector<1x96x32xbf16> to vector<96x32xbf16>
    %cst_28 = arith.constant dense<0.000000e+00> : vector<112x32xf32>
    %42 = tpu.matmul %39, %41, %cst_28 {dimension_numbers = #tpu.dot_dimension_numbers<[1], [0], [0], [1], [0, 0, 1, 1], [], []>} : vector<112x96xbf16>, vector<96x32xbf16>, vector<112x32xf32> -> vector<112x32xf32>
    %43 = arith.addf %38, %42 : vector<112x32xf32>
    %44 = vector.extract_strided_slice %34 {offsets = [224, 0], sizes = [112, 96], strides = [1, 1]} : vector<336x96xbf16> to vector<112x96xbf16>
    %c2_29 = arith.constant 2 : index
    %c0_30 = arith.constant 0 : index
    %c0_31 = arith.constant 0 : index
    %45 = vector.load %arg6[%c2_29, %c0_30, %c0_31] : memref<3x96x32xbf16, #tpu.memory_space<vmem>>, vector<1x96x32xbf16>
    %46 = vector.shape_cast %45 : vector<1x96x32xbf16> to vector<96x32xbf16>
    %cst_32 = arith.constant dense<0.000000e+00> : vector<112x32xf32>
    %47 = tpu.matmul %44, %46, %cst_32 {dimension_numbers = #tpu.dot_dimension_numbers<[1], [0], [0], [1], [0, 0, 1, 1], [], []>} : vector<112x96xbf16>, vector<96x32xbf16>, vector<112x32xf32> -> vector<112x32xf32>
    %48 = arith.addf %43, %47 : vector<112x32xf32>
    %c0_33 = arith.constant 0 : index
    %c0_34 = arith.constant 0 : index
    %49 = vector.load %arg7[%c0_33, %c0_34] : memref<1x32xf32, #tpu.memory_space<vmem>>, vector<1x32xf32>
    %50 = vector.broadcast %49 : vector<1x32xf32> to vector<112x32xf32>
    %51 = arith.addf %48, %50 : vector<112x32xf32>
    %cst_35 = arith.constant 0.000000e+00 : f32
    %52 = vector.broadcast %cst_35 : f32 to vector<112x32xf32>
    %53 = arith.cmpf ogt, %51, %52 : vector<112x32xf32>
    %cst_36 = arith.constant 0.00999999977 : f32
    %54 = vector.broadcast %cst_36 : f32 to vector<112x32xf32>
    %55 = arith.mulf %54, %51 : vector<112x32xf32>
    %56 = arith.select %53, %51, %55 : vector<112x32xi1>, vector<112x32xf32>
    %c0_37 = arith.constant 0 : index
    %c0_38 = arith.constant 0 : index
    %57 = vector.load %arg8[%c0_37, %c0_38] : memref<112x32xf32, #tpu.memory_space<vmem>>, vector<112x32xf32>
    %58 = arith.mulf %56, %57 : vector<112x32xf32>
    %cst_39 = arith.constant dense<0.000000e+00> : vector<112xf32>
    %59 = vector.multi_reduction <add>, %58, %cst_39 [1] : vector<112x32xf32> to vector<112xf32>
    %60 = vector.shape_cast %59 : vector<112xf32> to vector<112x1xf32>
    %c0_40 = arith.constant 0 : index
    %c0_41 = arith.constant 0 : index
    %61 = vector.load %arg9[%c0_40, %c0_41] : memref<2x112xf32, #tpu.memory_space<vmem>>, vector<2x112xf32>
    %cst_42 = arith.constant dense<0.000000e+00> : vector<2x1xf32>
    %62 = tpu.matmul %61, %60, %cst_42 {dimension_numbers = #tpu.dot_dimension_numbers<[1], [0], [0], [1], [0, 0, 1, 1], [], []>} : vector<2x112xf32>, vector<112x1xf32>, vector<2x1xf32> -> vector<2x1xf32>
    %c0_43 = arith.constant 0 : index
    %c0_44 = arith.constant 0 : index
    %63 = memref.load %arg10[%c0_43, %c0_44] : memref<1x1xf32, #tpu.memory_space<smem>>
    %64 = vector.broadcast %63 : f32 to vector<2x1xf32>
    %65 = arith.addf %62, %64 : vector<2x1xf32>
    %cst_45 = arith.constant 0.000000e+00 : f32
    %66 = vector.broadcast %cst_45 : f32 to vector<2x1xf32>
    %67 = arith.cmpf ogt, %65, %66 : vector<2x1xf32>
    %cst_46 = arith.constant 0.00999999977 : f32
    %68 = vector.broadcast %cst_46 : f32 to vector<2x1xf32>
    %69 = arith.mulf %68, %65 : vector<2x1xf32>
    %70 = arith.select %67, %65, %69 : vector<2x1xi1>, vector<2x1xf32>
    %c0_47 = arith.constant 0 : index
    %c0_48 = arith.constant 0 : index
    %71 = vector.load %arg11[%c0_47, %c0_48] : memref<2x1xf32, #tpu.memory_space<vmem>>, vector<2x1xf32>
    tpu.vector_store %arg11[%c0_47, %c0_48], %70 {strides = array<i32>} : memref<2x1xf32, #tpu.memory_space<vmem>>, vector<2x1xf32>,
    return
  }
  func.func @transform_0(%arg0: i32) -> (i32, i32) {
    %c0_i32 = arith.constant 0 : i32
    %c0_i32_0 = arith.constant 0 : i32
    %c0_i32_1 = arith.constant 0 : i32
    return %c0_i32, %c0_i32_0 : i32, i32
  }
  func.func @transform_1(%arg0: i32) -> (i32, i32) {
    %c0_i32 = arith.constant 0 : i32
    %c0_i32_0 = arith.constant 0 : i32
    %c0_i32_1 = arith.constant 0 : i32
    return %c0_i32, %c0_i32_0 : i32, i32
  }
  func.func @transform_2(%arg0: i32) -> (i32, i32) {
    %c0_i32 = arith.constant 0 : i32
    %c0_i32_0 = arith.constant 0 : i32
    %c0_i32_1 = arith.constant 0 : i32
    return %c0_i32, %c0_i32_0 : i32, i32
  }
  func.func @transform_3(%arg0: i32) -> (i32, i32, i32) {
    %c0_i32 = arith.constant 0 : i32
    %c0_i32_0 = arith.constant 0 : i32
    %c0_i32_1 = arith.constant 0 : i32
    %c0_i32_2 = arith.constant 0 : i32
    return %c0_i32, %c0_i32_0, %c0_i32_1 : i32, i32, i32
  }
  func.func @transform_4(%arg0: i32) -> (i32, i32) {
    %c0_i32 = arith.constant 0 : i32
    %c0_i32_0 = arith.constant 0 : i32
    %c0_i32_1 = arith.constant 0 : i32
    return %c0_i32, %c0_i32_0 : i32, i32
  }
  func.func @transform_5(%arg0: i32) -> (i32, i32, i32) {
    %c0_i32 = arith.constant 0 : i32
    %c0_i32_0 = arith.constant 0 : i32
    %c0_i32_1 = arith.constant 0 : i32
    %c0_i32_2 = arith.constant 0 : i32
    return %c0_i32, %c0_i32_0, %c0_i32_1 : i32, i32, i32
  }
  func.func @transform_6(%arg0: i32) -> (i32, i32) {
    %c0_i32 = arith.constant 0 : i32
    %c0_i32_0 = arith.constant 0 : i32
    %c0_i32_1 = arith.constant 0 : i32
    return %c0_i32, %c0_i32_0 : i32, i32
  }
  func.func @transform_7(%arg0: i32) -> (i32, i32) {
    %c0_i32 = arith.constant 0 : i32
    %c0_i32_0 = arith.constant 0 : i32
    %c0_i32_1 = arith.constant 0 : i32
    return %c0_i32, %c0_i32_0 : i32, i32
  }
  func.func @transform_8(%arg0: i32) -> (i32, i32) {
    %c0_i32 = arith.constant 0 : i32
    %c0_i32_0 = arith.constant 0 : i32
    %c0_i32_1 = arith.constant 0 : i32
    return %c0_i32, %c0_i32_0 : i32, i32
  }
  func.func @transform_9(%arg0: i32) -> (i32, i32) {
    %c0_i32 = arith.constant 0 : i32
    %c0_i32_0 = arith.constant 0 : i32
    %c0_i32_1 = arith.constant 0 : i32
    return %c0_i32, %c0_i32_0 : i32, i32
  }
  func.func @transform_10(%arg0: i32) -> (i32, i32) {
    %c0_i32 = arith.constant 0 : i32
    %c0_i32_0 = arith.constant 0 : i32
    %c0_i32_1 = arith.constant 0 : i32
    return %c0_i32, %c0_i32_0 : i32, i32
  }
}

</mosaic_0001>

<llo_original>
// kernel: forward.1
$region0: #{forward.1}
  #allocation0 [shape = 'u32[]', space=smem, size = 0x4, offset = 0x4, fixed_abs, tag = 'smem constant byte address 0x4 - core index']
  #allocation1 [shape = 'u32[144,128]{1,0:T(1,128)}', space=vmem, size = 0x12000, scoped, tag = 'internal scratch']
  #allocation2 [shape = 'f32[1,1]{1,0:T(1,128)S(6)}', space=smem, size = 0x200, scoped, tag = 'scoped memory for forward.1']
  %s0 = inlined_call_operand.vmem [shape: bf16[1008,243], index: 0, kind: input, shape index: {}]
  %s1 = inlined_call_operand.vmem [shape: bf16[243,288], index: 1, kind: input, shape index: {}]
  %s2 = inlined_call_operand.vmem [shape: f32[1,288], index: 2, kind: input, shape index: {}]
  %s3 = inlined_call_operand.vmem [shape: bf16[3,288,96], index: 3, kind: input, shape index: {}]
  %s4 = inlined_call_operand.vmem [shape: f32[1,96], index: 4, kind: input, shape index: {}]
  %s5 = inlined_call_operand.vmem [shape: bf16[3,96,32], index: 5, kind: input, shape index: {}]
  %s6 = inlined_call_operand.vmem [shape: f32[1,32], index: 6, kind: input, shape index: {}]
  %s7 = inlined_call_operand.vmem [shape: f32[112,32], index: 7, kind: input, shape index: {}]
  %s8 = inlined_call_operand.vmem [shape: f32[2,112], index: 8, kind: input, shape index: {}]
  %s9 = inlined_call_operand.<no memory space> [shape: f32[1,1], index: 9, kind: input, shape index: {}]
  %s10 = inlined_call_operand.vmem [shape: f32[2,1], index: 10, kind: output, shape index: {}]
  %s11 = sld [smem:[#allocation0]]
  $region50: #{forward.1} parent=0
    _
  %s13 = ssub.s32 1, %s11
  %s14 = scalar_select 0, %s13, %s11
  %15 = sst [smem:[#allocation2]] %s9
  // Predicated region
  $region2: #{forward.1} parent=0 // pred_check
    _
  $region3: #{forward.1} parent=0 // pred_check_branch
    %17 = sbr.rel (0) target = $region5
  $region4: #{forward.1} parent=0 // pred_region
    _
  $region5: #{forward.1} parent=0 // pred_fallthru
    _
  // Predicated region
  $region6: #{forward.1} parent=0 // pred_check
    _
  $region7: #{forward.1} parent=0 // pred_check_branch
    %19 = sbr.rel (0) target = $region9
  $region8: #{forward.1} parent=0 // pred_region
    _
  $region9: #{forward.1} parent=0 // pred_fallthru
    _
  // Predicated region
  $region10: #{forward.1} parent=0 // pred_check
    _
  $region11: #{forward.1} parent=0 // pred_check_branch
    %21 = sbr.rel (0) target = $region13
  $region12: #{forward.1} parent=0 // pred_region
    _
  $region13: #{forward.1} parent=0 // pred_fallthru
    _
  // Predicated region
  $region14: #{forward.1} parent=0 // pred_check
    _
  $region15: #{forward.1} parent=0 // pred_check_branch
    %23 = sbr.rel (0) target = $region17
  $region16: #{forward.1} parent=0 // pred_region
    _
  $region17: #{forward.1} parent=0 // pred_fallthru
    _
  // Predicated region
  $region18: #{forward.1} parent=0 // pred_check
    _
  $region19: #{forward.1} parent=0 // pred_check_branch
    %25 = sbr.rel (0) target = $region21
  $region20: #{forward.1} parent=0 // pred_region
    _
  $region21: #{forward.1} parent=0 // pred_fallthru
    _
  // Predicated region
  $region22: #{forward.1} parent=0 // pred_check
    _
  $region23: #{forward.1} parent=0 // pred_check_branch
    %27 = sbr.rel (0) target = $region25
  $region24: #{forward.1} parent=0 // pred_region
    _
  $region25: #{forward.1} parent=0 // pred_fallthru
    _
  // Predicated region
  $region26: #{forward.1} parent=0 // pred_check
    _
  $region27: #{forward.1} parent=0 // pred_check_branch
    %29 = sbr.rel (0) target = $region29
  $region28: #{forward.1} parent=0 // pred_region
    _
  $region29: #{forward.1} parent=0 // pred_fallthru
    _
  // Predicated region
  $region30: #{forward.1} parent=0 // pred_check
    _
  $region31: #{forward.1} parent=0 // pred_check_branch
    %31 = sbr.rel (0) target = $region33
  $region32: #{forward.1} parent=0 // pred_region
    _
  $region33: #{forward.1} parent=0 // pred_fallthru
    _
  // Predicated region
  $region34: #{forward.1} parent=0 // pred_check
    _
  $region35: #{forward.1} parent=0 // pred_check_branch
    %33 = sbr.rel (0) target = $region37
  $region36: #{forward.1} parent=0 // pred_region
    _
  $region37: #{forward.1} parent=0 // pred_fallthru
    _
  // Predicated region
  $region38: #{forward.1} parent=0 // pred_check
    _
  $region39: #{forward.1} parent=0 // pred_check_branch
    %35 = sbr.rel (0) target = $region41
  $region40: #{forward.1} parent=0 // pred_region
    _
  $region41: #{forward.1} parent=0 // pred_fallthru
    _
  %v37 = vld [vmem:[%s0] sm:$0xff]
  %v38 = vld [vmem:[%s0 + $0x8] sm:$0xff]
  %v39 = vld [vmem:[%s0 + $0x10] sm:$0xff]
  %v40 = vld [vmem:[%s0 + $0x18] sm:$0xff]
  %v41 = vld [vmem:[%s0 + $0x20] sm:$0xff]
  %v42 = vld [vmem:[%s0 + $0x28] sm:$0xff]
  %v43 = vld [vmem:[%s0 + $0x30] sm:$0xff]
  %v44 = vld [vmem:[%s0 + $0x38] sm:$0xff]
  %v45 = vld [vmem:[%s0 + $0x40] sm:$0xff]
  %v46 = vld [vmem:[%s0 + $0x48] sm:$0xff]
  %v47 = vld [vmem:[%s0 + $0x50] sm:$0xff]
  %v48 = vld [vmem:[%s0 + $0x58] sm:$0xff]
  %v49 = vld [vmem:[%s0 + $0x60] sm:$0xff]
  %v50 = vld [vmem:[%s0 + $0x68] sm:$0xff]
  %v51 = vld [vmem:[%s0 + $0x70] sm:$0xff]
  %v52 = vld [vmem:[%s0 + $0x78] sm:$0xff]
  %v53 = vld [vmem:[%s0 + $0x80] sm:$0xff]
  %v54 = vld [vmem:[%s0 + $0x88] sm:$0xff]
  %v55 = vld [vmem:[%s0 + $0x90] sm:$0xff]
  %v56 = vld [vmem:[%s0 + $0x98] sm:$0xff]
  %v57 = vld [vmem:[%s0 + $0xa0] sm:$0xff]
  %v58 = vld [vmem:[%s0 + $0xa8] sm:$0xff]
  %v59 = vld [vmem:[%s0 + $0xb0] sm:$0xff]
  %v60 = vld [vmem:[%s0 + $0xb8] sm:$0xff]
  %v61 = vld [vmem:[%s0 + $0xc0] sm:$0xff]
  %v62 = vld [vmem:[%s0 + $0xc8] sm:$0xff]
  %v63 = vld [vmem:[%s0 + $0xd0] sm:$0xff]
  %v64 = vld [vmem:[%s0 + $0xd8] sm:$0xff]
  %v65 = vld [vmem:[%s0 + $0xe0] sm:$0xff]
  %v66 = vld [vmem:[%s0 + $0xe8] sm:$0xff]
  %v67 = vld [vmem:[%s0 + $0xf0] sm:$0xff]
  %v68 = vld [vmem:[%s0 + $0xf8] sm:$0xff]
  %v69 = vld [vmem:[%s0 + $0x100] sm:$0xff]
  %v70 = vld [vmem:[%s0 + $0x108] sm:$0xff]
  %v71 = vld [vmem:[%s0 + $0x110] sm:$0xff]
  %v72 = vld [vmem:[%s0 + $0x118] sm:$0xff]
  %v73 = vld [vmem:[%s0 + $0x120] sm:$0xff]
  %v74 = vld [vmem:[%s0 + $0x128] sm:$0xff]
  %v75 = vld [vmem:[%s0 + $0x130] sm:$0xff]
  %v76 = vld [vmem:[%s0 + $0x138] sm:$0xff]
  %v77 = vld [vmem:[%s0 + $0x140] sm:$0xff]
  %v78 = vld [vmem:[%s0 + $0x148] sm:$0xff]
  %v79 = vld [vmem:[%s0 + $0x150] sm:$0xff]
  %v80 = vld [vmem:[%s0 + $0x158] sm:$0xff]
  %v81 = vld [vmem:[%s0 + $0x160] sm:$0xff]
  %v82 = vld [vmem:[%s0 + $0x168] sm:$0xff]
  %v83 = vld [vmem:[%s0 + $0x170] sm:$0xff]
  %v84 = vld [vmem:[%s0 + $0x178] sm:$0xff]
  %v85 = vld [vmem:[%s0 + $0x180] sm:$0xff]
  %v86 = vld [vmem:[%s0 + $0x188] sm:$0xff]
  %v87 = vld [vmem:[%s0 + $0x190] sm:$0xff]
  %v88 = vld [vmem:[%s0 + $0x198] sm:$0xff]
  %v89 = vld [vmem:[%s0 + $0x1a0] sm:$0xff]
  %v90 = vld [vmem:[%s0 + $0x1a8] sm:$0xff]
  %v91 = vld [vmem:[%s0 + $0x1b0] sm:$0xff]
  %v92 = vld [vmem:[%s0 + $0x1b8] sm:$0xff]
  %v93 = vld [vmem:[%s0 + $0x1c0] sm:$0xff]
  %v94 = vld [vmem:[%s0 + $0x1c8] sm:$0xff]
  %v95 = vld [vmem:[%s0 + $0x1d0] sm:$0xff]
  %v96 = vld [vmem:[%s0 + $0x1d8] sm:$0xff]
  %v97 = vld [vmem:[%s0 + $0x1e0] sm:$0xff]
  %v98 = vld [vmem:[%s0 + $0x1e8] sm:$0xff]
  %v99 = vld [vmem:[%s0 + $0x1f0] sm:$0xff]
  %v100 = vld [vmem:[%s0 + $0x1f8] sm:$0xff]
  %v101 = vld [vmem:[%s0 + $0x200] sm:$0xff]
  %v102 = vld [vmem:[%s0 + $0x208] sm:$0xff]
  %v103 = vld [vmem:[%s0 + $0x210] sm:$0xff]
  %v104 = vld [vmem:[%s0 + $0x218] sm:$0xff]
  %v105 = vld [vmem:[%s0 + $0x220] sm:$0xff]
  %v106 = vld [vmem:[%s0 + $0x228] sm:$0xff]
  %v107 = vld [vmem:[%s0 + $0x230] sm:$0xff]
  %v108 = vld [vmem:[%s0 + $0x238] sm:$0xff]
  %v109 = vld [vmem:[%s0 + $0x240] sm:$0xff]
  %v110 = vld [vmem:[%s0 + $0x248] sm:$0xff]
  %v111 = vld [vmem:[%s0 + $0x250] sm:$0xff]
  %v112 = vld [vmem:[%s0 + $0x258] sm:$0xff]
  %v113 = vld [vmem:[%s0 + $0x260] sm:$0xff]
  %v114 = vld [vmem:[%s0 + $0x268] sm:$0xff]
  %v115 = vld [vmem:[%s0 + $0x270] sm:$0xff]
  %v116 = vld [vmem:[%s0 + $0x278] sm:$0xff]
  %v117 = vld [vmem:[%s0 + $0x280] sm:$0xff]
  %v118 = vld [vmem:[%s0 + $0x288] sm:$0xff]
  %v119 = vld [vmem:[%s0 + $0x290] sm:$0xff]
  %v120 = vld [vmem:[%s0 + $0x298] sm:$0xff]
  %v121 = vld [vmem:[%s0 + $0x2a0] sm:$0xff]
  %v122 = vld [vmem:[%s0 + $0x2a8] sm:$0xff]
  %v123 = vld [vmem:[%s0 + $0x2b0] sm:$0xff]
  %v124 = vld [vmem:[%s0 + $0x2b8] sm:$0xff]
  %v125 = vld [vmem:[%s0 + $0x2c0] sm:$0xff]
  %v126 = vld [vmem:[%s0 + $0x2c8] sm:$0xff]
  %v127 = vld [vmem:[%s0 + $0x2d0] sm:$0xff]
  %v128 = vld [vmem:[%s0 + $0x2d8] sm:$0xff]
  %v129 = vld [vmem:[%s0 + $0x2e0] sm:$0xff]
  %v130 = vld [vmem:[%s0 + $0x2e8] sm:$0xff]
  %v131 = vld [vmem:[%s0 + $0x2f0] sm:$0xff]
  %v132 = vld [vmem:[%s0 + $0x2f8] sm:$0xff]
  %v133 = vld [vmem:[%s0 + $0x300] sm:$0xff]
  %v134 = vld [vmem:[%s0 + $0x308] sm:$0xff]
  %v135 = vld [vmem:[%s0 + $0x310] sm:$0xff]
  %v136 = vld [vmem:[%s0 + $0x318] sm:$0xff]
  %v137 = vld [vmem:[%s0 + $0x320] sm:$0xff]
  %v138 = vld [vmem:[%s0 + $0x328] sm:$0xff]
  %v139 = vld [vmem:[%s0 + $0x330] sm:$0xff]
  %v140 = vld [vmem:[%s0 + $0x338] sm:$0xff]
  %v141 = vld [vmem:[%s0 + $0x340] sm:$0xff]
  %v142 = vld [vmem:[%s0 + $0x348] sm:$0xff]
  %v143 = vld [vmem:[%s0 + $0x350] sm:$0xff]
  %v144 = vld [vmem:[%s0 + $0x358] sm:$0xff]
  %v145 = vld [vmem:[%s0 + $0x360] sm:$0xff]
  %v146 = vld [vmem:[%s0 + $0x368] sm:$0xff]
  %v147 = vld [vmem:[%s0 + $0x370] sm:$0xff]
  %v148 = vld [vmem:[%s0 + $0x378] sm:$0xff]
  %v149 = vld [vmem:[%s0 + $0x380] sm:$0xff]
  %v150 = vld [vmem:[%s0 + $0x388] sm:$0xff]
  %v151 = vld [vmem:[%s0 + $0x390] sm:$0xff]
  %v152 = vld [vmem:[%s0 + $0x398] sm:$0xff]
  %v153 = vld [vmem:[%s0 + $0x3a0] sm:$0xff]
  %v154 = vld [vmem:[%s0 + $0x3a8] sm:$0xff]
  %v155 = vld [vmem:[%s0 + $0x3b0] sm:$0xff]
  %v156 = vld [vmem:[%s0 + $0x3b8] sm:$0xff]
  %v157 = vld [vmem:[%s0 + $0x3c0] sm:$0xff]
  %v158 = vld [vmem:[%s0 + $0x3c8] sm:$0xff]
  %v159 = vld [vmem:[%s0 + $0x3d0] sm:$0xff]
  %v160 = vld [vmem:[%s0 + $0x3d8] sm:$0xff]
  %v161 = vld [vmem:[%s0 + $0x3e0] sm:$0xff]
  %v162 = vld [vmem:[%s0 + $0x3e8] sm:$0xff]
  %v163 = vld [vmem:[%s1] sm:$0xff]
  %v164 = vld [vmem:[%s1 + $0x8] sm:$0xf]
  %v165 = vld [vmem:[%s1 + $0xc] sm:$0xff]
  %v166 = vld [vmem:[%s1 + $0x14] sm:$0xf]
  %v167 = vld [vmem:[%s1 + $0x18] sm:$0xff]
  %v168 = vld [vmem:[%s1 + $0x20] sm:$0xf]
  %v169 = vld [vmem:[%s1 + $0x24] sm:$0xff]
  %v170 = vld [vmem:[%s1 + $0x2c] sm:$0xf]
  %v171 = vld [vmem:[%s1 + $0x30] sm:$0xff]
  %v172 = vld [vmem:[%s1 + $0x38] sm:$0xf]
  %v173 = vld [vmem:[%s1 + $0x3c] sm:$0xff]
  %v174 = vld [vmem:[%s1 + $0x44] sm:$0xf]
  %v175 = vld [vmem:[%s1 + $0x48] sm:$0xff]
  %v176 = vld [vmem:[%s1 + $0x50] sm:$0xf]
  %v177 = vld [vmem:[%s1 + $0x54] sm:$0xff]
  %v178 = vld [vmem:[%s1 + $0x5c] sm:$0xf]
  %v179 = vld [vmem:[%s1 + $0x60] sm:$0xff]
  %v180 = vld [vmem:[%s1 + $0x68] sm:$0xf]
  %v181 = vld [vmem:[%s1 + $0x6c] sm:$0xff]
  %v182 = vld [vmem:[%s1 + $0x74] sm:$0xf]
  %v183 = vld [vmem:[%s1 + $0x78] sm:$0xff]
  %v184 = vld [vmem:[%s1 + $0x80] sm:$0xf]
  %v185 = vld [vmem:[%s1 + $0x84] sm:$0xff]
  %v186 = vld [vmem:[%s1 + $0x8c] sm:$0xf]
  %v187 = vld [vmem:[%s1 + $0x90] sm:$0xff]
  %v188 = vld [vmem:[%s1 + $0x98] sm:$0xf]
  %v189 = vld [vmem:[%s1 + $0x9c] sm:$0xff]
  %v190 = vld [vmem:[%s1 + $0xa4] sm:$0xf]
  %v191 = vld [vmem:[%s1 + $0xa8] sm:$0xff]
  %v192 = vld [vmem:[%s1 + $0xb0] sm:$0xf]
  %v193 = vld [vmem:[%s1 + $0xb4] sm:$0xff]
  %v194 = vld [vmem:[%s1 + $0xbc] sm:$0xf]
  %v195 = vld [vmem:[%s1 + $0xc0] sm:$0xff]
  %v196 = vld [vmem:[%s1 + $0xc8] sm:$0xf]
  %v197 = vld [vmem:[%s1 + $0xcc] sm:$0xff]
  %v198 = vld [vmem:[%s1 + $0xd4] sm:$0xf]
  %v199 = vld [vmem:[%s1 + $0xd8] sm:$0xff]
  %v200 = vld [vmem:[%s1 + $0xe0] sm:$0xf]
  %v201 = vld [vmem:[%s1 + $0xe4] sm:$0xff]
  %v202 = vld [vmem:[%s1 + $0xec] sm:$0xf]
  %v203 = vld [vmem:[%s1 + $0xf0] sm:$0xff]
  %v204 = vld [vmem:[%s1 + $0xf8] sm:$0xf]
  %v205 = vld [vmem:[%s1 + $0xfc] sm:$0xff]
  %v206 = vld [vmem:[%s1 + $0x104] sm:$0xf]
  %v207 = vld [vmem:[%s1 + $0x108] sm:$0xff]
  %v208 = vld [vmem:[%s1 + $0x110] sm:$0xf]
  %v209 = vld [vmem:[%s1 + $0x114] sm:$0xff]
  %v210 = vld [vmem:[%s1 + $0x11c] sm:$0xf]
  %v211 = vld [vmem:[%s1 + $0x120] sm:$0xff]
  %v212 = vld [vmem:[%s1 + $0x128] sm:$0xf]
  %v213 = vld [vmem:[%s1 + $0x12c] sm:$0xff]
  %v214 = vld [vmem:[%s1 + $0x134] sm:$0xf]
  %v215 = vld [vmem:[%s1 + $0x138] sm:$0xff]
  %v216 = vld [vmem:[%s1 + $0x140] sm:$0xf]
  %v217 = vld [vmem:[%s1 + $0x144] sm:$0xff]
  %v218 = vld [vmem:[%s1 + $0x14c] sm:$0xf]
  %v219 = vld [vmem:[%s1 + $0x150] sm:$0xff]
  %v220 = vld [vmem:[%s1 + $0x158] sm:$0xf]
  %v221 = vld [vmem:[%s1 + $0x15c] sm:$0xff]
  %v222 = vld [vmem:[%s1 + $0x164] sm:$0xf]
  %v223 = vld [vmem:[%s1 + $0x168] sm:$0x33]
  %v224 = vld [vmem:[%s1 + $0x170] sm:$0x3]
  %v225 = vld [vmem:[%s2] sm:$0x7]
  %v227 = vlaneseq
  %v228 = vshrl.u32 %v227, 7
  %v229 = vsub.s32 0, %v228
  %v230 = vrot.slane %v225, %v229
  %v231 = vlaneseq
  %v232 = vshrl.u32 %v231, 7
  %v233 = vsub.s32 1, %v232
  %v234 = vrot.slane %v225, %v233
  %v235 = vlaneseq
  %v236 = vshrl.u32 %v235, 7
  %v237 = vsub.s32 2, %v236
  %v238 = vrot.slane %v225, %v237
  %v368 = vunpack.c.l.b16 %v37
  %v369 = vunpack.c.h.b16 %v37
  %v370 = vunpack.c.l.b16 %v38
  %v371 = vunpack.c.h.b16 %v38
  %v372 = vunpack.c.l.b16 %v39
  %v373 = vunpack.c.h.b16 %v39
  %v374 = vunpack.c.l.b16 %v40
  %v375 = vunpack.c.h.b16 %v40
  %v376 = vunpack.c.l.b16 %v41
  %v377 = vunpack.c.h.b16 %v41
  %v378 = vunpack.c.l.b16 %v42
  %v379 = vunpack.c.h.b16 %v42
  %v380 = vunpack.c.l.b16 %v43
  %v381 = vunpack.c.h.b16 %v43
  %v382 = vunpack.c.l.b16 %v44
  %v383 = vunpack.c.h.b16 %v44
  %v384 = vunpack.c.l.b16 %v45
  %v385 = vunpack.c.h.b16 %v45
  %v386 = vunpack.c.l.b16 %v46
  %v387 = vunpack.c.h.b16 %v46
  %v388 = vunpack.c.l.b16 %v47
  %v389 = vunpack.c.h.b16 %v47
  %v390 = vunpack.c.l.b16 %v48
  %v391 = vunpack.c.h.b16 %v48
  %v392 = vunpack.c.l.b16 %v49
  %v393 = vunpack.c.h.b16 %v49
  %v394 = vunpack.c.l.b16 %v50
  %v395 = vunpack.c.h.b16 %v50
  %v396 = vunpack.c.l.b16 %v51
  %v397 = vunpack.c.h.b16 %v51
  %v398 = vunpack.c.l.b16 %v52
  %v399 = vunpack.c.h.b16 %v52
  %v400 = vunpack.c.l.b16 %v53
  %v401 = vunpack.c.h.b16 %v53
  %v402 = vunpack.c.l.b16 %v54
  %v403 = vunpack.c.h.b16 %v54
  %v404 = vunpack.c.l.b16 %v55
  %v405 = vunpack.c.h.b16 %v55
  %v406 = vunpack.c.l.b16 %v56
  %v407 = vunpack.c.h.b16 %v56
  %v408 = vunpack.c.l.b16 %v57
  %v409 = vunpack.c.h.b16 %v57
  %v410 = vunpack.c.l.b16 %v58
  %v411 = vunpack.c.h.b16 %v58
  %v412 = vunpack.c.l.b16 %v59
  %v413 = vunpack.c.h.b16 %v59
  %v414 = vunpack.c.l.b16 %v60
  %v415 = vunpack.c.h.b16 %v60
  %v416 = vunpack.c.l.b16 %v61
  %v417 = vunpack.c.h.b16 %v61
  %v418 = vunpack.c.l.b16 %v62
  %v419 = vunpack.c.h.b16 %v62
  %v420 = vunpack.c.l.b16 %v63
  %v421 = vunpack.c.h.b16 %v63
  %v422 = vunpack.c.l.b16 %v64
  %v423 = vunpack.c.h.b16 %v64
  %v424 = vunpack.c.l.b16 %v65
  %v425 = vunpack.c.h.b16 %v65
  %v426 = vunpack.c.l.b16 %v66
  %v427 = vunpack.c.h.b16 %v66
  %v428 = vunpack.c.l.b16 %v67
  %v429 = vunpack.c.h.b16 %v67
  %v430 = vunpack.c.l.b16 %v68
  %v431 = vunpack.c.h.b16 %v68
  %v432 = vunpack.c.l.b16 %v69
  %v433 = vunpack.c.h.b16 %v69
  %v434 = vunpack.c.l.b16 %v70
  %v435 = vunpack.c.h.b16 %v70
  %v436 = vunpack.c.l.b16 %v71
  %v437 = vunpack.c.h.b16 %v71
  %v438 = vunpack.c.l.b16 %v72
  %v439 = vunpack.c.h.b16 %v72
  %v440 = vunpack.c.l.b16 %v73
  %v441 = vunpack.c.h.b16 %v73
  %v442 = vunpack.c.l.b16 %v74
  %v443 = vunpack.c.h.b16 %v74
  %v444 = vunpack.c.l.b16 %v75
  %v445 = vunpack.c.h.b16 %v75
  %v446 = vunpack.c.l.b16 %v76
  %v447 = vunpack.c.h.b16 %v76
  %v448 = vunpack.c.l.b16 %v77
  %v449 = vunpack.c.h.b16 %v77
  %v450 = vunpack.c.l.b16 %v78
  %v451 = vunpack.c.h.b16 %v78
  %v452 = vunpack.c.l.b16 %v79
  %v453 = vunpack.c.h.b16 %v79
  %v454 = vunpack.c.l.b16 %v80
  %v455 = vunpack.c.h.b16 %v80
  %v456 = vunpack.c.l.b16 %v81
  %v457 = vunpack.c.h.b16 %v81
  %v458 = vunpack.c.l.b16 %v82
  %v459 = vunpack.c.h.b16 %v82
  %v460 = vunpack.c.l.b16 %v83
  %v461 = vunpack.c.h.b16 %v83
  %v462 = vunpack.c.l.b16 %v84
  %v463 = vunpack.c.h.b16 %v84
  %v464 = vunpack.c.l.b16 %v85
  %v465 = vunpack.c.h.b16 %v85
  %v466 = vunpack.c.l.b16 %v86
  %v467 = vunpack.c.h.b16 %v86
  %v468 = vunpack.c.l.b16 %v87
  %v469 = vunpack.c.h.b16 %v87
  %v470 = vunpack.c.l.b16 %v88
  %v471 = vunpack.c.h.b16 %v88
  %v472 = vunpack.c.l.b16 %v89
  %v473 = vunpack.c.h.b16 %v89
  %v474 = vunpack.c.l.b16 %v90
  %v475 = vunpack.c.h.b16 %v90
  %v476 = vunpack.c.l.b16 %v91
  %v477 = vunpack.c.h.b16 %v91
  %v478 = vunpack.c.l.b16 %v92
  %v479 = vunpack.c.h.b16 %v92
  %v480 = vunpack.c.l.b16 %v93
  %v481 = vunpack.c.h.b16 %v93
  %v482 = vunpack.c.l.b16 %v94
  %v483 = vunpack.c.h.b16 %v94
  %v484 = vunpack.c.l.b16 %v95
  %v485 = vunpack.c.h.b16 %v95
  %v486 = vunpack.c.l.b16 %v96
  %v487 = vunpack.c.h.b16 %v96
  %v488 = vunpack.c.l.b16 %v97
  %v489 = vunpack.c.h.b16 %v97
  %v490 = vunpack.c.l.b16 %v98
  %v491 = vunpack.c.h.b16 %v98
  %v492 = vunpack.c.l.b16 %v99
  %v493 = vunpack.c.h.b16 %v99
  %v494 = vunpack.c.l.b16 %v100
  %v495 = vunpack.c.h.b16 %v100
  %v496 = vunpack.c.l.b16 %v101
  %v497 = vunpack.c.h.b16 %v101
  %v498 = vunpack.c.l.b16 %v102
  %v499 = vunpack.c.h.b16 %v102
  %v500 = vunpack.c.l.b16 %v103
  %v501 = vunpack.c.h.b16 %v103
  %v502 = vunpack.c.l.b16 %v104
  %v503 = vunpack.c.h.b16 %v104
  %v504 = vunpack.c.l.b16 %v105
  %v505 = vunpack.c.h.b16 %v105
  %v506 = vunpack.c.l.b16 %v106
  %v507 = vunpack.c.h.b16 %v106
  %v508 = vunpack.c.l.b16 %v107
  %v509 = vunpack.c.h.b16 %v107
  %v510 = vunpack.c.l.b16 %v108
  %v511 = vunpack.c.h.b16 %v108
  %v512 = vunpack.c.l.b16 %v109
  %v513 = vunpack.c.h.b16 %v109
  %v514 = vunpack.c.l.b16 %v110
  %v515 = vunpack.c.h.b16 %v110
  %v516 = vunpack.c.l.b16 %v111
  %v517 = vunpack.c.h.b16 %v111
  %v518 = vunpack.c.l.b16 %v112
  %v519 = vunpack.c.h.b16 %v112
  %v520 = vunpack.c.l.b16 %v113
  %v521 = vunpack.c.h.b16 %v113
  %v522 = vunpack.c.l.b16 %v114
  %v523 = vunpack.c.h.b16 %v114
  %v524 = vunpack.c.l.b16 %v115
  %v525 = vunpack.c.h.b16 %v115
  %v526 = vunpack.c.l.b16 %v116
  %v527 = vunpack.c.h.b16 %v116
  %v528 = vunpack.c.l.b16 %v117
  %v529 = vunpack.c.h.b16 %v117
  %v530 = vunpack.c.l.b16 %v118
  %v531 = vunpack.c.h.b16 %v118
  %v532 = vunpack.c.l.b16 %v119
  %v533 = vunpack.c.h.b16 %v119
  %v534 = vunpack.c.l.b16 %v120
  %v535 = vunpack.c.h.b16 %v120
  %v536 = vunpack.c.l.b16 %v121
  %v537 = vunpack.c.h.b16 %v121
  %v538 = vunpack.c.l.b16 %v122
  %v539 = vunpack.c.h.b16 %v122
  %v540 = vunpack.c.l.b16 %v123
  %v541 = vunpack.c.h.b16 %v123
  %v542 = vunpack.c.l.b16 %v124
  %v543 = vunpack.c.h.b16 %v124
  %v544 = vunpack.c.l.b16 %v125
  %v545 = vunpack.c.h.b16 %v125
  %v546 = vunpack.c.l.b16 %v126
  %v547 = vunpack.c.h.b16 %v126
  %v548 = vunpack.c.l.b16 %v127
  %v549 = vunpack.c.h.b16 %v127
  %v550 = vunpack.c.l.b16 %v128
  %v551 = vunpack.c.h.b16 %v128
  %v552 = vunpack.c.l.b16 %v129
  %v553 = vunpack.c.h.b16 %v129
  %v554 = vunpack.c.l.b16 %v130
  %v555 = vunpack.c.h.b16 %v130
  %v556 = vunpack.c.l.b16 %v131
  %v557 = vunpack.c.h.b16 %v131
  %v558 = vunpack.c.l.b16 %v132
  %v559 = vunpack.c.h.b16 %v132
  %v560 = vunpack.c.l.b16 %v133
  %v561 = vunpack.c.h.b16 %v133
  %v562 = vunpack.c.l.b16 %v134
  %v563 = vunpack.c.h.b16 %v134
  %v564 = vunpack.c.l.b16 %v135
  %v565 = vunpack.c.h.b16 %v135
  %v566 = vunpack.c.l.b16 %v136
  %v567 = vunpack.c.h.b16 %v136
  %v568 = vunpack.c.l.b16 %v137
  %v569 = vunpack.c.h.b16 %v137
  %v570 = vunpack.c.l.b16 %v138
  %v571 = vunpack.c.h.b16 %v138
  %v572 = vunpack.c.l.b16 %v139
  %v573 = vunpack.c.h.b16 %v139
  %v574 = vunpack.c.l.b16 %v140
  %v575 = vunpack.c.h.b16 %v140
  %v576 = vunpack.c.l.b16 %v141
  %v577 = vunpack.c.h.b16 %v141
  %v578 = vunpack.c.l.b16 %v142
  %v579 = vunpack.c.h.b16 %v142
  %v580 = vunpack.c.l.b16 %v143
  %v581 = vunpack.c.h.b16 %v143
  %v582 = vunpack.c.l.b16 %v144
  %v583 = vunpack.c.h.b16 %v144
  %v584 = vunpack.c.l.b16 %v145
  %v585 = vunpack.c.h.b16 %v145
  %v586 = vunpack.c.l.b16 %v146
  %v587 = vunpack.c.h.b16 %v146
  %v588 = vunpack.c.l.b16 %v147
  %v589 = vunpack.c.h.b16 %v147
  %v590 = vunpack.c.l.b16 %v148
  %v591 = vunpack.c.h.b16 %v148
  %v592 = vunpack.c.l.b16 %v149
  %v593 = vunpack.c.h.b16 %v149
  %v594 = vunpack.c.l.b16 %v150
  %v595 = vunpack.c.h.b16 %v150
  %v596 = vunpack.c.l.b16 %v151
  %v597 = vunpack.c.h.b16 %v151
  %v598 = vunpack.c.l.b16 %v152
  %v599 = vunpack.c.h.b16 %v152
  %v600 = vunpack.c.l.b16 %v153
  %v601 = vunpack.c.h.b16 %v153
  %v602 = vunpack.c.l.b16 %v154
  %v603 = vunpack.c.h.b16 %v154
  %v604 = vunpack.c.l.b16 %v155
  %v605 = vunpack.c.h.b16 %v155
  %v606 = vunpack.c.l.b16 %v156
  %v607 = vunpack.c.h.b16 %v156
  %v608 = vunpack.c.l.b16 %v157
  %v609 = vunpack.c.h.b16 %v157
  %v610 = vunpack.c.l.b16 %v158
  %v611 = vunpack.c.h.b16 %v158
  %v612 = vunpack.c.l.b16 %v159
  %v613 = vunpack.c.h.b16 %v159
  %v614 = vunpack.c.l.b16 %v160
  %v615 = vunpack.c.h.b16 %v160
  %v616 = vunpack.c.l.b16 %v161
  %v617 = vunpack.c.h.b16 %v161
  %v618 = vunpack.c.l.b16 %v162
  %v619 = vunpack.c.h.b16 %v162
  %v620 = vpack.c.b16 %v370, %v368
  %v621 = vpack.c.b16 %v371, %v369
  %v622 = vpack.c.b16 %v374, %v372
  %v623 = vpack.c.b16 %v375, %v373
  %v624 = vpack.c.b16 %v378, %v376
  %v625 = vpack.c.b16 %v379, %v377
  %v626 = vpack.c.b16 %v382, %v380
  %v627 = vpack.c.b16 %v383, %v381
  %v628 = vpack.c.b16 %v386, %v384
  %v629 = vpack.c.b16 %v387, %v385
  %v630 = vpack.c.b16 %v390, %v388
  %v631 = vpack.c.b16 %v391, %v389
  %v632 = vpack.c.b16 %v394, %v392
  %v633 = vpack.c.b16 %v395, %v393
  %v634 = vpack.c.b16 %v398, %v396
  %v635 = vpack.c.b16 %v399, %v397
  %v636 = vpack.c.b16 %v402, %v400
  %v637 = vpack.c.b16 %v403, %v401
  %v638 = vpack.c.b16 %v406, %v404
  %v639 = vpack.c.b16 %v407, %v405
  %v640 = vpack.c.b16 %v410, %v408
  %v641 = vpack.c.b16 %v411, %v409
  %v642 = vpack.c.b16 %v414, %v412
  %v643 = vpack.c.b16 %v415, %v413
  %v644 = vpack.c.b16 %v418, %v416
  %v645 = vpack.c.b16 %v419, %v417
  %v646 = vpack.c.b16 %v422, %v420
  %v647 = vpack.c.b16 %v423, %v421
  %v648 = vpack.c.b16 %v426, %v424
  %v649 = vpack.c.b16 %v427, %v425
  %v650 = vpack.c.b16 %v430, %v428
  %v651 = vpack.c.b16 %v431, %v429
  %v652 = vpack.c.b16 %v434, %v432
  %v653 = vpack.c.b16 %v435, %v433
  %v654 = vpack.c.b16 %v438, %v436
  %v655 = vpack.c.b16 %v439, %v437
  %v656 = vpack.c.b16 %v442, %v440
  %v657 = vpack.c.b16 %v443, %v441
  %v658 = vpack.c.b16 %v446, %v444
  %v659 = vpack.c.b16 %v447, %v445
  %v660 = vpack.c.b16 %v450, %v448
  %v661 = vpack.c.b16 %v451, %v449
  %v662 = vpack.c.b16 %v454, %v452
  %v663 = vpack.c.b16 %v455, %v453
  %v664 = vpack.c.b16 %v458, %v456
  %v665 = vpack.c.b16 %v459, %v457
  %v666 = vpack.c.b16 %v462, %v460
  %v667 = vpack.c.b16 %v463, %v461
  %v668 = vpack.c.b16 %v466, %v464
  %v669 = vpack.c.b16 %v467, %v465
  %v670 = vpack.c.b16 %v470, %v468
  %v671 = vpack.c.b16 %v471, %v469
  %v672 = vpack.c.b16 %v474, %v472
  %v673 = vpack.c.b16 %v475, %v473
  %v674 = vpack.c.b16 %v478, %v476
  %v675 = vpack.c.b16 %v479, %v477
  %v676 = vpack.c.b16 %v482, %v480
  %v677 = vpack.c.b16 %v483, %v481
  %v678 = vpack.c.b16 %v486, %v484
  %v679 = vpack.c.b16 %v487, %v485
  %v680 = vpack.c.b16 %v490, %v488
  %v681 = vpack.c.b16 %v491, %v489
  %v682 = vpack.c.b16 %v494, %v492
  %v683 = vpack.c.b16 %v495, %v493
  %v684 = vpack.c.b16 %v498, %v496
  %v685 = vpack.c.b16 %v499, %v497
  %v686 = vpack.c.b16 %v502, %v500
  %v687 = vpack.c.b16 %v503, %v501
  %v688 = vpack.c.b16 %v506, %v504
  %v689 = vpack.c.b16 %v507, %v505
  %v690 = vpack.c.b16 %v510, %v508
  %v691 = vpack.c.b16 %v511, %v509
  %v692 = vpack.c.b16 %v514, %v512
  %v693 = vpack.c.b16 %v515, %v513
  %v694 = vpack.c.b16 %v518, %v516
  %v695 = vpack.c.b16 %v519, %v517
  %v696 = vpack.c.b16 %v522, %v520
  %v697 = vpack.c.b16 %v523, %v521
  %v698 = vpack.c.b16 %v526, %v524
  %v699 = vpack.c.b16 %v527, %v525
  %v700 = vpack.c.b16 %v530, %v528
  %v701 = vpack.c.b16 %v531, %v529
  %v702 = vpack.c.b16 %v534, %v532
  %v703 = vpack.c.b16 %v535, %v533
  %v704 = vpack.c.b16 %v538, %v536
  %v705 = vpack.c.b16 %v539, %v537
  %v706 = vpack.c.b16 %v542, %v540
  %v707 = vpack.c.b16 %v543, %v541
  %v708 = vpack.c.b16 %v546, %v544
  %v709 = vpack.c.b16 %v547, %v545
  %v710 = vpack.c.b16 %v550, %v548
  %v711 = vpack.c.b16 %v551, %v549
  %v712 = vpack.c.b16 %v554, %v552
  %v713 = vpack.c.b16 %v555, %v553
  %v714 = vpack.c.b16 %v558, %v556
  %v715 = vpack.c.b16 %v559, %v557
  %v716 = vpack.c.b16 %v562, %v560
  %v717 = vpack.c.b16 %v563, %v561
  %v718 = vpack.c.b16 %v566, %v564
  %v719 = vpack.c.b16 %v567, %v565
  %v720 = vpack.c.b16 %v570, %v568
  %v721 = vpack.c.b16 %v571, %v569
  %v722 = vpack.c.b16 %v574, %v572
  %v723 = vpack.c.b16 %v575, %v573
  %v724 = vpack.c.b16 %v578, %v576
  %v725 = vpack.c.b16 %v579, %v577
  %v726 = vpack.c.b16 %v582, %v580
  %v727 = vpack.c.b16 %v583, %v581
  %v728 = vpack.c.b16 %v586, %v584
  %v729 = vpack.c.b16 %v587, %v585
  %v730 = vpack.c.b16 %v590, %v588
  %v731 = vpack.c.b16 %v591, %v589
  %v732 = vpack.c.b16 %v594, %v592
  %v733 = vpack.c.b16 %v595, %v593
  %v734 = vpack.c.b16 %v598, %v596
  %v735 = vpack.c.b16 %v599, %v597
  %v736 = vpack.c.b16 %v602, %v600
  %v737 = vpack.c.b16 %v603, %v601
  %v738 = vpack.c.b16 %v606, %v604
  %v739 = vpack.c.b16 %v607, %v605
  %v740 = vpack.c.b16 %v610, %v608
  %v741 = vpack.c.b16 %v611, %v609
  %v742 = vpack.c.b16 %v614, %v612
  %v743 = vpack.c.b16 %v615, %v613
  %v744 = vpack.c.b16 %v618, %v616
  %v745 = vpack.c.b16 %v619, %v617
  %v871 = vunpack.c.l.b16 %v163
  %v872 = vunpack.c.h.b16 %v163
  %v873 = vunpack.c.l.b16 %v164
  %v874 = vunpack.c.l.b16 %v165
  %v875 = vunpack.c.h.b16 %v165
  %v876 = vunpack.c.l.b16 %v166
  %v877 = vunpack.c.l.b16 %v167
  %v878 = vunpack.c.h.b16 %v167
  %v879 = vunpack.c.l.b16 %v168
  %v880 = vunpack.c.l.b16 %v169
  %v881 = vunpack.c.h.b16 %v169
  %v882 = vunpack.c.l.b16 %v170
  %v883 = vunpack.c.l.b16 %v171
  %v884 = vunpack.c.h.b16 %v171
  %v885 = vunpack.c.l.b16 %v172
  %v886 = vunpack.c.l.b16 %v173
  %v887 = vunpack.c.h.b16 %v173
  %v888 = vunpack.c.l.b16 %v174
  %v889 = vunpack.c.l.b16 %v175
  %v890 = vunpack.c.h.b16 %v175
  %v891 = vunpack.c.l.b16 %v176
  %v892 = vunpack.c.l.b16 %v177
  %v893 = vunpack.c.h.b16 %v177
  %v894 = vunpack.c.l.b16 %v178
  %v895 = vunpack.c.l.b16 %v179
  %v896 = vunpack.c.h.b16 %v179
  %v897 = vunpack.c.l.b16 %v180
  %v898 = vunpack.c.l.b16 %v181
  %v899 = vunpack.c.h.b16 %v181
  %v900 = vunpack.c.l.b16 %v182
  %v901 = vunpack.c.l.b16 %v183
  %v902 = vunpack.c.h.b16 %v183
  %v903 = vunpack.c.l.b16 %v184
  %v904 = vunpack.c.l.b16 %v185
  %v905 = vunpack.c.h.b16 %v185
  %v906 = vunpack.c.l.b16 %v186
  %v907 = vunpack.c.l.b16 %v187
  %v908 = vunpack.c.h.b16 %v187
  %v909 = vunpack.c.l.b16 %v188
  %v910 = vunpack.c.l.b16 %v189
  %v911 = vunpack.c.h.b16 %v189
  %v912 = vunpack.c.l.b16 %v190
  %v913 = vunpack.c.l.b16 %v191
  %v914 = vunpack.c.h.b16 %v191
  %v915 = vunpack.c.l.b16 %v192
  %v916 = vunpack.c.l.b16 %v193
  %v917 = vunpack.c.h.b16 %v193
  %v918 = vunpack.c.l.b16 %v194
  %v919 = vunpack.c.l.b16 %v195
  %v920 = vunpack.c.h.b16 %v195
  %v921 = vunpack.c.l.b16 %v196
  %v922 = vunpack.c.l.b16 %v197
  %v923 = vunpack.c.h.b16 %v197
  %v924 = vunpack.c.l.b16 %v198
  %v925 = vunpack.c.l.b16 %v199
  %v926 = vunpack.c.h.b16 %v199
  %v927 = vunpack.c.l.b16 %v200
  %v928 = vunpack.c.l.b16 %v201
  %v929 = vunpack.c.h.b16 %v201
  %v930 = vunpack.c.l.b16 %v202
  %v931 = vunpack.c.l.b16 %v203
  %v932 = vunpack.c.h.b16 %v203
  %v933 = vunpack.c.l.b16 %v204
  %v934 = vunpack.c.l.b16 %v205
  %v935 = vunpack.c.h.b16 %v205
  %v936 = vunpack.c.l.b16 %v206
  %v937 = vunpack.c.l.b16 %v207
  %v938 = vunpack.c.h.b16 %v207
  %v939 = vunpack.c.l.b16 %v208
  %v940 = vunpack.c.l.b16 %v209
  %v941 = vunpack.c.h.b16 %v209
  %v942 = vunpack.c.l.b16 %v210
  %v943 = vunpack.c.l.b16 %v211
  %v944 = vunpack.c.h.b16 %v211
  %v945 = vunpack.c.l.b16 %v212
  %v946 = vunpack.c.l.b16 %v213
  %v947 = vunpack.c.h.b16 %v213
  %v948 = vunpack.c.l.b16 %v214
  %v949 = vunpack.c.l.b16 %v215
  %v950 = vunpack.c.h.b16 %v215
  %v951 = vunpack.c.l.b16 %v216
  %v952 = vunpack.c.l.b16 %v217
  %v953 = vunpack.c.h.b16 %v217
  %v954 = vunpack.c.l.b16 %v218
  %v955 = vunpack.c.l.b16 %v219
  %v956 = vunpack.c.h.b16 %v219
  %v957 = vunpack.c.l.b16 %v220
  %v958 = vunpack.c.l.b16 %v221
  %v959 = vunpack.c.h.b16 %v221
  %v960 = vunpack.c.l.b16 %v222
  %v961 = vunpack.c.l.b16 %v223
  %v962 = vunpack.c.h.b16 %v223
  %v963 = vunpack.c.l.b16 %v224
  %v964 = vpack.c.b16 %v874, %v871
  %v965 = vpack.c.b16 %v875, %v872
  %v966 = vpack.c.b16 %v876, %v873
  %v967 = vpack.c.b16 %v880, %v877
  %v968 = vpack.c.b16 %v881, %v878
  %v969 = vpack.c.b16 %v882, %v879
  %v970 = vpack.c.b16 %v886, %v883
  %v971 = vpack.c.b16 %v887, %v884
  %v972 = vpack.c.b16 %v888, %v885
  %v973 = vpack.c.b16 %v892, %v889
  %v974 = vpack.c.b16 %v893, %v890
  %v975 = vpack.c.b16 %v894, %v891
  %v976 = vpack.c.b16 %v898, %v895
  %v977 = vpack.c.b16 %v899, %v896
  %v978 = vpack.c.b16 %v900, %v897
  %v979 = vpack.c.b16 %v904, %v901
  %v980 = vpack.c.b16 %v905, %v902
  %v981 = vpack.c.b16 %v906, %v903
  %v982 = vpack.c.b16 %v910, %v907
  %v983 = vpack.c.b16 %v911, %v908
  %v984 = vpack.c.b16 %v912, %v909
  %v985 = vpack.c.b16 %v916, %v913
  %v986 = vpack.c.b16 %v917, %v914
  %v987 = vpack.c.b16 %v918, %v915
  %v988 = vpack.c.b16 %v922, %v919
  %v989 = vpack.c.b16 %v923, %v920
  %v990 = vpack.c.b16 %v924, %v921
  %v991 = vpack.c.b16 %v928, %v925
  %v992 = vpack.c.b16 %v929, %v926
  %v993 = vpack.c.b16 %v930, %v927
  %v994 = vpack.c.b16 %v934, %v931
  %v995 = vpack.c.b16 %v935, %v932
  %v996 = vpack.c.b16 %v936, %v933
  %v997 = vpack.c.b16 %v940, %v937
  %v998 = vpack.c.b16 %v941, %v938
  %v999 = vpack.c.b16 %v942, %v939
  %v1000 = vpack.c.b16 %v946, %v943
  %v1001 = vpack.c.b16 %v947, %v944
  %v1002 = vpack.c.b16 %v948, %v945
  %v1003 = vpack.c.b16 %v952, %v949
  %v1004 = vpack.c.b16 %v953, %v950
  %v1005 = vpack.c.b16 %v954, %v951
  %v1006 = vpack.c.b16 %v958, %v955
  %v1007 = vpack.c.b16 %v959, %v956
  %v1008 = vpack.c.b16 %v960, %v957
  %v1009 = vpack.c.b16 %v961, %v961
  %v1010 = vpack.c.b16 %v962, %v962
  %v1011 = vpack.c.b16 %v963, %v963
  %vm1057 = vcmask 941056
  %v1059 = vsel %vm1057, %v621, 0
  %v1062 = vsel %vm1057, %v623, 0
  %v1065 = vsel %vm1057, %v625, 0
  %v1068 = vsel %vm1057, %v627, 0
  %v1071 = vsel %vm1057, %v629, 0
  %v1074 = vsel %vm1057, %v631, 0
  %v1077 = vsel %vm1057, %v633, 0
  %v1080 = vsel %vm1057, %v635, 0
  %v1083 = vsel %vm1057, %v637, 0
  %v1086 = vsel %vm1057, %v639, 0
  %v1089 = vsel %vm1057, %v641, 0
  %v1092 = vsel %vm1057, %v643, 0
  %v1095 = vsel %vm1057, %v645, 0
  %v1098 = vsel %vm1057, %v647, 0
  %v1101 = vsel %vm1057, %v649, 0
  %v1104 = vsel %vm1057, %v651, 0
  %v1107 = vsel %vm1057, %v653, 0
  %v1110 = vsel %vm1057, %v655, 0
  %v1113 = vsel %vm1057, %v657, 0
  %v1116 = vsel %vm1057, %v659, 0
  %v1119 = vsel %vm1057, %v661, 0
  %v1122 = vsel %vm1057, %v663, 0
  %v1125 = vsel %vm1057, %v665, 0
  %v1128 = vsel %vm1057, %v667, 0
  %v1131 = vsel %vm1057, %v669, 0
  %v1134 = vsel %vm1057, %v671, 0
  %v1137 = vsel %vm1057, %v673, 0
  %v1140 = vsel %vm1057, %v675, 0
  %v1143 = vsel %vm1057, %v677, 0
  %v1146 = vsel %vm1057, %v679, 0
  %v1149 = vsel %vm1057, %v681, 0
  %v1152 = vsel %vm1057, %v683, 0
  %v1155 = vsel %vm1057, %v685, 0
  %v1158 = vsel %vm1057, %v687, 0
  %v1161 = vsel %vm1057, %v689, 0
  %v1164 = vsel %vm1057, %v691, 0
  %v1167 = vsel %vm1057, %v693, 0
  %v1170 = vsel %vm1057, %v695, 0
  %v1173 = vsel %vm1057, %v697, 0
  %v1176 = vsel %vm1057, %v699, 0
  %v1179 = vsel %vm1057, %v701, 0
  %v1182 = vsel %vm1057, %v703, 0
  %v1185 = vsel %vm1057, %v705, 0
  %v1188 = vsel %vm1057, %v707, 0
  %v1191 = vsel %vm1057, %v709, 0
  %v1194 = vsel %vm1057, %v711, 0
  %v1197 = vsel %vm1057, %v713, 0
  %v1200 = vsel %vm1057, %v715, 0
  %v1203 = vsel %vm1057, %v717, 0
  %v1206 = vsel %vm1057, %v719, 0
  %v1209 = vsel %vm1057, %v721, 0
  %v1212 = vsel %vm1057, %v723, 0
  %v1215 = vsel %vm1057, %v725, 0
  %v1218 = vsel %vm1057, %v727, 0
  %v1221 = vsel %vm1057, %v729, 0
  %v1224 = vsel %vm1057, %v731, 0
  %v1227 = vsel %vm1057, %v733, 0
  %v1230 = vsel %vm1057, %v735, 0
  %v1233 = vsel %vm1057, %v737, 0
  %v1236 = vsel %vm1057, %v739, 0
  %v1239 = vsel %vm1057, %v741, 0
  %v1242 = vsel %vm1057, %v743, 0
  %v1245 = vsel %vm1057, %v745, 0
  %vm1247 = vcmask 1040384
  %vm1248 = vcmask 1041408
  %v1249 = vsel %vm1247, 4294967295, 65535
  %v1250 = vsel %vm1248, %v1249, 0
  %v1252 = vand.u32 %v1009, %v1250
  %v1255 = vand.u32 %v1010, %v1250
  %v1258 = vand.u32 %v1011, %v1250
  %1260 = vmatprep.subr.bf16.mxu0 %v965
  %1261 = vmatpush1.bf16.msra.mxu0 %v964
  %1262 = vmatprep.subr.bf16.mxu0 %v968
  %1263 = vmatpush1.bf16.msra.mxu0 %v967
  %1264 = vmatprep.subr.bf16.mxu0 %v971
  %1265 = vmatpush1.bf16.msra.mxu0 %v970
  %1266 = vmatprep.subr.bf16.mxu0 %v974
  %1267 = vmatpush1.bf16.msra.mxu0 %v973
  %1268 = vmatprep.subr.bf16.mxu0 %v977
  %1269 = vmatpush1.bf16.msra.mxu0 %v976
  %1270 = vmatprep.subr.bf16.mxu0 %v980
  %1271 = vmatpush1.bf16.msra.mxu0 %v979
  %1272 = vmatprep.subr.bf16.mxu0 %v983
  %1273 = vmatpush1.bf16.msra.mxu0 %v982
  %1274 = vmatprep.subr.bf16.mxu0 %v986
  %1275 = vmatpush1.bf16.msra.mxu0 %v985
  %1276 = vmatprep.subr.bf16.mxu0 %v989
  %1277 = vmatpush1.bf16.msra.mxu0 %v988
  %1278 = vmatprep.subr.bf16.mxu0 %v992
  %1279 = vmatpush1.bf16.msra.mxu0 %v991
  %1280 = vmatprep.subr.bf16.mxu0 %v995
  %1281 = vmatpush1.bf16.msra.mxu0 %v994
  %1282 = vmatprep.subr.bf16.mxu0 %v998
  %1283 = vmatpush1.bf16.msra.mxu0 %v997
  %1284 = vmatprep.subr.bf16.mxu0 %v1001
  %1285 = vmatpush1.bf16.msra.mxu0 %v1000
  %1286 = vmatprep.subr.bf16.mxu0 %v1004
  %1287 = vmatpush1.bf16.msra.mxu0 %v1003
  %1288 = vmatprep.subr.bf16.mxu0 %v1007
  %1289 = vmatpush1.bf16.msra.mxu0 %v1006
  %1290 = vmatprep.subr.bf16.mxu0 %v1255
  %1291 = vmatpush1.bf16.msra.mxu0 %v1252
  %1292 = vmatprep.mubr.bf16.mxu0 %v1059
  %1293 = vmatmul.mubr.bf16.gmra.mrb[0].mxu0 %v620
  %v1294 = vpop.f32.mrb[0].mxu0
  %v1295 = vadd.f32 %v230, %v1294
  %v1296 = vpop.f32.mrb[0].mxu0
  %v1297 = vadd.f32 %v234, %v1296
  %v1298 = vpop.f32.mrb[0].mxu0
  %v1299 = vadd.f32 %v230, %v1298
  %v1300 = vpop.f32.mrb[0].mxu0
  %v1301 = vadd.f32 %v234, %v1300
  %1302 = vmatprep.mubr.bf16.mxu0 %v1062
  %1303 = vmatmul.mubr.bf16.gmra.mrb[0].mxu0 %v622
  %v1304 = vpop.f32.mrb[0].mxu0
  %v1305 = vadd.f32 %v230, %v1304
  %v1306 = vpop.f32.mrb[0].mxu0
  %v1307 = vadd.f32 %v234, %v1306
  %v1308 = vpop.f32.mrb[0].mxu0
  %v1309 = vadd.f32 %v230, %v1308
  %v1310 = vpop.f32.mrb[0].mxu0
  %v1311 = vadd.f32 %v234, %v1310
  %1312 = vmatprep.mubr.bf16.mxu0 %v1065
  %1313 = vmatmul.mubr.bf16.gmra.mrb[0].mxu0 %v624
  %v1314 = vpop.f32.mrb[0].mxu0
  %v1315 = vadd.f32 %v230, %v1314
  %v1316 = vpop.f32.mrb[0].mxu0
  %v1317 = vadd.f32 %v234, %v1316
  %v1318 = vpop.f32.mrb[0].mxu0
  %v1319 = vadd.f32 %v230, %v1318
  %v1320 = vpop.f32.mrb[0].mxu0
  %v1321 = vadd.f32 %v234, %v1320
  %1322 = vmatprep.mubr.bf16.mxu0 %v1068
  %1323 = vmatmul.mubr.bf16.gmra.mrb[0].mxu0 %v626
  %v1324 = vpop.f32.mrb[0].mxu0
  %v1325 = vadd.f32 %v230, %v1324
  %v1326 = vpop.f32.mrb[0].mxu0
  %v1327 = vadd.f32 %v234, %v1326
  %v1328 = vpop.f32.mrb[0].mxu0
  %v1329 = vadd.f32 %v230, %v1328
  %v1330 = vpop.f32.mrb[0].mxu0
  %v1331 = vadd.f32 %v234, %v1330
  %1332 = vmatprep.mubr.bf16.mxu0 %v1071
  %1333 = vmatmul.mubr.bf16.gmra.mrb[0].mxu0 %v628
  %v1334 = vpop.f32.mrb[0].mxu0
  %v1335 = vadd.f32 %v230, %v1334
  %v1336 = vpop.f32.mrb[0].mxu0
  %v1337 = vadd.f32 %v234, %v1336
  %v1338 = vpop.f32.mrb[0].mxu0
  %v1339 = vadd.f32 %v230, %v1338
  %v1340 = vpop.f32.mrb[0].mxu0
  %v1341 = vadd.f32 %v234, %v1340
  %1342 = vmatprep.mubr.bf16.mxu0 %v1074
  %1343 = vmatmul.mubr.bf16.gmra.mrb[0].mxu0 %v630
  %v1344 = vpop.f32.mrb[0].mxu0
  %v1345 = vadd.f32 %v230, %v1344
  %v1346 = vpop.f32.mrb[0].mxu0
  %v1347 = vadd.f32 %v234, %v1346
  %v1348 = vpop.f32.mrb[0].mxu0
  %v1349 = vadd.f32 %v230, %v1348
  %v1350 = vpop.f32.mrb[0].mxu0
  %v1351 = vadd.f32 %v234, %v1350
  %1352 = vmatprep.mubr.bf16.mxu0 %v1077
  %1353 = vmatmul.mubr.bf16.gmra.mrb[0].mxu0 %v632
  %v1354 = vpop.f32.mrb[0].mxu0
  %v1355 = vadd.f32 %v230, %v1354
  %v1356 = vpop.f32.mrb[0].mxu0
  %v1357 = vadd.f32 %v234, %v1356
  %v1358 = vpop.f32.mrb[0].mxu0
  %v1359 = vadd.f32 %v230, %v1358
  %v1360 = vpop.f32.mrb[0].mxu0
  %v1361 = vadd.f32 %v234, %v1360
  %1362 = vmatprep.mubr.bf16.mxu0 %v1080
  %1363 = vmatmul.mubr.bf16.gmra.mrb[0].mxu0 %v634
  %v1364 = vpop.f32.mrb[0].mxu0
  %v1365 = vadd.f32 %v230, %v1364
  %v1366 = vpop.f32.mrb[0].mxu0
  %v1367 = vadd.f32 %v234, %v1366
  %v1368 = vpop.f32.mrb[0].mxu0
  %v1369 = vadd.f32 %v230, %v1368
  %v1370 = vpop.f32.mrb[0].mxu0
  %v1371 = vadd.f32 %v234, %v1370
  %1372 = vmatprep.mubr.bf16.mxu0 %v1083
  %1373 = vmatmul.mubr.bf16.gmra.mrb[0].mxu0 %v636
  %v1374 = vpop.f32.mrb[0].mxu0
  %v1375 = vadd.f32 %v230, %v1374
  %v1376 = vpop.f32.mrb[0].mxu0
  %v1377 = vadd.f32 %v234, %v1376
  %v1378 = vpop.f32.mrb[0].mxu0
  %v1379 = vadd.f32 %v230, %v1378
  %v1380 = vpop.f32.mrb[0].mxu0
  %v1381 = vadd.f32 %v234, %v1380
  %1382 = vmatprep.mubr.bf16.mxu0 %v1086
  %1383 = vmatmul.mubr.bf16.gmra.mrb[0].mxu0 %v638
  %v1384 = vpop.f32.mrb[0].mxu0
  %v1385 = vadd.f32 %v230, %v1384
  %v1386 = vpop.f32.mrb[0].mxu0
  %v1387 = vadd.f32 %v234, %v1386
  %v1388 = vpop.f32.mrb[0].mxu0
  %v1389 = vadd.f32 %v230, %v1388
  %v1390 = vpop.f32.mrb[0].mxu0
  %v1391 = vadd.f32 %v234, %v1390
  %1392 = vmatprep.mubr.bf16.mxu0 %v1089
  %1393 = vmatmul.mubr.bf16.gmra.mrb[0].mxu0 %v640
  %v1394 = vpop.f32.mrb[0].mxu0
  %v1395 = vadd.f32 %v230, %v1394
  %v1396 = vpop.f32.mrb[0].mxu0
  %v1397 = vadd.f32 %v234, %v1396
  %v1398 = vpop.f32.mrb[0].mxu0
  %v1399 = vadd.f32 %v230, %v1398
  %v1400 = vpop.f32.mrb[0].mxu0
  %v1401 = vadd.f32 %v234, %v1400
  %1402 = vmatprep.mubr.bf16.mxu0 %v1092
  %1403 = vmatmul.mubr.bf16.gmra.mrb[0].mxu0 %v642
  %v1404 = vpop.f32.mrb[0].mxu0
  %v1405 = vadd.f32 %v230, %v1404
  %v1406 = vpop.f32.mrb[0].mxu0
  %v1407 = vadd.f32 %v234, %v1406
  %v1408 = vpop.f32.mrb[0].mxu0
  %v1409 = vadd.f32 %v230, %v1408
  %v1410 = vpop.f32.mrb[0].mxu0
  %v1411 = vadd.f32 %v234, %v1410
  %1412 = vmatprep.mubr.bf16.mxu0 %v1095
  %1413 = vmatmul.mubr.bf16.gmra.mrb[0].mxu0 %v644
  %v1414 = vpop.f32.mrb[0].mxu0
  %v1415 = vadd.f32 %v230, %v1414
  %v1416 = vpop.f32.mrb[0].mxu0
  %v1417 = vadd.f32 %v234, %v1416
  %v1418 = vpop.f32.mrb[0].mxu0
  %v1419 = vadd.f32 %v230, %v1418
  %v1420 = vpop.f32.mrb[0].mxu0
  %v1421 = vadd.f32 %v234, %v1420
  %1422 = vmatprep.mubr.bf16.mxu0 %v1098
  %1423 = vmatmul.mubr.bf16.gmra.mrb[0].mxu0 %v646
  %v1424 = vpop.f32.mrb[0].mxu0
  %v1425 = vadd.f32 %v230, %v1424
  %v1426 = vpop.f32.mrb[0].mxu0
  %v1427 = vadd.f32 %v234, %v1426
  %v1428 = vpop.f32.mrb[0].mxu0
  %v1429 = vadd.f32 %v230, %v1428
  %v1430 = vpop.f32.mrb[0].mxu0
  %v1431 = vadd.f32 %v234, %v1430
  %1432 = vmatprep.mubr.bf16.mxu0 %v1101
  %1433 = vmatmul.mubr.bf16.gmra.mrb[0].mxu0 %v648
  %v1434 = vpop.f32.mrb[0].mxu0
  %v1435 = vadd.f32 %v230, %v1434
  %v1436 = vpop.f32.mrb[0].mxu0
  %v1437 = vadd.f32 %v234, %v1436
  %v1438 = vpop.f32.mrb[0].mxu0
  %v1439 = vadd.f32 %v230, %v1438
  %v1440 = vpop.f32.mrb[0].mxu0
  %v1441 = vadd.f32 %v234, %v1440
  %1442 = vmatprep.mubr.bf16.mxu0 %v1104
  %1443 = vmatmul.mubr.bf16.gmra.mrb[0].mxu0 %v650
  %v1444 = vpop.f32.mrb[0].mxu0
  %v1445 = vadd.f32 %v230, %v1444
  %v1446 = vpop.f32.mrb[0].mxu0
  %v1447 = vadd.f32 %v234, %v1446
  %v1448 = vpop.f32.mrb[0].mxu0
  %v1449 = vadd.f32 %v230, %v1448
  %v1450 = vpop.f32.mrb[0].mxu0
  %v1451 = vadd.f32 %v234, %v1450
  %1452 = vmatprep.mubr.bf16.mxu0 %v1107
  %1453 = vmatmul.mubr.bf16.gmra.mrb[0].mxu0 %v652
  %v1454 = vpop.f32.mrb[0].mxu0
  %v1455 = vadd.f32 %v230, %v1454
  %v1456 = vpop.f32.mrb[0].mxu0
  %v1457 = vadd.f32 %v234, %v1456
  %v1458 = vpop.f32.mrb[0].mxu0
  %v1459 = vadd.f32 %v230, %v1458
  %v1460 = vpop.f32.mrb[0].mxu0
  %v1461 = vadd.f32 %v234, %v1460
  %1462 = vmatprep.mubr.bf16.mxu0 %v1110
  %1463 = vmatmul.mubr.bf16.gmra.mrb[0].mxu0 %v654
  %v1464 = vpop.f32.mrb[0].mxu0
  %v1465 = vadd.f32 %v230, %v1464
  %v1466 = vpop.f32.mrb[0].mxu0
  %v1467 = vadd.f32 %v234, %v1466
  %v1468 = vpop.f32.mrb[0].mxu0
  %v1469 = vadd.f32 %v230, %v1468
  %v1470 = vpop.f32.mrb[0].mxu0
  %v1471 = vadd.f32 %v234, %v1470
  %1472 = vmatprep.mubr.bf16.mxu0 %v1113
  %1473 = vmatmul.mubr.bf16.gmra.mrb[0].mxu0 %v656
  %v1474 = vpop.f32.mrb[0].mxu0
  %v1475 = vadd.f32 %v230, %v1474
  %v1476 = vpop.f32.mrb[0].mxu0
  %v1477 = vadd.f32 %v234, %v1476
  %v1478 = vpop.f32.mrb[0].mxu0
  %v1479 = vadd.f32 %v230, %v1478
  %v1480 = vpop.f32.mrb[0].mxu0
  %v1481 = vadd.f32 %v234, %v1480
  %1482 = vmatprep.mubr.bf16.mxu0 %v1116
  %1483 = vmatmul.mubr.bf16.gmra.mrb[0].mxu0 %v658
  %v1484 = vpop.f32.mrb[0].mxu0
  %v1485 = vadd.f32 %v230, %v1484
  %v1486 = vpop.f32.mrb[0].mxu0
  %v1487 = vadd.f32 %v234, %v1486
  %v1488 = vpop.f32.mrb[0].mxu0
  %v1489 = vadd.f32 %v230, %v1488
  %v1490 = vpop.f32.mrb[0].mxu0
  %v1491 = vadd.f32 %v234, %v1490
  %1492 = vmatprep.mubr.bf16.mxu0 %v1119
  %1493 = vmatmul.mubr.bf16.gmra.mrb[0].mxu0 %v660
  %v1494 = vpop.f32.mrb[0].mxu0
  %v1495 = vadd.f32 %v230, %v1494
  %v1496 = vpop.f32.mrb[0].mxu0
  %v1497 = vadd.f32 %v234, %v1496
  %v1498 = vpop.f32.mrb[0].mxu0
  %v1499 = vadd.f32 %v230, %v1498
  %v1500 = vpop.f32.mrb[0].mxu0
  %v1501 = vadd.f32 %v234, %v1500
  %1502 = vmatprep.mubr.bf16.mxu0 %v1122
  %1503 = vmatmul.mubr.bf16.gmra.mrb[0].mxu0 %v662
  %v1504 = vpop.f32.mrb[0].mxu0
  %v1505 = vadd.f32 %v230, %v1504
  %v1506 = vpop.f32.mrb[0].mxu0
  %v1507 = vadd.f32 %v234, %v1506
  %v1508 = vpop.f32.mrb[0].mxu0
  %v1509 = vadd.f32 %v230, %v1508
  %v1510 = vpop.f32.mrb[0].mxu0
  %v1511 = vadd.f32 %v234, %v1510
  %1512 = vmatprep.mubr.bf16.mxu0 %v1125
  %1513 = vmatmul.mubr.bf16.gmra.mrb[0].mxu0 %v664
  %v1514 = vpop.f32.mrb[0].mxu0
  %v1515 = vadd.f32 %v230, %v1514
  %v1516 = vpop.f32.mrb[0].mxu0
  %v1517 = vadd.f32 %v234, %v1516
  %v1518 = vpop.f32.mrb[0].mxu0
  %v1519 = vadd.f32 %v230, %v1518
  %v1520 = vpop.f32.mrb[0].mxu0
  %v1521 = vadd.f32 %v234, %v1520
  %1522 = vmatprep.mubr.bf16.mxu0 %v1128
  %1523 = vmatmul.mubr.bf16.gmra.mrb[0].mxu0 %v666
  %v1524 = vpop.f32.mrb[0].mxu0
  %v1525 = vadd.f32 %v230, %v1524
  %v1526 = vpop.f32.mrb[0].mxu0
  %v1527 = vadd.f32 %v234, %v1526
  %v1528 = vpop.f32.mrb[0].mxu0
  %v1529 = vadd.f32 %v230, %v1528
  %v1530 = vpop.f32.mrb[0].mxu0
  %v1531 = vadd.f32 %v234, %v1530
  %1532 = vmatprep.mubr.bf16.mxu0 %v1131
  %1533 = vmatmul.mubr.bf16.gmra.mrb[0].mxu0 %v668
  %v1534 = vpop.f32.mrb[0].mxu0
  %v1535 = vadd.f32 %v230, %v1534
  %v1536 = vpop.f32.mrb[0].mxu0
  %v1537 = vadd.f32 %v234, %v1536
  %v1538 = vpop.f32.mrb[0].mxu0
  %v1539 = vadd.f32 %v230, %v1538
  %v1540 = vpop.f32.mrb[0].mxu0
  %v1541 = vadd.f32 %v234, %v1540
  %1542 = vmatprep.mubr.bf16.mxu0 %v1134
  %1543 = vmatmul.mubr.bf16.gmra.mrb[0].mxu0 %v670
  %v1544 = vpop.f32.mrb[0].mxu0
  %v1545 = vadd.f32 %v230, %v1544
  %v1546 = vpop.f32.mrb[0].mxu0
  %v1547 = vadd.f32 %v234, %v1546
  %v1548 = vpop.f32.mrb[0].mxu0
  %v1549 = vadd.f32 %v230, %v1548
  %v1550 = vpop.f32.mrb[0].mxu0
  %v1551 = vadd.f32 %v234, %v1550
  %1552 = vmatprep.mubr.bf16.mxu0 %v1137
  %1553 = vmatmul.mubr.bf16.gmra.mrb[0].mxu0 %v672
  %v1554 = vpop.f32.mrb[0].mxu0
  %v1555 = vadd.f32 %v230, %v1554
  %v1556 = vpop.f32.mrb[0].mxu0
  %v1557 = vadd.f32 %v234, %v1556
  %v1558 = vpop.f32.mrb[0].mxu0
  %v1559 = vadd.f32 %v230, %v1558
  %v1560 = vpop.f32.mrb[0].mxu0
  %v1561 = vadd.f32 %v234, %v1560
  %1562 = vmatprep.mubr.bf16.mxu0 %v1140
  %1563 = vmatmul.mubr.bf16.gmra.mrb[0].mxu0 %v674
  %v1564 = vpop.f32.mrb[0].mxu0
  %v1565 = vadd.f32 %v230, %v1564
  %v1566 = vpop.f32.mrb[0].mxu0
  %v1567 = vadd.f32 %v234, %v1566
  %v1568 = vpop.f32.mrb[0].mxu0
  %v1569 = vadd.f32 %v230, %v1568
  %v1570 = vpop.f32.mrb[0].mxu0
  %v1571 = vadd.f32 %v234, %v1570
  %1572 = vmatprep.mubr.bf16.mxu0 %v1143
  %1573 = vmatmul.mubr.bf16.gmra.mrb[0].mxu0 %v676
  %v1574 = vpop.f32.mrb[0].mxu0
  %v1575 = vadd.f32 %v230, %v1574
  %v1576 = vpop.f32.mrb[0].mxu0
  %v1577 = vadd.f32 %v234, %v1576
  %v1578 = vpop.f32.mrb[0].mxu0
  %v1579 = vadd.f32 %v230, %v1578
  %v1580 = vpop.f32.mrb[0].mxu0
  %v1581 = vadd.f32 %v234, %v1580
  %1582 = vmatprep.mubr.bf16.mxu0 %v1146
  %1583 = vmatmul.mubr.bf16.gmra.mrb[0].mxu0 %v678
  %v1584 = vpop.f32.mrb[0].mxu0
  %v1585 = vadd.f32 %v230, %v1584
  %v1586 = vpop.f32.mrb[0].mxu0
  %v1587 = vadd.f32 %v234, %v1586
  %v1588 = vpop.f32.mrb[0].mxu0
  %v1589 = vadd.f32 %v230, %v1588
  %v1590 = vpop.f32.mrb[0].mxu0
  %v1591 = vadd.f32 %v234, %v1590
  %1592 = vmatprep.mubr.bf16.mxu0 %v1149
  %1593 = vmatmul.mubr.bf16.gmra.mrb[0].mxu0 %v680
  %v1594 = vpop.f32.mrb[0].mxu0
  %v1595 = vadd.f32 %v230, %v1594
  %v1596 = vpop.f32.mrb[0].mxu0
  %v1597 = vadd.f32 %v234, %v1596
  %v1598 = vpop.f32.mrb[0].mxu0
  %v1599 = vadd.f32 %v230, %v1598
  %v1600 = vpop.f32.mrb[0].mxu0
  %v1601 = vadd.f32 %v234, %v1600
  %1602 = vmatprep.mubr.bf16.mxu0 %v1152
  %1603 = vmatmul.mubr.bf16.gmra.mrb[0].mxu0 %v682
  %v1604 = vpop.f32.mrb[0].mxu0
  %v1605 = vadd.f32 %v230, %v1604
  %v1606 = vpop.f32.mrb[0].mxu0
  %v1607 = vadd.f32 %v234, %v1606
  %v1608 = vpop.f32.mrb[0].mxu0
  %v1609 = vadd.f32 %v230, %v1608
  %v1610 = vpop.f32.mrb[0].mxu0
  %v1611 = vadd.f32 %v234, %v1610
  %1612 = vmatprep.mubr.bf16.mxu0 %v1155
  %1613 = vmatmul.mubr.bf16.gmra.mrb[0].mxu0 %v684
  %v1614 = vpop.f32.mrb[0].mxu0
  %v1615 = vadd.f32 %v230, %v1614
  %v1616 = vpop.f32.mrb[0].mxu0
  %v1617 = vadd.f32 %v234, %v1616
  %v1618 = vpop.f32.mrb[0].mxu0
  %v1619 = vadd.f32 %v230, %v1618
  %v1620 = vpop.f32.mrb[0].mxu0
  %v1621 = vadd.f32 %v234, %v1620
  %1622 = vmatprep.mubr.bf16.mxu0 %v1158
  %1623 = vmatmul.mubr.bf16.gmra.mrb[0].mxu0 %v686
  %v1624 = vpop.f32.mrb[0].mxu0
  %v1625 = vadd.f32 %v230, %v1624
  %v1626 = vpop.f32.mrb[0].mxu0
  %v1627 = vadd.f32 %v234, %v1626
  %v1628 = vpop.f32.mrb[0].mxu0
  %v1629 = vadd.f32 %v230, %v1628
  %v1630 = vpop.f32.mrb[0].mxu0
  %v1631 = vadd.f32 %v234, %v1630
  %1632 = vmatprep.mubr.bf16.mxu0 %v1161
  %1633 = vmatmul.mubr.bf16.gmra.mrb[0].mxu0 %v688
  %v1634 = vpop.f32.mrb[0].mxu0
  %v1635 = vadd.f32 %v230, %v1634
  %v1636 = vpop.f32.mrb[0].mxu0
  %v1637 = vadd.f32 %v234, %v1636
  %v1638 = vpop.f32.mrb[0].mxu0
  %v1639 = vadd.f32 %v230, %v1638
  %v1640 = vpop.f32.mrb[0].mxu0
  %v1641 = vadd.f32 %v234, %v1640
  %1642 = vmatprep.mubr.bf16.mxu0 %v1164
  %1643 = vmatmul.mubr.bf16.gmra.mrb[0].mxu0 %v690
  %v1644 = vpop.f32.mrb[0].mxu0
  %v1645 = vadd.f32 %v230, %v1644
  %v1646 = vpop.f32.mrb[0].mxu0
  %v1647 = vadd.f32 %v234, %v1646
  %v1648 = vpop.f32.mrb[0].mxu0
  %v1649 = vadd.f32 %v230, %v1648
  %v1650 = vpop.f32.mrb[0].mxu0
  %v1651 = vadd.f32 %v234, %v1650
  %1652 = vmatprep.mubr.bf16.mxu0 %v1167
  %1653 = vmatmul.mubr.bf16.gmra.mrb[0].mxu0 %v692
  %v1654 = vpop.f32.mrb[0].mxu0
  %v1655 = vadd.f32 %v230, %v1654
  %v1656 = vpop.f32.mrb[0].mxu0
  %v1657 = vadd.f32 %v234, %v1656
  %v1658 = vpop.f32.mrb[0].mxu0
  %v1659 = vadd.f32 %v230, %v1658
  %v1660 = vpop.f32.mrb[0].mxu0
  %v1661 = vadd.f32 %v234, %v1660
  %1662 = vmatprep.mubr.bf16.mxu0 %v1170
  %1663 = vmatmul.mubr.bf16.gmra.mrb[0].mxu0 %v694
  %v1664 = vpop.f32.mrb[0].mxu0
  %v1665 = vadd.f32 %v230, %v1664
  %v1666 = vpop.f32.mrb[0].mxu0
  %v1667 = vadd.f32 %v234, %v1666
  %v1668 = vpop.f32.mrb[0].mxu0
  %v1669 = vadd.f32 %v230, %v1668
  %v1670 = vpop.f32.mrb[0].mxu0
  %v1671 = vadd.f32 %v234, %v1670
  %1672 = vmatprep.mubr.bf16.mxu0 %v1173
  %1673 = vmatmul.mubr.bf16.gmra.mrb[0].mxu0 %v696
  %v1674 = vpop.f32.mrb[0].mxu0
  %v1675 = vadd.f32 %v230, %v1674
  %v1676 = vpop.f32.mrb[0].mxu0
  %v1677 = vadd.f32 %v234, %v1676
  %v1678 = vpop.f32.mrb[0].mxu0
  %v1679 = vadd.f32 %v230, %v1678
  %v1680 = vpop.f32.mrb[0].mxu0
  %v1681 = vadd.f32 %v234, %v1680
  %1682 = vmatprep.mubr.bf16.mxu0 %v1176
  %1683 = vmatmul.mubr.bf16.gmra.mrb[0].mxu0 %v698
  %v1684 = vpop.f32.mrb[0].mxu0
  %v1685 = vadd.f32 %v230, %v1684
  %v1686 = vpop.f32.mrb[0].mxu0
  %v1687 = vadd.f32 %v234, %v1686
  %v1688 = vpop.f32.mrb[0].mxu0
  %v1689 = vadd.f32 %v230, %v1688
  %v1690 = vpop.f32.mrb[0].mxu0
  %v1691 = vadd.f32 %v234, %v1690
  %1692 = vmatprep.mubr.bf16.mxu0 %v1179
  %1693 = vmatmul.mubr.bf16.gmra.mrb[0].mxu0 %v700
  %v1694 = vpop.f32.mrb[0].mxu0
  %v1695 = vadd.f32 %v230, %v1694
  %v1696 = vpop.f32.mrb[0].mxu0
  %v1697 = vadd.f32 %v234, %v1696
  %v1698 = vpop.f32.mrb[0].mxu0
  %v1699 = vadd.f32 %v230, %v1698
  %v1700 = vpop.f32.mrb[0].mxu0
  %v1701 = vadd.f32 %v234, %v1700
  %1702 = vmatprep.mubr.bf16.mxu0 %v1182
  %1703 = vmatmul.mubr.bf16.gmra.mrb[0].mxu0 %v702
  %v1704 = vpop.f32.mrb[0].mxu0
  %v1705 = vadd.f32 %v230, %v1704
  %v1706 = vpop.f32.mrb[0].mxu0
  %v1707 = vadd.f32 %v234, %v1706
  %v1708 = vpop.f32.mrb[0].mxu0
  %v1709 = vadd.f32 %v230, %v1708
  %v1710 = vpop.f32.mrb[0].mxu0
  %v1711 = vadd.f32 %v234, %v1710
  %1712 = vmatprep.mubr.bf16.mxu0 %v1185
  %1713 = vmatmul.mubr.bf16.gmra.mrb[0].mxu0 %v704
  %v1714 = vpop.f32.mrb[0].mxu0
  %v1715 = vadd.f32 %v230, %v1714
  %v1716 = vpop.f32.mrb[0].mxu0
  %v1717 = vadd.f32 %v234, %v1716
  %v1718 = vpop.f32.mrb[0].mxu0
  %v1719 = vadd.f32 %v230, %v1718
  %v1720 = vpop.f32.mrb[0].mxu0
  %v1721 = vadd.f32 %v234, %v1720
  %1722 = vmatprep.mubr.bf16.mxu0 %v1188
  %1723 = vmatmul.mubr.bf16.gmra.mrb[0].mxu0 %v706
  %v1724 = vpop.f32.mrb[0].mxu0
  %v1725 = vadd.f32 %v230, %v1724
  %v1726 = vpop.f32.mrb[0].mxu0
  %v1727 = vadd.f32 %v234, %v1726
  %v1728 = vpop.f32.mrb[0].mxu0
  %v1729 = vadd.f32 %v230, %v1728
  %v1730 = vpop.f32.mrb[0].mxu0
  %v1731 = vadd.f32 %v234, %v1730
  %1732 = vmatprep.mubr.bf16.mxu0 %v1191
  %1733 = vmatmul.mubr.bf16.gmra.mrb[0].mxu0 %v708
  %v1734 = vpop.f32.mrb[0].mxu0
  %v1735 = vadd.f32 %v230, %v1734
  %v1736 = vpop.f32.mrb[0].mxu0
  %v1737 = vadd.f32 %v234, %v1736
  %v1738 = vpop.f32.mrb[0].mxu0
  %v1739 = vadd.f32 %v230, %v1738
  %v1740 = vpop.f32.mrb[0].mxu0
  %v1741 = vadd.f32 %v234, %v1740
  %1742 = vmatprep.mubr.bf16.mxu0 %v1194
  %1743 = vmatmul.mubr.bf16.gmra.mrb[0].mxu0 %v710
  %v1744 = vpop.f32.mrb[0].mxu0
  %v1745 = vadd.f32 %v230, %v1744
  %v1746 = vpop.f32.mrb[0].mxu0
  %v1747 = vadd.f32 %v234, %v1746
  %v1748 = vpop.f32.mrb[0].mxu0
  %v1749 = vadd.f32 %v230, %v1748
  %v1750 = vpop.f32.mrb[0].mxu0
  %v1751 = vadd.f32 %v234, %v1750
  %1752 = vmatprep.mubr.bf16.mxu0 %v1197
  %1753 = vmatmul.mubr.bf16.gmra.mrb[0].mxu0 %v712
  %v1754 = vpop.f32.mrb[0].mxu0
  %v1755 = vadd.f32 %v230, %v1754
  %v1756 = vpop.f32.mrb[0].mxu0
  %v1757 = vadd.f32 %v234, %v1756
  %v1758 = vpop.f32.mrb[0].mxu0
  %v1759 = vadd.f32 %v230, %v1758
  %v1760 = vpop.f32.mrb[0].mxu0
  %v1761 = vadd.f32 %v234, %v1760
  %1762 = vmatprep.mubr.bf16.mxu0 %v1200
  %1763 = vmatmul.mubr.bf16.gmra.mrb[0].mxu0 %v714
  %v1764 = vpop.f32.mrb[0].mxu0
  %v1765 = vadd.f32 %v230, %v1764
  %v1766 = vpop.f32.mrb[0].mxu0
  %v1767 = vadd.f32 %v234, %v1766
  %v1768 = vpop.f32.mrb[0].mxu0
  %v1769 = vadd.f32 %v230, %v1768
  %v1770 = vpop.f32.mrb[0].mxu0
  %v1771 = vadd.f32 %v234, %v1770
  %1772 = vmatprep.mubr.bf16.mxu0 %v1203
  %1773 = vmatmul.mubr.bf16.gmra.mrb[0].mxu0 %v716
  %v1774 = vpop.f32.mrb[0].mxu0
  %v1775 = vadd.f32 %v230, %v1774
  %v1776 = vpop.f32.mrb[0].mxu0
  %v1777 = vadd.f32 %v234, %v1776
  %v1778 = vpop.f32.mrb[0].mxu0
  %v1779 = vadd.f32 %v230, %v1778
  %v1780 = vpop.f32.mrb[0].mxu0
  %v1781 = vadd.f32 %v234, %v1780
  %1782 = vmatprep.mubr.bf16.mxu0 %v1206
  %1783 = vmatmul.mubr.bf16.gmra.mrb[0].mxu0 %v718
  %v1784 = vpop.f32.mrb[0].mxu0
  %v1785 = vadd.f32 %v230, %v1784
  %v1786 = vpop.f32.mrb[0].mxu0
  %v1787 = vadd.f32 %v234, %v1786
  %v1788 = vpop.f32.mrb[0].mxu0
  %v1789 = vadd.f32 %v230, %v1788
  %v1790 = vpop.f32.mrb[0].mxu0
  %v1791 = vadd.f32 %v234, %v1790
  %1792 = vmatprep.mubr.bf16.mxu0 %v1209
  %1793 = vmatmul.mubr.bf16.gmra.mrb[0].mxu0 %v720
  %v1794 = vpop.f32.mrb[0].mxu0
  %v1795 = vadd.f32 %v230, %v1794
  %v1796 = vpop.f32.mrb[0].mxu0
  %v1797 = vadd.f32 %v234, %v1796
  %v1798 = vpop.f32.mrb[0].mxu0
  %v1799 = vadd.f32 %v230, %v1798
  %v1800 = vpop.f32.mrb[0].mxu0
  %v1801 = vadd.f32 %v234, %v1800
  %1802 = vmatprep.mubr.bf16.mxu0 %v1212
  %1803 = vmatmul.mubr.bf16.gmra.mrb[0].mxu0 %v722
  %v1804 = vpop.f32.mrb[0].mxu0
  %v1805 = vadd.f32 %v230, %v1804
  %v1806 = vpop.f32.mrb[0].mxu0
  %v1807 = vadd.f32 %v234, %v1806
  %v1808 = vpop.f32.mrb[0].mxu0
  %v1809 = vadd.f32 %v230, %v1808
  %v1810 = vpop.f32.mrb[0].mxu0
  %v1811 = vadd.f32 %v234, %v1810
  %1812 = vmatprep.mubr.bf16.mxu0 %v1215
  %1813 = vmatmul.mubr.bf16.gmra.mrb[0].mxu0 %v724
  %v1814 = vpop.f32.mrb[0].mxu0
  %v1815 = vadd.f32 %v230, %v1814
  %v1816 = vpop.f32.mrb[0].mxu0
  %v1817 = vadd.f32 %v234, %v1816
  %v1818 = vpop.f32.mrb[0].mxu0
  %v1819 = vadd.f32 %v230, %v1818
  %v1820 = vpop.f32.mrb[0].mxu0
  %v1821 = vadd.f32 %v234, %v1820
  %1822 = vmatprep.mubr.bf16.mxu0 %v1218
  %1823 = vmatmul.mubr.bf16.gmra.mrb[0].mxu0 %v726
  %v1824 = vpop.f32.mrb[0].mxu0
  %v1825 = vadd.f32 %v230, %v1824
  %v1826 = vpop.f32.mrb[0].mxu0
  %v1827 = vadd.f32 %v234, %v1826
  %v1828 = vpop.f32.mrb[0].mxu0
  %v1829 = vadd.f32 %v230, %v1828
  %v1830 = vpop.f32.mrb[0].mxu0
  %v1831 = vadd.f32 %v234, %v1830
  %1832 = vmatprep.mubr.bf16.mxu0 %v1221
  %1833 = vmatmul.mubr.bf16.gmra.mrb[0].mxu0 %v728
  %v1834 = vpop.f32.mrb[0].mxu0
  %v1835 = vadd.f32 %v230, %v1834
  %v1836 = vpop.f32.mrb[0].mxu0
  %v1837 = vadd.f32 %v234, %v1836
  %v1838 = vpop.f32.mrb[0].mxu0
  %v1839 = vadd.f32 %v230, %v1838
  %v1840 = vpop.f32.mrb[0].mxu0
  %v1841 = vadd.f32 %v234, %v1840
  %1842 = vmatprep.mubr.bf16.mxu0 %v1224
  %1843 = vmatmul.mubr.bf16.gmra.mrb[0].mxu0 %v730
  %v1844 = vpop.f32.mrb[0].mxu0
  %v1845 = vadd.f32 %v230, %v1844
  %v1846 = vpop.f32.mrb[0].mxu0
  %v1847 = vadd.f32 %v234, %v1846
  %v1848 = vpop.f32.mrb[0].mxu0
  %v1849 = vadd.f32 %v230, %v1848
  %v1850 = vpop.f32.mrb[0].mxu0
  %v1851 = vadd.f32 %v234, %v1850
  %1852 = vmatprep.mubr.bf16.mxu0 %v1227
  %1853 = vmatmul.mubr.bf16.gmra.mrb[0].mxu0 %v732
  %v1854 = vpop.f32.mrb[0].mxu0
  %v1855 = vadd.f32 %v230, %v1854
  %v1856 = vpop.f32.mrb[0].mxu0
  %v1857 = vadd.f32 %v234, %v1856
  %v1858 = vpop.f32.mrb[0].mxu0
  %v1859 = vadd.f32 %v230, %v1858
  %v1860 = vpop.f32.mrb[0].mxu0
  %v1861 = vadd.f32 %v234, %v1860
  %1862 = vmatprep.mubr.bf16.mxu0 %v1230
  %1863 = vmatmul.mubr.bf16.gmra.mrb[0].mxu0 %v734
  %v1864 = vpop.f32.mrb[0].mxu0
  %v1865 = vadd.f32 %v230, %v1864
  %v1866 = vpop.f32.mrb[0].mxu0
  %v1867 = vadd.f32 %v234, %v1866
  %v1868 = vpop.f32.mrb[0].mxu0
  %v1869 = vadd.f32 %v230, %v1868
  %v1870 = vpop.f32.mrb[0].mxu0
  %v1871 = vadd.f32 %v234, %v1870
  %1872 = vmatprep.mubr.bf16.mxu0 %v1233
  %1873 = vmatmul.mubr.bf16.gmra.mrb[0].mxu0 %v736
  %v1874 = vpop.f32.mrb[0].mxu0
  %v1875 = vadd.f32 %v230, %v1874
  %v1876 = vpop.f32.mrb[0].mxu0
  %v1877 = vadd.f32 %v234, %v1876
  %v1878 = vpop.f32.mrb[0].mxu0
  %v1879 = vadd.f32 %v230, %v1878
  %v1880 = vpop.f32.mrb[0].mxu0
  %v1881 = vadd.f32 %v234, %v1880
  %1882 = vmatprep.mubr.bf16.mxu0 %v1236
  %1883 = vmatmul.mubr.bf16.gmra.mrb[0].mxu0 %v738
  %v1884 = vpop.f32.mrb[0].mxu0
  %v1885 = vadd.f32 %v230, %v1884
  %v1886 = vpop.f32.mrb[0].mxu0
  %v1887 = vadd.f32 %v234, %v1886
  %v1888 = vpop.f32.mrb[0].mxu0
  %v1889 = vadd.f32 %v230, %v1888
  %v1890 = vpop.f32.mrb[0].mxu0
  %v1891 = vadd.f32 %v234, %v1890
  %1892 = vmatprep.mubr.bf16.mxu0 %v1239
  %1893 = vmatmul.mubr.bf16.gmra.mrb[0].mxu0 %v740
  %v1894 = vpop.f32.mrb[0].mxu0
  %v1895 = vadd.f32 %v230, %v1894
  %v1896 = vpop.f32.mrb[0].mxu0
  %v1897 = vadd.f32 %v234, %v1896
  %v1898 = vpop.f32.mrb[0].mxu0
  %v1899 = vadd.f32 %v230, %v1898
  %v1900 = vpop.f32.mrb[0].mxu0
  %v1901 = vadd.f32 %v234, %v1900
  %1902 = vmatprep.mubr.bf16.mxu0 %v1242
  %1903 = vmatmul.mubr.bf16.gmra.mrb[0].mxu0 %v742
  %v1904 = vpop.f32.mrb[0].mxu0
  %v1905 = vadd.f32 %v230, %v1904
  %v1906 = vpop.f32.mrb[0].mxu0
  %v1907 = vadd.f32 %v234, %v1906
  %v1908 = vpop.f32.mrb[0].mxu0
  %v1909 = vadd.f32 %v230, %v1908
  %v1910 = vpop.f32.mrb[0].mxu0
  %v1911 = vadd.f32 %v234, %v1910
  %1912 = vmatprep.mubr.bf16.mxu0 %v1245
  %1913 = vmatmul.mubr.bf16.gmra.mrb[0].mxu0 %v744
  %v1914 = vpop.f32.mrb[0].mxu0
  %v1915 = vadd.f32 %v230, %v1914
  %v1916 = vpop.f32.mrb[0].mxu0
  %v1917 = vadd.f32 %v234, %v1916
  %v1918 = vpop.f32.mrb[0].mxu0
  %v1919 = vadd.f32 %v230, %v1918
  %v1920 = vpop.f32.mrb[0].mxu0
  %v1921 = vadd.f32 %v234, %v1920
  %1922 = vdwg.mxu0
  %1923 = vmatprep.subr.bf16.mxu0 0
  %1924 = vmatpush1.bf16.msra.mxu0 %v966
  %1925 = vmatprep.subr.bf16.mxu0 0
  %1926 = vmatpush1.bf16.msra.mxu0 %v969
  %1927 = vmatprep.subr.bf16.mxu0 0
  %1928 = vmatpush1.bf16.msra.mxu0 %v972
  %1929 = vmatprep.subr.bf16.mxu0 0
  %1930 = vmatpush1.bf16.msra.mxu0 %v975
  %1931 = vmatprep.subr.bf16.mxu0 0
  %1932 = vmatpush1.bf16.msra.mxu0 %v978
  %1933 = vmatprep.subr.bf16.mxu0 0
  %1934 = vmatpush1.bf16.msra.mxu0 %v981
  %1935 = vmatprep.subr.bf16.mxu0 0
  %1936 = vmatpush1.bf16.msra.mxu0 %v984
  %1937 = vmatprep.subr.bf16.mxu0 0
  %1938 = vmatpush1.bf16.msra.mxu0 %v987
  %1939 = vmatprep.subr.bf16.mxu0 0
  %1940 = vmatpush1.bf16.msra.mxu0 %v990
  %1941 = vmatprep.subr.bf16.mxu0 0
  %1942 = vmatpush1.bf16.msra.mxu0 %v993
  %1943 = vmatprep.subr.bf16.mxu0 0
  %1944 = vmatpush1.bf16.msra.mxu0 %v996
  %1945 = vmatprep.subr.bf16.mxu0 0
  %1946 = vmatpush1.bf16.msra.mxu0 %v999
  %1947 = vmatprep.subr.bf16.mxu0 0
  %1948 = vmatpush1.bf16.msra.mxu0 %v1002
  %1949 = vmatprep.subr.bf16.mxu0 0
  %1950 = vmatpush1.bf16.msra.mxu0 %v1005
  %1951 = vmatprep.subr.bf16.mxu0 0
  %1952 = vmatpush1.bf16.msra.mxu0 %v1008
  %1953 = vmatprep.subr.bf16.mxu0 0
  %1954 = vmatpush1.bf16.msra.mxu0 %v1258
  %1955 = vmatprep.mubr.bf16.mxu0 %v1059
  %1956 = vmatmul.mubr.bf16.gmra.mrb[0].mxu0 %v620
  %v1957 = vpop.f32.mrb[0].mxu0
  %v1958 = vadd.f32 %v238, %v1957
  %v1959 = vpop.f32.mrb[0].mxu0
  %v1960 = vpop.f32.mrb[0].mxu0
  %v1961 = vadd.f32 %v238, %v1960
  %v1962 = vpop.f32.mrb[0].mxu0
  %1963 = vmatprep.mubr.bf16.mxu0 %v1062
  %1964 = vmatmul.mubr.bf16.gmra.mrb[0].mxu0 %v622
  %v1965 = vpop.f32.mrb[0].mxu0
  %v1966 = vadd.f32 %v238, %v1965
  %v1967 = vpop.f32.mrb[0].mxu0
  %v1968 = vpop.f32.mrb[0].mxu0
  %v1969 = vadd.f32 %v238, %v1968
  %v1970 = vpop.f32.mrb[0].mxu0
  %1971 = vmatprep.mubr.bf16.mxu0 %v1065
  %1972 = vmatmul.mubr.bf16.gmra.mrb[0].mxu0 %v624
  %v1973 = vpop.f32.mrb[0].mxu0
  %v1974 = vadd.f32 %v238, %v1973
  %v1975 = vpop.f32.mrb[0].mxu0
  %v1976 = vpop.f32.mrb[0].mxu0
  %v1977 = vadd.f32 %v238, %v1976
  %v1978 = vpop.f32.mrb[0].mxu0
  %1979 = vmatprep.mubr.bf16.mxu0 %v1068
  %1980 = vmatmul.mubr.bf16.gmra.mrb[0].mxu0 %v626
  %v1981 = vpop.f32.mrb[0].mxu0
  %v1982 = vadd.f32 %v238, %v1981
  %v1983 = vpop.f32.mrb[0].mxu0
  %v1984 = vpop.f32.mrb[0].mxu0
  %v1985 = vadd.f32 %v238, %v1984
  %v1986 = vpop.f32.mrb[0].mxu0
  %1987 = vmatprep.mubr.bf16.mxu0 %v1071
  %1988 = vmatmul.mubr.bf16.gmra.mrb[0].mxu0 %v628
  %v1989 = vpop.f32.mrb[0].mxu0
  %v1990 = vadd.f32 %v238, %v1989
  %v1991 = vpop.f32.mrb[0].mxu0
  %v1992 = vpop.f32.mrb[0].mxu0
  %v1993 = vadd.f32 %v238, %v1992
  %v1994 = vpop.f32.mrb[0].mxu0
  %1995 = vmatprep.mubr.bf16.mxu0 %v1074
  %1996 = vmatmul.mubr.bf16.gmra.mrb[0].mxu0 %v630
  %v1997 = vpop.f32.mrb[0].mxu0
  %v1998 = vadd.f32 %v238, %v1997
  %v1999 = vpop.f32.mrb[0].mxu0
  %v2000 = vpop.f32.mrb[0].mxu0
  %v2001 = vadd.f32 %v238, %v2000
  %v2002 = vpop.f32.mrb[0].mxu0
  %2003 = vmatprep.mubr.bf16.mxu0 %v1077
  %2004 = vmatmul.mubr.bf16.gmra.mrb[0].mxu0 %v632
  %v2005 = vpop.f32.mrb[0].mxu0
  %v2006 = vadd.f32 %v238, %v2005
  %v2007 = vpop.f32.mrb[0].mxu0
  %v2008 = vpop.f32.mrb[0].mxu0
  %v2009 = vadd.f32 %v238, %v2008
  %v2010 = vpop.f32.mrb[0].mxu0
  %2011 = vmatprep.mubr.bf16.mxu0 %v1080
  %2012 = vmatmul.mubr.bf16.gmra.mrb[0].mxu0 %v634
  %v2013 = vpop.f32.mrb[0].mxu0
  %v2014 = vadd.f32 %v238, %v2013
  %v2015 = vpop.f32.mrb[0].mxu0
  %v2016 = vpop.f32.mrb[0].mxu0
  %v2017 = vadd.f32 %v238, %v2016
  %v2018 = vpop.f32.mrb[0].mxu0
  %2019 = vmatprep.mubr.bf16.mxu0 %v1083
  %2020 = vmatmul.mubr.bf16.gmra.mrb[0].mxu0 %v636
  %v2021 = vpop.f32.mrb[0].mxu0
  %v2022 = vadd.f32 %v238, %v2021
  %v2023 = vpop.f32.mrb[0].mxu0
  %v2024 = vpop.f32.mrb[0].mxu0
  %v2025 = vadd.f32 %v238, %v2024
  %v2026 = vpop.f32.mrb[0].mxu0
  %2027 = vmatprep.mubr.bf16.mxu0 %v1086
  %2028 = vmatmul.mubr.bf16.gmra.mrb[0].mxu0 %v638
  %v2029 = vpop.f32.mrb[0].mxu0
  %v2030 = vadd.f32 %v238, %v2029
  %v2031 = vpop.f32.mrb[0].mxu0
  %v2032 = vpop.f32.mrb[0].mxu0
  %v2033 = vadd.f32 %v238, %v2032
  %v2034 = vpop.f32.mrb[0].mxu0
  %2035 = vmatprep.mubr.bf16.mxu0 %v1089
  %2036 = vmatmul.mubr.bf16.gmra.mrb[0].mxu0 %v640
  %v2037 = vpop.f32.mrb[0].mxu0
  %v2038 = vadd.f32 %v238, %v2037
  %v2039 = vpop.f32.mrb[0].mxu0
  %v2040 = vpop.f32.mrb[0].mxu0
  %v2041 = vadd.f32 %v238, %v2040
  %v2042 = vpop.f32.mrb[0].mxu0
  %2043 = vmatprep.mubr.bf16.mxu0 %v1092
  %2044 = vmatmul.mubr.bf16.gmra.mrb[0].mxu0 %v642
  %v2045 = vpop.f32.mrb[0].mxu0
  %v2046 = vadd.f32 %v238, %v2045
  %v2047 = vpop.f32.mrb[0].mxu0
  %v2048 = vpop.f32.mrb[0].mxu0
  %v2049 = vadd.f32 %v238, %v2048
  %v2050 = vpop.f32.mrb[0].mxu0
  %2051 = vmatprep.mubr.bf16.mxu0 %v1095
  %2052 = vmatmul.mubr.bf16.gmra.mrb[0].mxu0 %v644
  %v2053 = vpop.f32.mrb[0].mxu0
  %v2054 = vadd.f32 %v238, %v2053
  %v2055 = vpop.f32.mrb[0].mxu0
  %v2056 = vpop.f32.mrb[0].mxu0
  %v2057 = vadd.f32 %v238, %v2056
  %v2058 = vpop.f32.mrb[0].mxu0
  %2059 = vmatprep.mubr.bf16.mxu0 %v1098
  %2060 = vmatmul.mubr.bf16.gmra.mrb[0].mxu0 %v646
  %v2061 = vpop.f32.mrb[0].mxu0
  %v2062 = vadd.f32 %v238, %v2061
  %v2063 = vpop.f32.mrb[0].mxu0
  %v2064 = vpop.f32.mrb[0].mxu0
  %v2065 = vadd.f32 %v238, %v2064
  %v2066 = vpop.f32.mrb[0].mxu0
  %2067 = vmatprep.mubr.bf16.mxu0 %v1101
  %2068 = vmatmul.mubr.bf16.gmra.mrb[0].mxu0 %v648
  %v2069 = vpop.f32.mrb[0].mxu0
  %v2070 = vadd.f32 %v238, %v2069
  %v2071 = vpop.f32.mrb[0].mxu0
  %v2072 = vpop.f32.mrb[0].mxu0
  %v2073 = vadd.f32 %v238, %v2072
  %v2074 = vpop.f32.mrb[0].mxu0
  %2075 = vmatprep.mubr.bf16.mxu0 %v1104
  %2076 = vmatmul.mubr.bf16.gmra.mrb[0].mxu0 %v650
  %v2077 = vpop.f32.mrb[0].mxu0
  %v2078 = vadd.f32 %v238, %v2077
  %v2079 = vpop.f32.mrb[0].mxu0
  %v2080 = vpop.f32.mrb[0].mxu0
  %v2081 = vadd.f32 %v238, %v2080
  %v2082 = vpop.f32.mrb[0].mxu0
  %2083 = vmatprep.mubr.bf16.mxu0 %v1107
  %2084 = vmatmul.mubr.bf16.gmra.mrb[0].mxu0 %v652
  %v2085 = vpop.f32.mrb[0].mxu0
  %v2086 = vadd.f32 %v238, %v2085
  %v2087 = vpop.f32.mrb[0].mxu0
  %v2088 = vpop.f32.mrb[0].mxu0
  %v2089 = vadd.f32 %v238, %v2088
  %v2090 = vpop.f32.mrb[0].mxu0
  %2091 = vmatprep.mubr.bf16.mxu0 %v1110
  %2092 = vmatmul.mubr.bf16.gmra.mrb[0].mxu0 %v654
  %v2093 = vpop.f32.mrb[0].mxu0
  %v2094 = vadd.f32 %v238, %v2093
  %v2095 = vpop.f32.mrb[0].mxu0
  %v2096 = vpop.f32.mrb[0].mxu0
  %v2097 = vadd.f32 %v238, %v2096
  %v2098 = vpop.f32.mrb[0].mxu0
  %2099 = vmatprep.mubr.bf16.mxu0 %v1113
  %2100 = vmatmul.mubr.bf16.gmra.mrb[0].mxu0 %v656
  %v2101 = vpop.f32.mrb[0].mxu0
  %v2102 = vadd.f32 %v238, %v2101
  %v2103 = vpop.f32.mrb[0].mxu0
  %v2104 = vpop.f32.mrb[0].mxu0
  %v2105 = vadd.f32 %v238, %v2104
  %v2106 = vpop.f32.mrb[0].mxu0
  %2107 = vmatprep.mubr.bf16.mxu0 %v1116
  %2108 = vmatmul.mubr.bf16.gmra.mrb[0].mxu0 %v658
  %v2109 = vpop.f32.mrb[0].mxu0
  %v2110 = vadd.f32 %v238, %v2109
  %v2111 = vpop.f32.mrb[0].mxu0
  %v2112 = vpop.f32.mrb[0].mxu0
  %v2113 = vadd.f32 %v238, %v2112
  %v2114 = vpop.f32.mrb[0].mxu0
  %2115 = vmatprep.mubr.bf16.mxu0 %v1119
  %2116 = vmatmul.mubr.bf16.gmra.mrb[0].mxu0 %v660
  %v2117 = vpop.f32.mrb[0].mxu0
  %v2118 = vadd.f32 %v238, %v2117
  %v2119 = vpop.f32.mrb[0].mxu0
  %v2120 = vpop.f32.mrb[0].mxu0
  %v2121 = vadd.f32 %v238, %v2120
  %v2122 = vpop.f32.mrb[0].mxu0
  %2123 = vmatprep.mubr.bf16.mxu0 %v1122
  %2124 = vmatmul.mubr.bf16.gmra.mrb[0].mxu0 %v662
  %v2125 = vpop.f32.mrb[0].mxu0
  %v2126 = vadd.f32 %v238, %v2125
  %v2127 = vpop.f32.mrb[0].mxu0
  %v2128 = vpop.f32.mrb[0].mxu0
  %v2129 = vadd.f32 %v238, %v2128
  %v2130 = vpop.f32.mrb[0].mxu0
  %2131 = vmatprep.mubr.bf16.mxu0 %v1125
  %2132 = vmatmul.mubr.bf16.gmra.mrb[0].mxu0 %v664
  %v2133 = vpop.f32.mrb[0].mxu0
  %v2134 = vadd.f32 %v238, %v2133
  %v2135 = vpop.f32.mrb[0].mxu0
  %v2136 = vpop.f32.mrb[0].mxu0
  %v2137 = vadd.f32 %v238, %v2136
  %v2138 = vpop.f32.mrb[0].mxu0
  %2139 = vmatprep.mubr.bf16.mxu0 %v1128
  %2140 = vmatmul.mubr.bf16.gmra.mrb[0].mxu0 %v666
  %v2141 = vpop.f32.mrb[0].mxu0
  %v2142 = vadd.f32 %v238, %v2141
  %v2143 = vpop.f32.mrb[0].mxu0
  %v2144 = vpop.f32.mrb[0].mxu0
  %v2145 = vadd.f32 %v238, %v2144
  %v2146 = vpop.f32.mrb[0].mxu0
  %2147 = vmatprep.mubr.bf16.mxu0 %v1131
  %2148 = vmatmul.mubr.bf16.gmra.mrb[0].mxu0 %v668
  %v2149 = vpop.f32.mrb[0].mxu0
  %v2150 = vadd.f32 %v238, %v2149
  %v2151 = vpop.f32.mrb[0].mxu0
  %v2152 = vpop.f32.mrb[0].mxu0
  %v2153 = vadd.f32 %v238, %v2152
  %v2154 = vpop.f32.mrb[0].mxu0
  %2155 = vmatprep.mubr.bf16.mxu0 %v1134
  %2156 = vmatmul.mubr.bf16.gmra.mrb[0].mxu0 %v670
  %v2157 = vpop.f32.mrb[0].mxu0
  %v2158 = vadd.f32 %v238, %v2157
  %v2159 = vpop.f32.mrb[0].mxu0
  %v2160 = vpop.f32.mrb[0].mxu0
  %v2161 = vadd.f32 %v238, %v2160
  %v2162 = vpop.f32.mrb[0].mxu0
  %2163 = vmatprep.mubr.bf16.mxu0 %v1137
  %2164 = vmatmul.mubr.bf16.gmra.mrb[0].mxu0 %v672
  %v2165 = vpop.f32.mrb[0].mxu0
  %v2166 = vadd.f32 %v238, %v2165
  %v2167 = vpop.f32.mrb[0].mxu0
  %v2168 = vpop.f32.mrb[0].mxu0
  %v2169 = vadd.f32 %v238, %v2168
  %v2170 = vpop.f32.mrb[0].mxu0
  %2171 = vmatprep.mubr.bf16.mxu0 %v1140
  %2172 = vmatmul.mubr.bf16.gmra.mrb[0].mxu0 %v674
  %v2173 = vpop.f32.mrb[0].mxu0
  %v2174 = vadd.f32 %v238, %v2173
  %v2175 = vpop.f32.mrb[0].mxu0
  %v2176 = vpop.f32.mrb[0].mxu0
  %v2177 = vadd.f32 %v238, %v2176
  %v2178 = vpop.f32.mrb[0].mxu0
  %2179 = vmatprep.mubr.bf16.mxu0 %v1143
  %2180 = vmatmul.mubr.bf16.gmra.mrb[0].mxu0 %v676
  %v2181 = vpop.f32.mrb[0].mxu0
  %v2182 = vadd.f32 %v238, %v2181
  %v2183 = vpop.f32.mrb[0].mxu0
  %v2184 = vpop.f32.mrb[0].mxu0
  %v2185 = vadd.f32 %v238, %v2184
  %v2186 = vpop.f32.mrb[0].mxu0
  %2187 = vmatprep.mubr.bf16.mxu0 %v1146
  %2188 = vmatmul.mubr.bf16.gmra.mrb[0].mxu0 %v678
  %v2189 = vpop.f32.mrb[0].mxu0
  %v2190 = vadd.f32 %v238, %v2189
  %v2191 = vpop.f32.mrb[0].mxu0
  %v2192 = vpop.f32.mrb[0].mxu0
  %v2193 = vadd.f32 %v238, %v2192
  %v2194 = vpop.f32.mrb[0].mxu0
  %2195 = vmatprep.mubr.bf16.mxu0 %v1149
  %2196 = vmatmul.mubr.bf16.gmra.mrb[0].mxu0 %v680
  %v2197 = vpop.f32.mrb[0].mxu0
  %v2198 = vadd.f32 %v238, %v2197
  %v2199 = vpop.f32.mrb[0].mxu0
  %v2200 = vpop.f32.mrb[0].mxu0
  %v2201 = vadd.f32 %v238, %v2200
  %v2202 = vpop.f32.mrb[0].mxu0
  %2203 = vmatprep.mubr.bf16.mxu0 %v1152
  %2204 = vmatmul.mubr.bf16.gmra.mrb[0].mxu0 %v682
  %v2205 = vpop.f32.mrb[0].mxu0
  %v2206 = vadd.f32 %v238, %v2205
  %v2207 = vpop.f32.mrb[0].mxu0
  %v2208 = vpop.f32.mrb[0].mxu0
  %v2209 = vadd.f32 %v238, %v2208
  %v2210 = vpop.f32.mrb[0].mxu0
  %2211 = vmatprep.mubr.bf16.mxu0 %v1155
  %2212 = vmatmul.mubr.bf16.gmra.mrb[0].mxu0 %v684
  %v2213 = vpop.f32.mrb[0].mxu0
  %v2214 = vadd.f32 %v238, %v2213
  %v2215 = vpop.f32.mrb[0].mxu0
  %v2216 = vpop.f32.mrb[0].mxu0
  %v2217 = vadd.f32 %v238, %v2216
  %v2218 = vpop.f32.mrb[0].mxu0
  %2219 = vmatprep.mubr.bf16.mxu0 %v1158
  %2220 = vmatmul.mubr.bf16.gmra.mrb[0].mxu0 %v686
  %v2221 = vpop.f32.mrb[0].mxu0
  %v2222 = vadd.f32 %v238, %v2221
  %v2223 = vpop.f32.mrb[0].mxu0
  %v2224 = vpop.f32.mrb[0].mxu0
  %v2225 = vadd.f32 %v238, %v2224
  %v2226 = vpop.f32.mrb[0].mxu0
  %2227 = vmatprep.mubr.bf16.mxu0 %v1161
  %2228 = vmatmul.mubr.bf16.gmra.mrb[0].mxu0 %v688
  %v2229 = vpop.f32.mrb[0].mxu0
  %v2230 = vadd.f32 %v238, %v2229
  %v2231 = vpop.f32.mrb[0].mxu0
  %v2232 = vpop.f32.mrb[0].mxu0
  %v2233 = vadd.f32 %v238, %v2232
  %v2234 = vpop.f32.mrb[0].mxu0
  %2235 = vmatprep.mubr.bf16.mxu0 %v1164
  %2236 = vmatmul.mubr.bf16.gmra.mrb[0].mxu0 %v690
  %v2237 = vpop.f32.mrb[0].mxu0
  %v2238 = vadd.f32 %v238, %v2237
  %v2239 = vpop.f32.mrb[0].mxu0
  %v2240 = vpop.f32.mrb[0].mxu0
  %v2241 = vadd.f32 %v238, %v2240
  %v2242 = vpop.f32.mrb[0].mxu0
  %2243 = vmatprep.mubr.bf16.mxu0 %v1167
  %2244 = vmatmul.mubr.bf16.gmra.mrb[0].mxu0 %v692
  %v2245 = vpop.f32.mrb[0].mxu0
  %v2246 = vadd.f32 %v238, %v2245
  %v2247 = vpop.f32.mrb[0].mxu0
  %v2248 = vpop.f32.mrb[0].mxu0
  %v2249 = vadd.f32 %v238, %v2248
  %v2250 = vpop.f32.mrb[0].mxu0
  %2251 = vmatprep.mubr.bf16.mxu0 %v1170
  %2252 = vmatmul.mubr.bf16.gmra.mrb[0].mxu0 %v694
  %v2253 = vpop.f32.mrb[0].mxu0
  %v2254 = vadd.f32 %v238, %v2253
  %v2255 = vpop.f32.mrb[0].mxu0
  %v2256 = vpop.f32.mrb[0].mxu0
  %v2257 = vadd.f32 %v238, %v2256
  %v2258 = vpop.f32.mrb[0].mxu0
  %2259 = vmatprep.mubr.bf16.mxu0 %v1173
  %2260 = vmatmul.mubr.bf16.gmra.mrb[0].mxu0 %v696
  %v2261 = vpop.f32.mrb[0].mxu0
  %v2262 = vadd.f32 %v238, %v2261
  %v2263 = vpop.f32.mrb[0].mxu0
  %v2264 = vpop.f32.mrb[0].mxu0
  %v2265 = vadd.f32 %v238, %v2264
  %v2266 = vpop.f32.mrb[0].mxu0
  %2267 = vmatprep.mubr.bf16.mxu0 %v1176
  %2268 = vmatmul.mubr.bf16.gmra.mrb[0].mxu0 %v698
  %v2269 = vpop.f32.mrb[0].mxu0
  %v2270 = vadd.f32 %v238, %v2269
  %v2271 = vpop.f32.mrb[0].mxu0
  %v2272 = vpop.f32.mrb[0].mxu0
  %v2273 = vadd.f32 %v238, %v2272
  %v2274 = vpop.f32.mrb[0].mxu0
  %2275 = vmatprep.mubr.bf16.mxu0 %v1179
  %2276 = vmatmul.mubr.bf16.gmra.mrb[0].mxu0 %v700
  %v2277 = vpop.f32.mrb[0].mxu0
  %v2278 = vadd.f32 %v238, %v2277
  %v2279 = vpop.f32.mrb[0].mxu0
  %v2280 = vpop.f32.mrb[0].mxu0
  %v2281 = vadd.f32 %v238, %v2280
  %v2282 = vpop.f32.mrb[0].mxu0
  %2283 = vmatprep.mubr.bf16.mxu0 %v1182
  %2284 = vmatmul.mubr.bf16.gmra.mrb[0].mxu0 %v702
  %v2285 = vpop.f32.mrb[0].mxu0
  %v2286 = vadd.f32 %v238, %v2285
  %v2287 = vpop.f32.mrb[0].mxu0
  %v2288 = vpop.f32.mrb[0].mxu0
  %v2289 = vadd.f32 %v238, %v2288
  %v2290 = vpop.f32.mrb[0].mxu0
  %2291 = vmatprep.mubr.bf16.mxu0 %v1185
  %2292 = vmatmul.mubr.bf16.gmra.mrb[0].mxu0 %v704
  %v2293 = vpop.f32.mrb[0].mxu0
  %v2294 = vadd.f32 %v238, %v2293
  %v2295 = vpop.f32.mrb[0].mxu0
  %v2296 = vpop.f32.mrb[0].mxu0
  %v2297 = vadd.f32 %v238, %v2296
  %v2298 = vpop.f32.mrb[0].mxu0
  %2299 = vmatprep.mubr.bf16.mxu0 %v1188
  %2300 = vmatmul.mubr.bf16.gmra.mrb[0].mxu0 %v706
  %v2301 = vpop.f32.mrb[0].mxu0
  %v2302 = vadd.f32 %v238, %v2301
  %v2303 = vpop.f32.mrb[0].mxu0
  %v2304 = vpop.f32.mrb[0].mxu0
  %v2305 = vadd.f32 %v238, %v2304
  %v2306 = vpop.f32.mrb[0].mxu0
  %2307 = vmatprep.mubr.bf16.mxu0 %v1191
  %2308 = vmatmul.mubr.bf16.gmra.mrb[0].mxu0 %v708
  %v2309 = vpop.f32.mrb[0].mxu0
  %v2310 = vadd.f32 %v238, %v2309
  %v2311 = vpop.f32.mrb[0].mxu0
  %v2312 = vpop.f32.mrb[0].mxu0
  %v2313 = vadd.f32 %v238, %v2312
  %v2314 = vpop.f32.mrb[0].mxu0
  %2315 = vmatprep.mubr.bf16.mxu0 %v1194
  %2316 = vmatmul.mubr.bf16.gmra.mrb[0].mxu0 %v710
  %v2317 = vpop.f32.mrb[0].mxu0
  %v2318 = vadd.f32 %v238, %v2317
  %v2319 = vpop.f32.mrb[0].mxu0
  %v2320 = vpop.f32.mrb[0].mxu0
  %v2321 = vadd.f32 %v238, %v2320
  %v2322 = vpop.f32.mrb[0].mxu0
  %2323 = vmatprep.mubr.bf16.mxu0 %v1197
  %2324 = vmatmul.mubr.bf16.gmra.mrb[0].mxu0 %v712
  %v2325 = vpop.f32.mrb[0].mxu0
  %v2326 = vadd.f32 %v238, %v2325
  %v2327 = vpop.f32.mrb[0].mxu0
  %v2328 = vpop.f32.mrb[0].mxu0
  %v2329 = vadd.f32 %v238, %v2328
  %v2330 = vpop.f32.mrb[0].mxu0
  %2331 = vmatprep.mubr.bf16.mxu0 %v1200
  %2332 = vmatmul.mubr.bf16.gmra.mrb[0].mxu0 %v714
  %v2333 = vpop.f32.mrb[0].mxu0
  %v2334 = vadd.f32 %v238, %v2333
  %v2335 = vpop.f32.mrb[0].mxu0
  %v2336 = vpop.f32.mrb[0].mxu0
  %v2337 = vadd.f32 %v238, %v2336
  %v2338 = vpop.f32.mrb[0].mxu0
  %2339 = vmatprep.mubr.bf16.mxu0 %v1203
  %2340 = vmatmul.mubr.bf16.gmra.mrb[0].mxu0 %v716
  %v2341 = vpop.f32.mrb[0].mxu0
  %v2342 = vadd.f32 %v238, %v2341
  %v2343 = vpop.f32.mrb[0].mxu0
  %v2344 = vpop.f32.mrb[0].mxu0
  %v2345 = vadd.f32 %v238, %v2344
  %v2346 = vpop.f32.mrb[0].mxu0
  %2347 = vmatprep.mubr.bf16.mxu0 %v1206
  %2348 = vmatmul.mubr.bf16.gmra.mrb[0].mxu0 %v718
  %v2349 = vpop.f32.mrb[0].mxu0
  %v2350 = vadd.f32 %v238, %v2349
  %v2351 = vpop.f32.mrb[0].mxu0
  %v2352 = vpop.f32.mrb[0].mxu0
  %v2353 = vadd.f32 %v238, %v2352
  %v2354 = vpop.f32.mrb[0].mxu0
  %2355 = vmatprep.mubr.bf16.mxu0 %v1209
  %2356 = vmatmul.mubr.bf16.gmra.mrb[0].mxu0 %v720
  %v2357 = vpop.f32.mrb[0].mxu0
  %v2358 = vadd.f32 %v238, %v2357
  %v2359 = vpop.f32.mrb[0].mxu0
  %v2360 = vpop.f32.mrb[0].mxu0
  %v2361 = vadd.f32 %v238, %v2360
  %v2362 = vpop.f32.mrb[0].mxu0
  %2363 = vmatprep.mubr.bf16.mxu0 %v1212
  %2364 = vmatmul.mubr.bf16.gmra.mrb[0].mxu0 %v722
  %v2365 = vpop.f32.mrb[0].mxu0
  %v2366 = vadd.f32 %v238, %v2365
  %v2367 = vpop.f32.mrb[0].mxu0
  %v2368 = vpop.f32.mrb[0].mxu0
  %v2369 = vadd.f32 %v238, %v2368
  %v2370 = vpop.f32.mrb[0].mxu0
  %2371 = vmatprep.mubr.bf16.mxu0 %v1215
  %2372 = vmatmul.mubr.bf16.gmra.mrb[0].mxu0 %v724
  %v2373 = vpop.f32.mrb[0].mxu0
  %v2374 = vadd.f32 %v238, %v2373
  %v2375 = vpop.f32.mrb[0].mxu0
  %v2376 = vpop.f32.mrb[0].mxu0
  %v2377 = vadd.f32 %v238, %v2376
  %v2378 = vpop.f32.mrb[0].mxu0
  %2379 = vmatprep.mubr.bf16.mxu0 %v1218
  %2380 = vmatmul.mubr.bf16.gmra.mrb[0].mxu0 %v726
  %v2381 = vpop.f32.mrb[0].mxu0
  %v2382 = vadd.f32 %v238, %v2381
  %v2383 = vpop.f32.mrb[0].mxu0
  %v2384 = vpop.f32.mrb[0].mxu0
  %v2385 = vadd.f32 %v238, %v2384
  %v2386 = vpop.f32.mrb[0].mxu0
  %2387 = vmatprep.mubr.bf16.mxu0 %v1221
  %2388 = vmatmul.mubr.bf16.gmra.mrb[0].mxu0 %v728
  %v2389 = vpop.f32.mrb[0].mxu0
  %v2390 = vadd.f32 %v238, %v2389
  %v2391 = vpop.f32.mrb[0].mxu0
  %v2392 = vpop.f32.mrb[0].mxu0
  %v2393 = vadd.f32 %v238, %v2392
  %v2394 = vpop.f32.mrb[0].mxu0
  %2395 = vmatprep.mubr.bf16.mxu0 %v1224
  %2396 = vmatmul.mubr.bf16.gmra.mrb[0].mxu0 %v730
  %v2397 = vpop.f32.mrb[0].mxu0
  %v2398 = vadd.f32 %v238, %v2397
  %v2399 = vpop.f32.mrb[0].mxu0
  %v2400 = vpop.f32.mrb[0].mxu0
  %v2401 = vadd.f32 %v238, %v2400
  %v2402 = vpop.f32.mrb[0].mxu0
  %2403 = vmatprep.mubr.bf16.mxu0 %v1227
  %2404 = vmatmul.mubr.bf16.gmra.mrb[0].mxu0 %v732
  %v2405 = vpop.f32.mrb[0].mxu0
  %v2406 = vadd.f32 %v238, %v2405
  %v2407 = vpop.f32.mrb[0].mxu0
  %v2408 = vpop.f32.mrb[0].mxu0
  %v2409 = vadd.f32 %v238, %v2408
  %v2410 = vpop.f32.mrb[0].mxu0
  %2411 = vmatprep.mubr.bf16.mxu0 %v1230
  %2412 = vmatmul.mubr.bf16.gmra.mrb[0].mxu0 %v734
  %v2413 = vpop.f32.mrb[0].mxu0
  %v2414 = vadd.f32 %v238, %v2413
  %v2415 = vpop.f32.mrb[0].mxu0
  %v2416 = vpop.f32.mrb[0].mxu0
  %v2417 = vadd.f32 %v238, %v2416
  %v2418 = vpop.f32.mrb[0].mxu0
  %2419 = vmatprep.mubr.bf16.mxu0 %v1233
  %2420 = vmatmul.mubr.bf16.gmra.mrb[0].mxu0 %v736
  %v2421 = vpop.f32.mrb[0].mxu0
  %v2422 = vadd.f32 %v238, %v2421
  %v2423 = vpop.f32.mrb[0].mxu0
  %v2424 = vpop.f32.mrb[0].mxu0
  %v2425 = vadd.f32 %v238, %v2424
  %v2426 = vpop.f32.mrb[0].mxu0
  %2427 = vmatprep.mubr.bf16.mxu0 %v1236
  %2428 = vmatmul.mubr.bf16.gmra.mrb[0].mxu0 %v738
  %v2429 = vpop.f32.mrb[0].mxu0
  %v2430 = vadd.f32 %v238, %v2429
  %v2431 = vpop.f32.mrb[0].mxu0
  %v2432 = vpop.f32.mrb[0].mxu0
  %v2433 = vadd.f32 %v238, %v2432
  %v2434 = vpop.f32.mrb[0].mxu0
  %2435 = vmatprep.mubr.bf16.mxu0 %v1239
  %2436 = vmatmul.mubr.bf16.gmra.mrb[0].mxu0 %v740
  %v2437 = vpop.f32.mrb[0].mxu0
  %v2438 = vadd.f32 %v238, %v2437
  %v2439 = vpop.f32.mrb[0].mxu0
  %v2440 = vpop.f32.mrb[0].mxu0
  %v2441 = vadd.f32 %v238, %v2440
  %v2442 = vpop.f32.mrb[0].mxu0
  %2443 = vmatprep.mubr.bf16.mxu0 %v1242
  %2444 = vmatmul.mubr.bf16.gmra.mrb[0].mxu0 %v742
  %v2445 = vpop.f32.mrb[0].mxu0
  %v2446 = vadd.f32 %v238, %v2445
  %v2447 = vpop.f32.mrb[0].mxu0
  %v2448 = vpop.f32.mrb[0].mxu0
  %v2449 = vadd.f32 %v238, %v2448
  %v2450 = vpop.f32.mrb[0].mxu0
  %2451 = vmatprep.mubr.bf16.mxu0 %v1245
  %2452 = vmatmul.mubr.bf16.gmra.mrb[0].mxu0 %v744
  %v2453 = vpop.f32.mrb[0].mxu0
  %v2454 = vadd.f32 %v238, %v2453
  %v2455 = vpop.f32.mrb[0].mxu0
  %v2456 = vpop.f32.mrb[0].mxu0
  %v2457 = vadd.f32 %v238, %v2456
  %v2458 = vpop.f32.mrb[0].mxu0
  %2459 = vdwg.mxu0
  %vm2460 = vcmp.gt.f32.partialorder %v1295, 0.0
  %vm2461 = vcmp.gt.f32.partialorder %v1297, 0.0
  %vm2462 = vcmp.gt.f32.partialorder %v1958, 0.0
  %vm2463 = vcmp.gt.f32.partialorder %v1299, 0.0
  %vm2464 = vcmp.gt.f32.partialorder %v1301, 0.0
  %vm2465 = vcmp.gt.f32.partialorder %v1961, 0.0
  %vm2466 = vcmp.gt.f32.partialorder %v1305, 0.0
  %vm2467 = vcmp.gt.f32.partialorder %v1307, 0.0
  %vm2468 = vcmp.gt.f32.partialorder %v1966, 0.0
  %vm2469 = vcmp.gt.f32.partialorder %v1309, 0.0
  %vm2470 = vcmp.gt.f32.partialorder %v1311, 0.0
  %vm2471 = vcmp.gt.f32.partialorder %v1969, 0.0
  %vm2472 = vcmp.gt.f32.partialorder %v1315, 0.0
  %vm2473 = vcmp.gt.f32.partialorder %v1317, 0.0
  %vm2474 = vcmp.gt.f32.partialorder %v1974, 0.0
  %vm2475 = vcmp.gt.f32.partialorder %v1319, 0.0
  %vm2476 = vcmp.gt.f32.partialorder %v1321, 0.0
  %vm2477 = vcmp.gt.f32.partialorder %v1977, 0.0
  %vm2478 = vcmp.gt.f32.partialorder %v1325, 0.0
  %vm2479 = vcmp.gt.f32.partialorder %v1327, 0.0
  %vm2480 = vcmp.gt.f32.partialorder %v1982, 0.0
  %vm2481 = vcmp.gt.f32.partialorder %v1329, 0.0
  %vm2482 = vcmp.gt.f32.partialorder %v1331, 0.0
  %vm2483 = vcmp.gt.f32.partialorder %v1985, 0.0
  %vm2484 = vcmp.gt.f32.partialorder %v1335, 0.0
  %vm2485 = vcmp.gt.f32.partialorder %v1337, 0.0
  %vm2486 = vcmp.gt.f32.partialorder %v1990, 0.0
  %vm2487 = vcmp.gt.f32.partialorder %v1339, 0.0
  %vm2488 = vcmp.gt.f32.partialorder %v1341, 0.0
  %vm2489 = vcmp.gt.f32.partialorder %v1993, 0.0
  %vm2490 = vcmp.gt.f32.partialorder %v1345, 0.0
  %vm2491 = vcmp.gt.f32.partialorder %v1347, 0.0
  %vm2492 = vcmp.gt.f32.partialorder %v1998, 0.0
  %vm2493 = vcmp.gt.f32.partialorder %v1349, 0.0
  %vm2494 = vcmp.gt.f32.partialorder %v1351, 0.0
  %vm2495 = vcmp.gt.f32.partialorder %v2001, 0.0
  %vm2496 = vcmp.gt.f32.partialorder %v1355, 0.0
  %vm2497 = vcmp.gt.f32.partialorder %v1357, 0.0
  %vm2498 = vcmp.gt.f32.partialorder %v2006, 0.0
  %vm2499 = vcmp.gt.f32.partialorder %v1359, 0.0
  %vm2500 = vcmp.gt.f32.partialorder %v1361, 0.0
  %vm2501 = vcmp.gt.f32.partialorder %v2009, 0.0
  %vm2502 = vcmp.gt.f32.partialorder %v1365, 0.0
  %vm2503 = vcmp.gt.f32.partialorder %v1367, 0.0
  %vm2504 = vcmp.gt.f32.partialorder %v2014, 0.0
  %vm2505 = vcmp.gt.f32.partialorder %v1369, 0.0
  %vm2506 = vcmp.gt.f32.partialorder %v1371, 0.0
  %vm2507 = vcmp.gt.f32.partialorder %v2017, 0.0
  %vm2508 = vcmp.gt.f32.partialorder %v1375, 0.0
  %vm2509 = vcmp.gt.f32.partialorder %v1377, 0.0
  %vm2510 = vcmp.gt.f32.partialorder %v2022, 0.0
  %vm2511 = vcmp.gt.f32.partialorder %v1379, 0.0
  %vm2512 = vcmp.gt.f32.partialorder %v1381, 0.0
  %vm2513 = vcmp.gt.f32.partialorder %v2025, 0.0
  %vm2514 = vcmp.gt.f32.partialorder %v1385, 0.0
  %vm2515 = vcmp.gt.f32.partialorder %v1387, 0.0
  %vm2516 = vcmp.gt.f32.partialorder %v2030, 0.0
  %vm2517 = vcmp.gt.f32.partialorder %v1389, 0.0
  %vm2518 = vcmp.gt.f32.partialorder %v1391, 0.0
  %vm2519 = vcmp.gt.f32.partialorder %v2033, 0.0
  %vm2520 = vcmp.gt.f32.partialorder %v1395, 0.0
  %vm2521 = vcmp.gt.f32.partialorder %v1397, 0.0
  %vm2522 = vcmp.gt.f32.partialorder %v2038, 0.0
  %vm2523 = vcmp.gt.f32.partialorder %v1399, 0.0
  %vm2524 = vcmp.gt.f32.partialorder %v1401, 0.0
  %vm2525 = vcmp.gt.f32.partialorder %v2041, 0.0
  %vm2526 = vcmp.gt.f32.partialorder %v1405, 0.0
  %vm2527 = vcmp.gt.f32.partialorder %v1407, 0.0
  %vm2528 = vcmp.gt.f32.partialorder %v2046, 0.0
  %vm2529 = vcmp.gt.f32.partialorder %v1409, 0.0
  %vm2530 = vcmp.gt.f32.partialorder %v1411, 0.0
  %vm2531 = vcmp.gt.f32.partialorder %v2049, 0.0
  %vm2532 = vcmp.gt.f32.partialorder %v1415, 0.0
  %vm2533 = vcmp.gt.f32.partialorder %v1417, 0.0
  %vm2534 = vcmp.gt.f32.partialorder %v2054, 0.0
  %vm2535 = vcmp.gt.f32.partialorder %v1419, 0.0
  %vm2536 = vcmp.gt.f32.partialorder %v1421, 0.0
  %vm2537 = vcmp.gt.f32.partialorder %v2057, 0.0
  %vm2538 = vcmp.gt.f32.partialorder %v1425, 0.0
  %vm2539 = vcmp.gt.f32.partialorder %v1427, 0.0
  %vm2540 = vcmp.gt.f32.partialorder %v2062, 0.0
  %vm2541 = vcmp.gt.f32.partialorder %v1429, 0.0
  %vm2542 = vcmp.gt.f32.partialorder %v1431, 0.0
  %vm2543 = vcmp.gt.f32.partialorder %v2065, 0.0
  %vm2544 = vcmp.gt.f32.partialorder %v1435, 0.0
  %vm2545 = vcmp.gt.f32.partialorder %v1437, 0.0
  %vm2546 = vcmp.gt.f32.partialorder %v2070, 0.0
  %vm2547 = vcmp.gt.f32.partialorder %v1439, 0.0
  %vm2548 = vcmp.gt.f32.partialorder %v1441, 0.0
  %vm2549 = vcmp.gt.f32.partialorder %v2073, 0.0
  %vm2550 = vcmp.gt.f32.partialorder %v1445, 0.0
  %vm2551 = vcmp.gt.f32.partialorder %v1447, 0.0
  %vm2552 = vcmp.gt.f32.partialorder %v2078, 0.0
  %vm2553 = vcmp.gt.f32.partialorder %v1449, 0.0
  %vm2554 = vcmp.gt.f32.partialorder %v1451, 0.0
  %vm2555 = vcmp.gt.f32.partialorder %v2081, 0.0
  %vm2556 = vcmp.gt.f32.partialorder %v1455, 0.0
  %vm2557 = vcmp.gt.f32.partialorder %v1457, 0.0
  %vm2558 = vcmp.gt.f32.partialorder %v2086, 0.0
  %vm2559 = vcmp.gt.f32.partialorder %v1459, 0.0
  %vm2560 = vcmp.gt.f32.partialorder %v1461, 0.0
  %vm2561 = vcmp.gt.f32.partialorder %v2089, 0.0
  %vm2562 = vcmp.gt.f32.partialorder %v1465, 0.0
  %vm2563 = vcmp.gt.f32.partialorder %v1467, 0.0
  %vm2564 = vcmp.gt.f32.partialorder %v2094, 0.0
  %vm2565 = vcmp.gt.f32.partialorder %v1469, 0.0
  %vm2566 = vcmp.gt.f32.partialorder %v1471, 0.0
  %vm2567 = vcmp.gt.f32.partialorder %v2097, 0.0
  %vm2568 = vcmp.gt.f32.partialorder %v1475, 0.0
  %vm2569 = vcmp.gt.f32.partialorder %v1477, 0.0
  %vm2570 = vcmp.gt.f32.partialorder %v2102, 0.0
  %vm2571 = vcmp.gt.f32.partialorder %v1479, 0.0
  %vm2572 = vcmp.gt.f32.partialorder %v1481, 0.0
  %vm2573 = vcmp.gt.f32.partialorder %v2105, 0.0
  %vm2574 = vcmp.gt.f32.partialorder %v1485, 0.0
  %vm2575 = vcmp.gt.f32.partialorder %v1487, 0.0
  %vm2576 = vcmp.gt.f32.partialorder %v2110, 0.0
  %vm2577 = vcmp.gt.f32.partialorder %v1489, 0.0
  %vm2578 = vcmp.gt.f32.partialorder %v1491, 0.0
  %vm2579 = vcmp.gt.f32.partialorder %v2113, 0.0
  %vm2580 = vcmp.gt.f32.partialorder %v1495, 0.0
  %vm2581 = vcmp.gt.f32.partialorder %v1497, 0.0
  %vm2582 = vcmp.gt.f32.partialorder %v2118, 0.0
  %vm2583 = vcmp.gt.f32.partialorder %v1499, 0.0
  %vm2584 = vcmp.gt.f32.partialorder %v1501, 0.0
  %vm2585 = vcmp.gt.f32.partialorder %v2121, 0.0
  %vm2586 = vcmp.gt.f32.partialorder %v1505, 0.0
  %vm2587 = vcmp.gt.f32.partialorder %v1507, 0.0
  %vm2588 = vcmp.gt.f32.partialorder %v2126, 0.0
  %vm2589 = vcmp.gt.f32.partialorder %v1509, 0.0
  %vm2590 = vcmp.gt.f32.partialorder %v1511, 0.0
  %vm2591 = vcmp.gt.f32.partialorder %v2129, 0.0
  %vm2592 = vcmp.gt.f32.partialorder %v1515, 0.0
  %vm2593 = vcmp.gt.f32.partialorder %v1517, 0.0
  %vm2594 = vcmp.gt.f32.partialorder %v2134, 0.0
  %vm2595 = vcmp.gt.f32.partialorder %v1519, 0.0
  %vm2596 = vcmp.gt.f32.partialorder %v1521, 0.0
  %vm2597 = vcmp.gt.f32.partialorder %v2137, 0.0
  %vm2598 = vcmp.gt.f32.partialorder %v1525, 0.0
  %vm2599 = vcmp.gt.f32.partialorder %v1527, 0.0
  %vm2600 = vcmp.gt.f32.partialorder %v2142, 0.0
  %vm2601 = vcmp.gt.f32.partialorder %v1529, 0.0
  %vm2602 = vcmp.gt.f32.partialorder %v1531, 0.0
  %vm2603 = vcmp.gt.f32.partialorder %v2145, 0.0
  %vm2604 = vcmp.gt.f32.partialorder %v1535, 0.0
  %vm2605 = vcmp.gt.f32.partialorder %v1537, 0.0
  %vm2606 = vcmp.gt.f32.partialorder %v2150, 0.0
  %vm2607 = vcmp.gt.f32.partialorder %v1539, 0.0
  %vm2608 = vcmp.gt.f32.partialorder %v1541, 0.0
  %vm2609 = vcmp.gt.f32.partialorder %v2153, 0.0
  %vm2610 = vcmp.gt.f32.partialorder %v1545, 0.0
  %vm2611 = vcmp.gt.f32.partialorder %v1547, 0.0
  %vm2612 = vcmp.gt.f32.partialorder %v2158, 0.0
  %vm2613 = vcmp.gt.f32.partialorder %v1549, 0.0
  %vm2614 = vcmp.gt.f32.partialorder %v1551, 0.0
  %vm2615 = vcmp.gt.f32.partialorder %v2161, 0.0
  %vm2616 = vcmp.gt.f32.partialorder %v1555, 0.0
  %vm2617 = vcmp.gt.f32.partialorder %v1557, 0.0
  %vm2618 = vcmp.gt.f32.partialorder %v2166, 0.0
  %vm2619 = vcmp.gt.f32.partialorder %v1559, 0.0
  %vm2620 = vcmp.gt.f32.partialorder %v1561, 0.0
  %vm2621 = vcmp.gt.f32.partialorder %v2169, 0.0
  %vm2622 = vcmp.gt.f32.partialorder %v1565, 0.0
  %vm2623 = vcmp.gt.f32.partialorder %v1567, 0.0
  %vm2624 = vcmp.gt.f32.partialorder %v2174, 0.0
  %vm2625 = vcmp.gt.f32.partialorder %v1569, 0.0
  %vm2626 = vcmp.gt.f32.partialorder %v1571, 0.0
  %vm2627 = vcmp.gt.f32.partialorder %v2177, 0.0
  %vm2628 = vcmp.gt.f32.partialorder %v1575, 0.0
  %vm2629 = vcmp.gt.f32.partialorder %v1577, 0.0
  %vm2630 = vcmp.gt.f32.partialorder %v2182, 0.0
  %vm2631 = vcmp.gt.f32.partialorder %v1579, 0.0
  %vm2632 = vcmp.gt.f32.partialorder %v1581, 0.0
  %vm2633 = vcmp.gt.f32.partialorder %v2185, 0.0
  %vm2634 = vcmp.gt.f32.partialorder %v1585, 0.0
  %vm2635 = vcmp.gt.f32.partialorder %v1587, 0.0
  %vm2636 = vcmp.gt.f32.partialorder %v2190, 0.0
  %vm2637 = vcmp.gt.f32.partialorder %v1589, 0.0
  %vm2638 = vcmp.gt.f32.partialorder %v1591, 0.0
  %vm2639 = vcmp.gt.f32.partialorder %v2193, 0.0
  %vm2640 = vcmp.gt.f32.partialorder %v1595, 0.0
  %vm2641 = vcmp.gt.f32.partialorder %v1597, 0.0
  %vm2642 = vcmp.gt.f32.partialorder %v2198, 0.0
  %vm2643 = vcmp.gt.f32.partialorder %v1599, 0.0
  %vm2644 = vcmp.gt.f32.partialorder %v1601, 0.0
  %vm2645 = vcmp.gt.f32.partialorder %v2201, 0.0
  %vm2646 = vcmp.gt.f32.partialorder %v1605, 0.0
  %vm2647 = vcmp.gt.f32.partialorder %v1607, 0.0
  %vm2648 = vcmp.gt.f32.partialorder %v2206, 0.0
  %vm2649 = vcmp.gt.f32.partialorder %v1609, 0.0
  %vm2650 = vcmp.gt.f32.partialorder %v1611, 0.0
  %vm2651 = vcmp.gt.f32.partialorder %v2209, 0.0
  %vm2652 = vcmp.gt.f32.partialorder %v1615, 0.0
  %vm2653 = vcmp.gt.f32.partialorder %v1617, 0.0
  %vm2654 = vcmp.gt.f32.partialorder %v2214, 0.0
  %vm2655 = vcmp.gt.f32.partialorder %v1619, 0.0
  %vm2656 = vcmp.gt.f32.partialorder %v1621, 0.0
  %vm2657 = vcmp.gt.f32.partialorder %v2217, 0.0
  %vm2658 = vcmp.gt.f32.partialorder %v1625, 0.0
  %vm2659 = vcmp.gt.f32.partialorder %v1627, 0.0
  %vm2660 = vcmp.gt.f32.partialorder %v2222, 0.0
  %vm2661 = vcmp.gt.f32.partialorder %v1629, 0.0
  %vm2662 = vcmp.gt.f32.partialorder %v1631, 0.0
  %vm2663 = vcmp.gt.f32.partialorder %v2225, 0.0
  %vm2664 = vcmp.gt.f32.partialorder %v1635, 0.0
  %vm2665 = vcmp.gt.f32.partialorder %v1637, 0.0
  %vm2666 = vcmp.gt.f32.partialorder %v2230, 0.0
  %vm2667 = vcmp.gt.f32.partialorder %v1639, 0.0
  %vm2668 = vcmp.gt.f32.partialorder %v1641, 0.0
  %vm2669 = vcmp.gt.f32.partialorder %v2233, 0.0
  %vm2670 = vcmp.gt.f32.partialorder %v1645, 0.0
  %vm2671 = vcmp.gt.f32.partialorder %v1647, 0.0
  %vm2672 = vcmp.gt.f32.partialorder %v2238, 0.0
  %vm2673 = vcmp.gt.f32.partialorder %v1649, 0.0
  %vm2674 = vcmp.gt.f32.partialorder %v1651, 0.0
  %vm2675 = vcmp.gt.f32.partialorder %v2241, 0.0
  %vm2676 = vcmp.gt.f32.partialorder %v1655, 0.0
  %vm2677 = vcmp.gt.f32.partialorder %v1657, 0.0
  %vm2678 = vcmp.gt.f32.partialorder %v2246, 0.0
  %vm2679 = vcmp.gt.f32.partialorder %v1659, 0.0
  %vm2680 = vcmp.gt.f32.partialorder %v1661, 0.0
  %vm2681 = vcmp.gt.f32.partialorder %v2249, 0.0
  %vm2682 = vcmp.gt.f32.partialorder %v1665, 0.0
  %vm2683 = vcmp.gt.f32.partialorder %v1667, 0.0
  %vm2684 = vcmp.gt.f32.partialorder %v2254, 0.0
  %vm2685 = vcmp.gt.f32.partialorder %v1669, 0.0
  %vm2686 = vcmp.gt.f32.partialorder %v1671, 0.0
  %vm2687 = vcmp.gt.f32.partialorder %v2257, 0.0
  %vm2688 = vcmp.gt.f32.partialorder %v1675, 0.0
  %vm2689 = vcmp.gt.f32.partialorder %v1677, 0.0
  %vm2690 = vcmp.gt.f32.partialorder %v2262, 0.0
  %vm2691 = vcmp.gt.f32.partialorder %v1679, 0.0
  %vm2692 = vcmp.gt.f32.partialorder %v1681, 0.0
  %vm2693 = vcmp.gt.f32.partialorder %v2265, 0.0
  %vm2694 = vcmp.gt.f32.partialorder %v1685, 0.0
  %vm2695 = vcmp.gt.f32.partialorder %v1687, 0.0
  %vm2696 = vcmp.gt.f32.partialorder %v2270, 0.0
  %vm2697 = vcmp.gt.f32.partialorder %v1689, 0.0
  %vm2698 = vcmp.gt.f32.partialorder %v1691, 0.0
  %vm2699 = vcmp.gt.f32.partialorder %v2273, 0.0
  %vm2700 = vcmp.gt.f32.partialorder %v1695, 0.0
  %vm2701 = vcmp.gt.f32.partialorder %v1697, 0.0
  %vm2702 = vcmp.gt.f32.partialorder %v2278, 0.0
  %vm2703 = vcmp.gt.f32.partialorder %v1699, 0.0
  %vm2704 = vcmp.gt.f32.partialorder %v1701, 0.0
  %vm2705 = vcmp.gt.f32.partialorder %v2281, 0.0
  %vm2706 = vcmp.gt.f32.partialorder %v1705, 0.0
  %vm2707 = vcmp.gt.f32.partialorder %v1707, 0.0
  %vm2708 = vcmp.gt.f32.partialorder %v2286, 0.0
  %vm2709 = vcmp.gt.f32.partialorder %v1709, 0.0
  %vm2710 = vcmp.gt.f32.partialorder %v1711, 0.0
  %vm2711 = vcmp.gt.f32.partialorder %v2289, 0.0
  %vm2712 = vcmp.gt.f32.partialorder %v1715, 0.0
  %vm2713 = vcmp.gt.f32.partialorder %v1717, 0.0
  %vm2714 = vcmp.gt.f32.partialorder %v2294, 0.0
  %vm2715 = vcmp.gt.f32.partialorder %v1719, 0.0
  %vm2716 = vcmp.gt.f32.partialorder %v1721, 0.0
  %vm2717 = vcmp.gt.f32.partialorder %v2297, 0.0
  %vm2718 = vcmp.gt.f32.partialorder %v1725, 0.0
  %vm2719 = vcmp.gt.f32.partialorder %v1727, 0.0
  %vm2720 = vcmp.gt.f32.partialorder %v2302, 0.0
  %vm2721 = vcmp.gt.f32.partialorder %v1729, 0.0
  %vm2722 = vcmp.gt.f32.partialorder %v1731, 0.0
  %vm2723 = vcmp.gt.f32.partialorder %v2305, 0.0
  %vm2724 = vcmp.gt.f32.partialorder %v1735, 0.0
  %vm2725 = vcmp.gt.f32.partialorder %v1737, 0.0
  %vm2726 = vcmp.gt.f32.partialorder %v2310, 0.0
  %vm2727 = vcmp.gt.f32.partialorder %v1739, 0.0
  %vm2728 = vcmp.gt.f32.partialorder %v1741, 0.0
  %vm2729 = vcmp.gt.f32.partialorder %v2313, 0.0
  %vm2730 = vcmp.gt.f32.partialorder %v1745, 0.0
  %vm2731 = vcmp.gt.f32.partialorder %v1747, 0.0
  %vm2732 = vcmp.gt.f32.partialorder %v2318, 0.0
  %vm2733 = vcmp.gt.f32.partialorder %v1749, 0.0
  %vm2734 = vcmp.gt.f32.partialorder %v1751, 0.0
  %vm2735 = vcmp.gt.f32.partialorder %v2321, 0.0
  %vm2736 = vcmp.gt.f32.partialorder %v1755, 0.0
  %vm2737 = vcmp.gt.f32.partialorder %v1757, 0.0
  %vm2738 = vcmp.gt.f32.partialorder %v2326, 0.0
  %vm2739 = vcmp.gt.f32.partialorder %v1759, 0.0
  %vm2740 = vcmp.gt.f32.partialorder %v1761, 0.0
  %vm2741 = vcmp.gt.f32.partialorder %v2329, 0.0
  %vm2742 = vcmp.gt.f32.partialorder %v1765, 0.0
  %vm2743 = vcmp.gt.f32.partialorder %v1767, 0.0
  %vm2744 = vcmp.gt.f32.partialorder %v2334, 0.0
  %vm2745 = vcmp.gt.f32.partialorder %v1769, 0.0
  %vm2746 = vcmp.gt.f32.partialorder %v1771, 0.0
  %vm2747 = vcmp.gt.f32.partialorder %v2337, 0.0
  %vm2748 = vcmp.gt.f32.partialorder %v1775, 0.0
  %vm2749 = vcmp.gt.f32.partialorder %v1777, 0.0
  %vm2750 = vcmp.gt.f32.partialorder %v2342, 0.0
  %vm2751 = vcmp.gt.f32.partialorder %v1779, 0.0
  %vm2752 = vcmp.gt.f32.partialorder %v1781, 0.0
  %vm2753 = vcmp.gt.f32.partialorder %v2345, 0.0
  %vm2754 = vcmp.gt.f32.partialorder %v1785, 0.0
  %vm2755 = vcmp.gt.f32.partialorder %v1787, 0.0
  %vm2756 = vcmp.gt.f32.partialorder %v2350, 0.0
  %vm2757 = vcmp.gt.f32.partialorder %v1789, 0.0
  %vm2758 = vcmp.gt.f32.partialorder %v1791, 0.0
  %vm2759 = vcmp.gt.f32.partialorder %v2353, 0.0
  %vm2760 = vcmp.gt.f32.partialorder %v1795, 0.0
  %vm2761 = vcmp.gt.f32.partialorder %v1797, 0.0
  %vm2762 = vcmp.gt.f32.partialorder %v2358, 0.0
  %vm2763 = vcmp.gt.f32.partialorder %v1799, 0.0
  %vm2764 = vcmp.gt.f32.partialorder %v1801, 0.0
  %vm2765 = vcmp.gt.f32.partialorder %v2361, 0.0
  %vm2766 = vcmp.gt.f32.partialorder %v1805, 0.0
  %vm2767 = vcmp.gt.f32.partialorder %v1807, 0.0
  %vm2768 = vcmp.gt.f32.partialorder %v2366, 0.0
  %vm2769 = vcmp.gt.f32.partialorder %v1809, 0.0
  %vm2770 = vcmp.gt.f32.partialorder %v1811, 0.0
  %vm2771 = vcmp.gt.f32.partialorder %v2369, 0.0
  %vm2772 = vcmp.gt.f32.partialorder %v1815, 0.0
  %vm2773 = vcmp.gt.f32.partialorder %v1817, 0.0
  %vm2774 = vcmp.gt.f32.partialorder %v2374, 0.0
  %vm2775 = vcmp.gt.f32.partialorder %v1819, 0.0
  %vm2776 = vcmp.gt.f32.partialorder %v1821, 0.0
  %vm2777 = vcmp.gt.f32.partialorder %v2377, 0.0
  %vm2778 = vcmp.gt.f32.partialorder %v1825, 0.0
  %vm2779 = vcmp.gt.f32.partialorder %v1827, 0.0
  %vm2780 = vcmp.gt.f32.partialorder %v2382, 0.0
  %vm2781 = vcmp.gt.f32.partialorder %v1829, 0.0
  %vm2782 = vcmp.gt.f32.partialorder %v1831, 0.0
  %vm2783 = vcmp.gt.f32.partialorder %v2385, 0.0
  %vm2784 = vcmp.gt.f32.partialorder %v1835, 0.0
  %vm2785 = vcmp.gt.f32.partialorder %v1837, 0.0
  %vm2786 = vcmp.gt.f32.partialorder %v2390, 0.0
  %vm2787 = vcmp.gt.f32.partialorder %v1839, 0.0
  %vm2788 = vcmp.gt.f32.partialorder %v1841, 0.0
  %vm2789 = vcmp.gt.f32.partialorder %v2393, 0.0
  %vm2790 = vcmp.gt.f32.partialorder %v1845, 0.0
  %vm2791 = vcmp.gt.f32.partialorder %v1847, 0.0
  %vm2792 = vcmp.gt.f32.partialorder %v2398, 0.0
  %vm2793 = vcmp.gt.f32.partialorder %v1849, 0.0
  %vm2794 = vcmp.gt.f32.partialorder %v1851, 0.0
  %vm2795 = vcmp.gt.f32.partialorder %v2401, 0.0
  %vm2796 = vcmp.gt.f32.partialorder %v1855, 0.0
  %vm2797 = vcmp.gt.f32.partialorder %v1857, 0.0
  %vm2798 = vcmp.gt.f32.partialorder %v2406, 0.0
  %vm2799 = vcmp.gt.f32.partialorder %v1859, 0.0
  %vm2800 = vcmp.gt.f32.partialorder %v1861, 0.0
  %vm2801 = vcmp.gt.f32.partialorder %v2409, 0.0
  %vm2802 = vcmp.gt.f32.partialorder %v1865, 0.0
  %vm2803 = vcmp.gt.f32.partialorder %v1867, 0.0
  %vm2804 = vcmp.gt.f32.partialorder %v2414, 0.0
  %vm2805 = vcmp.gt.f32.partialorder %v1869, 0.0
  %vm2806 = vcmp.gt.f32.partialorder %v1871, 0.0
  %vm2807 = vcmp.gt.f32.partialorder %v2417, 0.0
  %vm2808 = vcmp.gt.f32.partialorder %v1875, 0.0
  %vm2809 = vcmp.gt.f32.partialorder %v1877, 0.0
  %vm2810 = vcmp.gt.f32.partialorder %v2422, 0.0
  %vm2811 = vcmp.gt.f32.partialorder %v1879, 0.0
  %vm2812 = vcmp.gt.f32.partialorder %v1881, 0.0
  %vm2813 = vcmp.gt.f32.partialorder %v2425, 0.0
  %vm2814 = vcmp.gt.f32.partialorder %v1885, 0.0
  %vm2815 = vcmp.gt.f32.partialorder %v1887, 0.0
  %vm2816 = vcmp.gt.f32.partialorder %v2430, 0.0
  %vm2817 = vcmp.gt.f32.partialorder %v1889, 0.0
  %vm2818 = vcmp.gt.f32.partialorder %v1891, 0.0
  %vm2819 = vcmp.gt.f32.partialorder %v2433, 0.0
  %vm2820 = vcmp.gt.f32.partialorder %v1895, 0.0
  %vm2821 = vcmp.gt.f32.partialorder %v1897, 0.0
  %vm2822 = vcmp.gt.f32.partialorder %v2438, 0.0
  %vm2823 = vcmp.gt.f32.partialorder %v1899, 0.0
  %vm2824 = vcmp.gt.f32.partialorder %v1901, 0.0
  %vm2825 = vcmp.gt.f32.partialorder %v2441, 0.0
  %vm2826 = vcmp.gt.f32.partialorder %v1905, 0.0
  %vm2827 = vcmp.gt.f32.partialorder %v1907, 0.0
  %vm2828 = vcmp.gt.f32.partialorder %v2446, 0.0
  %vm2829 = vcmp.gt.f32.partialorder %v1909, 0.0
  %vm2830 = vcmp.gt.f32.partialorder %v1911, 0.0
  %vm2831 = vcmp.gt.f32.partialorder %v2449, 0.0
  %vm2832 = vcmp.gt.f32.partialorder %v1915, 0.0
  %vm2833 = vcmp.gt.f32.partialorder %v1917, 0.0
  %vm2834 = vcmp.gt.f32.partialorder %v2454, 0.0
  %vm2835 = vcmp.gt.f32.partialorder %v1919, 0.0
  %vm2836 = vcmp.gt.f32.partialorder %v1921, 0.0
  %vm2837 = vcmp.gt.f32.partialorder %v2457, 0.0
  %v2838 = vmul.f32 %v1295, 0.01
  %v2839 = vmul.f32 %v1297, 0.01
  %v2840 = vmul.f32 %v1958, 0.01
  %v2841 = vmul.f32 %v1299, 0.01
  %v2842 = vmul.f32 %v1301, 0.01
  %v2843 = vmul.f32 %v1961, 0.01
  %v2844 = vmul.f32 %v1305, 0.01
  %v2845 = vmul.f32 %v1307, 0.01
  %v2846 = vmul.f32 %v1966, 0.01
  %v2847 = vmul.f32 %v1309, 0.01
  %v2848 = vmul.f32 %v1311, 0.01
  %v2849 = vmul.f32 %v1969, 0.01
  %v2850 = vmul.f32 %v1315, 0.01
  %v2851 = vmul.f32 %v1317, 0.01
  %v2852 = vmul.f32 %v1974, 0.01
  %v2853 = vmul.f32 %v1319, 0.01
  %v2854 = vmul.f32 %v1321, 0.01
  %v2855 = vmul.f32 %v1977, 0.01
  %v2856 = vmul.f32 %v1325, 0.01
  %v2857 = vmul.f32 %v1327, 0.01
  %v2858 = vmul.f32 %v1982, 0.01
  %v2859 = vmul.f32 %v1329, 0.01
  %v2860 = vmul.f32 %v1331, 0.01
  %v2861 = vmul.f32 %v1985, 0.01
  %v2862 = vmul.f32 %v1335, 0.01
  %v2863 = vmul.f32 %v1337, 0.01
  %v2864 = vmul.f32 %v1990, 0.01
  %v2865 = vmul.f32 %v1339, 0.01
  %v2866 = vmul.f32 %v1341, 0.01
  %v2867 = vmul.f32 %v1993, 0.01
  %v2868 = vmul.f32 %v1345, 0.01
  %v2869 = vmul.f32 %v1347, 0.01
  %v2870 = vmul.f32 %v1998, 0.01
  %v2871 = vmul.f32 %v1349, 0.01
  %v2872 = vmul.f32 %v1351, 0.01
  %v2873 = vmul.f32 %v2001, 0.01
  %v2874 = vmul.f32 %v1355, 0.01
  %v2875 = vmul.f32 %v1357, 0.01
  %v2876 = vmul.f32 %v2006, 0.01
  %v2877 = vmul.f32 %v1359, 0.01
  %v2878 = vmul.f32 %v1361, 0.01
  %v2879 = vmul.f32 %v2009, 0.01
  %v2880 = vmul.f32 %v1365, 0.01
  %v2881 = vmul.f32 %v1367, 0.01
  %v2882 = vmul.f32 %v2014, 0.01
  %v2883 = vmul.f32 %v1369, 0.01
  %v2884 = vmul.f32 %v1371, 0.01
  %v2885 = vmul.f32 %v2017, 0.01
  %v2886 = vmul.f32 %v1375, 0.01
  %v2887 = vmul.f32 %v1377, 0.01
  %v2888 = vmul.f32 %v2022, 0.01
  %v2889 = vmul.f32 %v1379, 0.01
  %v2890 = vmul.f32 %v1381, 0.01
  %v2891 = vmul.f32 %v2025, 0.01
  %v2892 = vmul.f32 %v1385, 0.01
  %v2893 = vmul.f32 %v1387, 0.01
  %v2894 = vmul.f32 %v2030, 0.01
  %v2895 = vmul.f32 %v1389, 0.01
  %v2896 = vmul.f32 %v1391, 0.01
  %v2897 = vmul.f32 %v2033, 0.01
  %v2898 = vmul.f32 %v1395, 0.01
  %v2899 = vmul.f32 %v1397, 0.01
  %v2900 = vmul.f32 %v2038, 0.01
  %v2901 = vmul.f32 %v1399, 0.01
  %v2902 = vmul.f32 %v1401, 0.01
  %v2903 = vmul.f32 %v2041, 0.01
  %v2904 = vmul.f32 %v1405, 0.01
  %v2905 = vmul.f32 %v1407, 0.01
  %v2906 = vmul.f32 %v2046, 0.01
  %v2907 = vmul.f32 %v1409, 0.01
  %v2908 = vmul.f32 %v1411, 0.01
  %v2909 = vmul.f32 %v2049, 0.01
  %v2910 = vmul.f32 %v1415, 0.01
  %v2911 = vmul.f32 %v1417, 0.01
  %v2912 = vmul.f32 %v2054, 0.01
  %v2913 = vmul.f32 %v1419, 0.01
  %v2914 = vmul.f32 %v1421, 0.01
  %v2915 = vmul.f32 %v2057, 0.01
  %v2916 = vmul.f32 %v1425, 0.01
  %v2917 = vmul.f32 %v1427, 0.01
  %v2918 = vmul.f32 %v2062, 0.01
  %v2919 = vmul.f32 %v1429, 0.01
  %v2920 = vmul.f32 %v1431, 0.01
  %v2921 = vmul.f32 %v2065, 0.01
  %v2922 = vmul.f32 %v1435, 0.01
  %v2923 = vmul.f32 %v1437, 0.01
  %v2924 = vmul.f32 %v2070, 0.01
  %v2925 = vmul.f32 %v1439, 0.01
  %v2926 = vmul.f32 %v1441, 0.01
  %v2927 = vmul.f32 %v2073, 0.01
  %v2928 = vmul.f32 %v1445, 0.01
  %v2929 = vmul.f32 %v1447, 0.01
  %v2930 = vmul.f32 %v2078, 0.01
  %v2931 = vmul.f32 %v1449, 0.01
  %v2932 = vmul.f32 %v1451, 0.01
  %v2933 = vmul.f32 %v2081, 0.01
  %v2934 = vmul.f32 %v1455, 0.01
  %v2935 = vmul.f32 %v1457, 0.01
  %v2936 = vmul.f32 %v2086, 0.01
  %v2937 = vmul.f32 %v1459, 0.01
  %v2938 = vmul.f32 %v1461, 0.01
  %v2939 = vmul.f32 %v2089, 0.01
  %v2940 = vmul.f32 %v1465, 0.01
  %v2941 = vmul.f32 %v1467, 0.01
  %v2942 = vmul.f32 %v2094, 0.01
  %v2943 = vmul.f32 %v1469, 0.01
  %v2944 = vmul.f32 %v1471, 0.01
  %v2945 = vmul.f32 %v2097, 0.01
  %v2946 = vmul.f32 %v1475, 0.01
  %v2947 = vmul.f32 %v1477, 0.01
  %v2948 = vmul.f32 %v2102, 0.01
  %v2949 = vmul.f32 %v1479, 0.01
  %v2950 = vmul.f32 %v1481, 0.01
  %v2951 = vmul.f32 %v2105, 0.01
  %v2952 = vmul.f32 %v1485, 0.01
  %v2953 = vmul.f32 %v1487, 0.01
  %v2954 = vmul.f32 %v2110, 0.01
  %v2955 = vmul.f32 %v1489, 0.01
  %v2956 = vmul.f32 %v1491, 0.01
  %v2957 = vmul.f32 %v2113, 0.01
  %v2958 = vmul.f32 %v1495, 0.01
  %v2959 = vmul.f32 %v1497, 0.01
  %v2960 = vmul.f32 %v2118, 0.01
  %v2961 = vmul.f32 %v1499, 0.01
  %v2962 = vmul.f32 %v1501, 0.01
  %v2963 = vmul.f32 %v2121, 0.01
  %v2964 = vmul.f32 %v1505, 0.01
  %v2965 = vmul.f32 %v1507, 0.01
  %v2966 = vmul.f32 %v2126, 0.01
  %v2967 = vmul.f32 %v1509, 0.01
  %v2968 = vmul.f32 %v1511, 0.01
  %v2969 = vmul.f32 %v2129, 0.01
  %v2970 = vmul.f32 %v1515, 0.01
  %v2971 = vmul.f32 %v1517, 0.01
  %v2972 = vmul.f32 %v2134, 0.01
  %v2973 = vmul.f32 %v1519, 0.01
  %v2974 = vmul.f32 %v1521, 0.01
  %v2975 = vmul.f32 %v2137, 0.01
  %v2976 = vmul.f32 %v1525, 0.01
  %v2977 = vmul.f32 %v1527, 0.01
  %v2978 = vmul.f32 %v2142, 0.01
  %v2979 = vmul.f32 %v1529, 0.01
  %v2980 = vmul.f32 %v1531, 0.01
  %v2981 = vmul.f32 %v2145, 0.01
  %v2982 = vmul.f32 %v1535, 0.01
  %v2983 = vmul.f32 %v1537, 0.01
  %v2984 = vmul.f32 %v2150, 0.01
  %v2985 = vmul.f32 %v1539, 0.01
  %v2986 = vmul.f32 %v1541, 0.01
  %v2987 = vmul.f32 %v2153, 0.01
  %v2988 = vmul.f32 %v1545, 0.01
  %v2989 = vmul.f32 %v1547, 0.01
  %v2990 = vmul.f32 %v2158, 0.01
  %v2991 = vmul.f32 %v1549, 0.01
  %v2992 = vmul.f32 %v1551, 0.01
  %v2993 = vmul.f32 %v2161, 0.01
  %v2994 = vmul.f32 %v1555, 0.01
  %v2995 = vmul.f32 %v1557, 0.01
  %v2996 = vmul.f32 %v2166, 0.01
  %v2997 = vmul.f32 %v1559, 0.01
  %v2998 = vmul.f32 %v1561, 0.01
  %v2999 = vmul.f32 %v2169, 0.01
  %v3000 = vmul.f32 %v1565, 0.01
  %v3001 = vmul.f32 %v1567, 0.01
  %v3002 = vmul.f32 %v2174, 0.01
  %v3003 = vmul.f32 %v1569, 0.01
  %v3004 = vmul.f32 %v1571, 0.01
  %v3005 = vmul.f32 %v2177, 0.01
  %v3006 = vmul.f32 %v1575, 0.01
  %v3007 = vmul.f32 %v1577, 0.01
  %v3008 = vmul.f32 %v2182, 0.01
  %v3009 = vmul.f32 %v1579, 0.01
  %v3010 = vmul.f32 %v1581, 0.01
  %v3011 = vmul.f32 %v2185, 0.01
  %v3012 = vmul.f32 %v1585, 0.01
  %v3013 = vmul.f32 %v1587, 0.01
  %v3014 = vmul.f32 %v2190, 0.01
  %v3015 = vmul.f32 %v1589, 0.01
  %v3016 = vmul.f32 %v1591, 0.01
  %v3017 = vmul.f32 %v2193, 0.01
  %v3018 = vmul.f32 %v1595, 0.01
  %v3019 = vmul.f32 %v1597, 0.01
  %v3020 = vmul.f32 %v2198, 0.01
  %v3021 = vmul.f32 %v1599, 0.01
  %v3022 = vmul.f32 %v1601, 0.01
  %v3023 = vmul.f32 %v2201, 0.01
  %v3024 = vmul.f32 %v1605, 0.01
  %v3025 = vmul.f32 %v1607, 0.01
  %v3026 = vmul.f32 %v2206, 0.01
  %v3027 = vmul.f32 %v1609, 0.01
  %v3028 = vmul.f32 %v1611, 0.01
  %v3029 = vmul.f32 %v2209, 0.01
  %v3030 = vmul.f32 %v1615, 0.01
  %v3031 = vmul.f32 %v1617, 0.01
  %v3032 = vmul.f32 %v2214, 0.01
  %v3033 = vmul.f32 %v1619, 0.01
  %v3034 = vmul.f32 %v1621, 0.01
  %v3035 = vmul.f32 %v2217, 0.01
  %v3036 = vmul.f32 %v1625, 0.01
  %v3037 = vmul.f32 %v1627, 0.01
  %v3038 = vmul.f32 %v2222, 0.01
  %v3039 = vmul.f32 %v1629, 0.01
  %v3040 = vmul.f32 %v1631, 0.01
  %v3041 = vmul.f32 %v2225, 0.01
  %v3042 = vmul.f32 %v1635, 0.01
  %v3043 = vmul.f32 %v1637, 0.01
  %v3044 = vmul.f32 %v2230, 0.01
  %v3045 = vmul.f32 %v1639, 0.01
  %v3046 = vmul.f32 %v1641, 0.01
  %v3047 = vmul.f32 %v2233, 0.01
  %v3048 = vmul.f32 %v1645, 0.01
  %v3049 = vmul.f32 %v1647, 0.01
  %v3050 = vmul.f32 %v2238, 0.01
  %v3051 = vmul.f32 %v1649, 0.01
  %v3052 = vmul.f32 %v1651, 0.01
  %v3053 = vmul.f32 %v2241, 0.01
  %v3054 = vmul.f32 %v1655, 0.01
  %v3055 = vmul.f32 %v1657, 0.01
  %v3056 = vmul.f32 %v2246, 0.01
  %v3057 = vmul.f32 %v1659, 0.01
  %v3058 = vmul.f32 %v1661, 0.01
  %v3059 = vmul.f32 %v2249, 0.01
  %v3060 = vmul.f32 %v1665, 0.01
  %v3061 = vmul.f32 %v1667, 0.01
  %v3062 = vmul.f32 %v2254, 0.01
  %v3063 = vmul.f32 %v1669, 0.01
  %v3064 = vmul.f32 %v1671, 0.01
  %v3065 = vmul.f32 %v2257, 0.01
  %v3066 = vmul.f32 %v1675, 0.01
  %v3067 = vmul.f32 %v1677, 0.01
  %v3068 = vmul.f32 %v2262, 0.01
  %v3069 = vmul.f32 %v1679, 0.01
  %v3070 = vmul.f32 %v1681, 0.01
  %v3071 = vmul.f32 %v2265, 0.01
  %v3072 = vmul.f32 %v1685, 0.01
  %v3073 = vmul.f32 %v1687, 0.01
  %v3074 = vmul.f32 %v2270, 0.01
  %v3075 = vmul.f32 %v1689, 0.01
  %v3076 = vmul.f32 %v1691, 0.01
  %v3077 = vmul.f32 %v2273, 0.01
  %v3078 = vmul.f32 %v1695, 0.01
  %v3079 = vmul.f32 %v1697, 0.01
  %v3080 = vmul.f32 %v2278, 0.01
  %v3081 = vmul.f32 %v1699, 0.01
  %v3082 = vmul.f32 %v1701, 0.01
  %v3083 = vmul.f32 %v2281, 0.01
  %v3084 = vmul.f32 %v1705, 0.01
  %v3085 = vmul.f32 %v1707, 0.01
  %v3086 = vmul.f32 %v2286, 0.01
  %v3087 = vmul.f32 %v1709, 0.01
  %v3088 = vmul.f32 %v1711, 0.01
  %v3089 = vmul.f32 %v2289, 0.01
  %v3090 = vmul.f32 %v1715, 0.01
  %v3091 = vmul.f32 %v1717, 0.01
  %v3092 = vmul.f32 %v2294, 0.01
  %v3093 = vmul.f32 %v1719, 0.01
  %v3094 = vmul.f32 %v1721, 0.01
  %v3095 = vmul.f32 %v2297, 0.01
  %v3096 = vmul.f32 %v1725, 0.01
  %v3097 = vmul.f32 %v1727, 0.01
  %v3098 = vmul.f32 %v2302, 0.01
  %v3099 = vmul.f32 %v1729, 0.01
  %v3100 = vmul.f32 %v1731, 0.01
  %v3101 = vmul.f32 %v2305, 0.01
  %v3102 = vmul.f32 %v1735, 0.01
  %v3103 = vmul.f32 %v1737, 0.01
  %v3104 = vmul.f32 %v2310, 0.01
  %v3105 = vmul.f32 %v1739, 0.01
  %v3106 = vmul.f32 %v1741, 0.01
  %v3107 = vmul.f32 %v2313, 0.01
  %v3108 = vmul.f32 %v1745, 0.01
  %v3109 = vmul.f32 %v1747, 0.01
  %v3110 = vmul.f32 %v2318, 0.01
  %v3111 = vmul.f32 %v1749, 0.01
  %v3112 = vmul.f32 %v1751, 0.01
  %v3113 = vmul.f32 %v2321, 0.01
  %v3114 = vmul.f32 %v1755, 0.01
  %v3115 = vmul.f32 %v1757, 0.01
  %v3116 = vmul.f32 %v2326, 0.01
  %v3117 = vmul.f32 %v1759, 0.01
  %v3118 = vmul.f32 %v1761, 0.01
  %v3119 = vmul.f32 %v2329, 0.01
  %v3120 = vmul.f32 %v1765, 0.01
  %v3121 = vmul.f32 %v1767, 0.01
  %v3122 = vmul.f32 %v2334, 0.01
  %v3123 = vmul.f32 %v1769, 0.01
  %v3124 = vmul.f32 %v1771, 0.01
  %v3125 = vmul.f32 %v2337, 0.01
  %v3126 = vmul.f32 %v1775, 0.01
  %v3127 = vmul.f32 %v1777, 0.01
  %v3128 = vmul.f32 %v2342, 0.01
  %v3129 = vmul.f32 %v1779, 0.01
  %v3130 = vmul.f32 %v1781, 0.01
  %v3131 = vmul.f32 %v2345, 0.01
  %v3132 = vmul.f32 %v1785, 0.01
  %v3133 = vmul.f32 %v1787, 0.01
  %v3134 = vmul.f32 %v2350, 0.01
  %v3135 = vmul.f32 %v1789, 0.01
  %v3136 = vmul.f32 %v1791, 0.01
  %v3137 = vmul.f32 %v2353, 0.01
  %v3138 = vmul.f32 %v1795, 0.01
  %v3139 = vmul.f32 %v1797, 0.01
  %v3140 = vmul.f32 %v2358, 0.01
  %v3141 = vmul.f32 %v1799, 0.01
  %v3142 = vmul.f32 %v1801, 0.01
  %v3143 = vmul.f32 %v2361, 0.01
  %v3144 = vmul.f32 %v1805, 0.01
  %v3145 = vmul.f32 %v1807, 0.01
  %v3146 = vmul.f32 %v2366, 0.01
  %v3147 = vmul.f32 %v1809, 0.01
  %v3148 = vmul.f32 %v1811, 0.01
  %v3149 = vmul.f32 %v2369, 0.01
  %v3150 = vmul.f32 %v1815, 0.01
  %v3151 = vmul.f32 %v1817, 0.01
  %v3152 = vmul.f32 %v2374, 0.01
  %v3153 = vmul.f32 %v1819, 0.01
  %v3154 = vmul.f32 %v1821, 0.01
  %v3155 = vmul.f32 %v2377, 0.01
  %v3156 = vmul.f32 %v1825, 0.01
  %v3157 = vmul.f32 %v1827, 0.01
  %v3158 = vmul.f32 %v2382, 0.01
  %v3159 = vmul.f32 %v1829, 0.01
  %v3160 = vmul.f32 %v1831, 0.01
  %v3161 = vmul.f32 %v2385, 0.01
  %v3162 = vmul.f32 %v1835, 0.01
  %v3163 = vmul.f32 %v1837, 0.01
  %v3164 = vmul.f32 %v2390, 0.01
  %v3165 = vmul.f32 %v1839, 0.01
  %v3166 = vmul.f32 %v1841, 0.01
  %v3167 = vmul.f32 %v2393, 0.01
  %v3168 = vmul.f32 %v1845, 0.01
  %v3169 = vmul.f32 %v1847, 0.01
  %v3170 = vmul.f32 %v2398, 0.01
  %v3171 = vmul.f32 %v1849, 0.01
  %v3172 = vmul.f32 %v1851, 0.01
  %v3173 = vmul.f32 %v2401, 0.01
  %v3174 = vmul.f32 %v1855, 0.01
  %v3175 = vmul.f32 %v1857, 0.01
  %v3176 = vmul.f32 %v2406, 0.01
  %v3177 = vmul.f32 %v1859, 0.01
  %v3178 = vmul.f32 %v1861, 0.01
  %v3179 = vmul.f32 %v2409, 0.01
  %v3180 = vmul.f32 %v1865, 0.01
  %v3181 = vmul.f32 %v1867, 0.01
  %v3182 = vmul.f32 %v2414, 0.01
  %v3183 = vmul.f32 %v1869, 0.01
  %v3184 = vmul.f32 %v1871, 0.01
  %v3185 = vmul.f32 %v2417, 0.01
  %v3186 = vmul.f32 %v1875, 0.01
  %v3187 = vmul.f32 %v1877, 0.01
  %v3188 = vmul.f32 %v2422, 0.01
  %v3189 = vmul.f32 %v1879, 0.01
  %v3190 = vmul.f32 %v1881, 0.01
  %v3191 = vmul.f32 %v2425, 0.01
  %v3192 = vmul.f32 %v1885, 0.01
  %v3193 = vmul.f32 %v1887, 0.01
  %v3194 = vmul.f32 %v2430, 0.01
  %v3195 = vmul.f32 %v1889, 0.01
  %v3196 = vmul.f32 %v1891, 0.01
  %v3197 = vmul.f32 %v2433, 0.01
  %v3198 = vmul.f32 %v1895, 0.01
  %v3199 = vmul.f32 %v1897, 0.01
  %v3200 = vmul.f32 %v2438, 0.01
  %v3201 = vmul.f32 %v1899, 0.01
  %v3202 = vmul.f32 %v1901, 0.01
  %v3203 = vmul.f32 %v2441, 0.01
  %v3204 = vmul.f32 %v1905, 0.01
  %v3205 = vmul.f32 %v1907, 0.01
  %v3206 = vmul.f32 %v2446, 0.01
  %v3207 = vmul.f32 %v1909, 0.01
  %v3208 = vmul.f32 %v1911, 0.01
  %v3209 = vmul.f32 %v2449, 0.01
  %v3210 = vmul.f32 %v1915, 0.01
  %v3211 = vmul.f32 %v1917, 0.01
  %v3212 = vmul.f32 %v2454, 0.01
  %v3213 = vmul.f32 %v1919, 0.01
  %v3214 = vmul.f32 %v1921, 0.01
  %v3215 = vmul.f32 %v2457, 0.01
  %v3216 = vsel %vm2460, %v1295, %v2838
  %v3217 = vsel %vm2461, %v1297, %v2839
  %v3218 = vsel %vm2462, %v1958, %v2840
  %v3219 = vsel %vm2463, %v1299, %v2841
  %v3220 = vsel %vm2464, %v1301, %v2842
  %v3221 = vsel %vm2465, %v1961, %v2843
  %v3222 = vsel %vm2466, %v1305, %v2844
  %v3223 = vsel %vm2467, %v1307, %v2845
  %v3224 = vsel %vm2468, %v1966, %v2846
  %v3225 = vsel %vm2469, %v1309, %v2847
  %v3226 = vsel %vm2470, %v1311, %v2848
  %v3227 = vsel %vm2471, %v1969, %v2849
  %v3228 = vsel %vm2472, %v1315, %v2850
  %v3229 = vsel %vm2473, %v1317, %v2851
  %v3230 = vsel %vm2474, %v1974, %v2852
  %v3231 = vsel %vm2475, %v1319, %v2853
  %v3232 = vsel %vm2476, %v1321, %v2854
  %v3233 = vsel %vm2477, %v1977, %v2855
  %v3234 = vsel %vm2478, %v1325, %v2856
  %v3235 = vsel %vm2479, %v1327, %v2857
  %v3236 = vsel %vm2480, %v1982, %v2858
  %v3237 = vsel %vm2481, %v1329, %v2859
  %v3238 = vsel %vm2482, %v1331, %v2860
  %v3239 = vsel %vm2483, %v1985, %v2861
  %v3240 = vsel %vm2484, %v1335, %v2862
  %v3241 = vsel %vm2485, %v1337, %v2863
  %v3242 = vsel %vm2486, %v1990, %v2864
  %v3243 = vsel %vm2487, %v1339, %v2865
  %v3244 = vsel %vm2488, %v1341, %v2866
  %v3245 = vsel %vm2489, %v1993, %v2867
  %v3246 = vsel %vm2490, %v1345, %v2868
  %v3247 = vsel %vm2491, %v1347, %v2869
  %v3248 = vsel %vm2492, %v1998, %v2870
  %v3249 = vsel %vm2493, %v1349, %v2871
  %v3250 = vsel %vm2494, %v1351, %v2872
  %v3251 = vsel %vm2495, %v2001, %v2873
  %v3252 = vsel %vm2496, %v1355, %v2874
  %v3253 = vsel %vm2497, %v1357, %v2875
  %v3254 = vsel %vm2498, %v2006, %v2876
  %v3255 = vsel %vm2499, %v1359, %v2877
  %v3256 = vsel %vm2500, %v1361, %v2878
  %v3257 = vsel %vm2501, %v2009, %v2879
  %v3258 = vsel %vm2502, %v1365, %v2880
  %v3259 = vsel %vm2503, %v1367, %v2881
  %v3260 = vsel %vm2504, %v2014, %v2882
  %v3261 = vsel %vm2505, %v1369, %v2883
  %v3262 = vsel %vm2506, %v1371, %v2884
  %v3263 = vsel %vm2507, %v2017, %v2885
  %v3264 = vsel %vm2508, %v1375, %v2886
  %v3265 = vsel %vm2509, %v1377, %v2887
  %v3266 = vsel %vm2510, %v2022, %v2888
  %v3267 = vsel %vm2511, %v1379, %v2889
  %v3268 = vsel %vm2512, %v1381, %v2890
  %v3269 = vsel %vm2513, %v2025, %v2891
  %v3270 = vsel %vm2514, %v1385, %v2892
  %v3271 = vsel %vm2515, %v1387, %v2893
  %v3272 = vsel %vm2516, %v2030, %v2894
  %v3273 = vsel %vm2517, %v1389, %v2895
  %v3274 = vsel %vm2518, %v1391, %v2896
  %v3275 = vsel %vm2519, %v2033, %v2897
  %v3276 = vsel %vm2520, %v1395, %v2898
  %v3277 = vsel %vm2521, %v1397, %v2899
  %v3278 = vsel %vm2522, %v2038, %v2900
  %v3279 = vsel %vm2523, %v1399, %v2901
  %v3280 = vsel %vm2524, %v1401, %v2902
  %v3281 = vsel %vm2525, %v2041, %v2903
  %v3282 = vsel %vm2526, %v1405, %v2904
  %v3283 = vsel %vm2527, %v1407, %v2905
  %v3284 = vsel %vm2528, %v2046, %v2906
  %v3285 = vsel %vm2529, %v1409, %v2907
  %v3286 = vsel %vm2530, %v1411, %v2908
  %v3287 = vsel %vm2531, %v2049, %v2909
  %v3288 = vsel %vm2532, %v1415, %v2910
  %v3289 = vsel %vm2533, %v1417, %v2911
  %v3290 = vsel %vm2534, %v2054, %v2912
  %v3291 = vsel %vm2535, %v1419, %v2913
  %v3292 = vsel %vm2536, %v1421, %v2914
  %v3293 = vsel %vm2537, %v2057, %v2915
  %v3294 = vsel %vm2538, %v1425, %v2916
  %v3295 = vsel %vm2539, %v1427, %v2917
  %v3296 = vsel %vm2540, %v2062, %v2918
  %v3297 = vsel %vm2541, %v1429, %v2919
  %v3298 = vsel %vm2542, %v1431, %v2920
  %v3299 = vsel %vm2543, %v2065, %v2921
  %v3300 = vsel %vm2544, %v1435, %v2922
  %v3301 = vsel %vm2545, %v1437, %v2923
  %v3302 = vsel %vm2546, %v2070, %v2924
  %v3303 = vsel %vm2547, %v1439, %v2925
  %v3304 = vsel %vm2548, %v1441, %v2926
  %v3305 = vsel %vm2549, %v2073, %v2927
  %v3306 = vsel %vm2550, %v1445, %v2928
  %v3307 = vsel %vm2551, %v1447, %v2929
  %v3308 = vsel %vm2552, %v2078, %v2930
  %v3309 = vsel %vm2553, %v1449, %v2931
  %v3310 = vsel %vm2554, %v1451, %v2932
  %v3311 = vsel %vm2555, %v2081, %v2933
  %v3312 = vsel %vm2556, %v1455, %v2934
  %v3313 = vsel %vm2557, %v1457, %v2935
  %v3314 = vsel %vm2558, %v2086, %v2936
  %v3315 = vsel %vm2559, %v1459, %v2937
  %v3316 = vsel %vm2560, %v1461, %v2938
  %v3317 = vsel %vm2561, %v2089, %v2939
  %v3318 = vsel %vm2562, %v1465, %v2940
  %v3319 = vsel %vm2563, %v1467, %v2941
  %v3320 = vsel %vm2564, %v2094, %v2942
  %v3321 = vsel %vm2565, %v1469, %v2943
  %v3322 = vsel %vm2566, %v1471, %v2944
  %v3323 = vsel %vm2567, %v2097, %v2945
  %v3324 = vsel %vm2568, %v1475, %v2946
  %v3325 = vsel %vm2569, %v1477, %v2947
  %v3326 = vsel %vm2570, %v2102, %v2948
  %v3327 = vsel %vm2571, %v1479, %v2949
  %v3328 = vsel %vm2572, %v1481, %v2950
  %v3329 = vsel %vm2573, %v2105, %v2951
  %v3330 = vsel %vm2574, %v1485, %v2952
  %v3331 = vsel %vm2575, %v1487, %v2953
  %v3332 = vsel %vm2576, %v2110, %v2954
  %v3333 = vsel %vm2577, %v1489, %v2955
  %v3334 = vsel %vm2578, %v1491, %v2956
  %v3335 = vsel %vm2579, %v2113, %v2957
  %v3336 = vsel %vm2580, %v1495, %v2958
  %v3337 = vsel %vm2581, %v1497, %v2959
  %v3338 = vsel %vm2582, %v2118, %v2960
  %v3339 = vsel %vm2583, %v1499, %v2961
  %v3340 = vsel %vm2584, %v1501, %v2962
  %v3341 = vsel %vm2585, %v2121, %v2963
  %v3342 = vsel %vm2586, %v1505, %v2964
  %v3343 = vsel %vm2587, %v1507, %v2965
  %v3344 = vsel %vm2588, %v2126, %v2966
  %v3345 = vsel %vm2589, %v1509, %v2967
  %v3346 = vsel %vm2590, %v1511, %v2968
  %v3347 = vsel %vm2591, %v2129, %v2969
  %v3348 = vsel %vm2592, %v1515, %v2970
  %v3349 = vsel %vm2593, %v1517, %v2971
  %v3350 = vsel %vm2594, %v2134, %v2972
  %v3351 = vsel %vm2595, %v1519, %v2973
  %v3352 = vsel %vm2596, %v1521, %v2974
  %v3353 = vsel %vm2597, %v2137, %v2975
  %v3354 = vsel %vm2598, %v1525, %v2976
  %v3355 = vsel %vm2599, %v1527, %v2977
  %v3356 = vsel %vm2600, %v2142, %v2978
  %v3357 = vsel %vm2601, %v1529, %v2979
  %v3358 = vsel %vm2602, %v1531, %v2980
  %v3359 = vsel %vm2603, %v2145, %v2981
  %v3360 = vsel %vm2604, %v1535, %v2982
  %v3361 = vsel %vm2605, %v1537, %v2983
  %v3362 = vsel %vm2606, %v2150, %v2984
  %v3363 = vsel %vm2607, %v1539, %v2985
  %v3364 = vsel %vm2608, %v1541, %v2986
  %v3365 = vsel %vm2609, %v2153, %v2987
  %v3366 = vsel %vm2610, %v1545, %v2988
  %v3367 = vsel %vm2611, %v1547, %v2989
  %v3368 = vsel %vm2612, %v2158, %v2990
  %v3369 = vsel %vm2613, %v1549, %v2991
  %v3370 = vsel %vm2614, %v1551, %v2992
  %v3371 = vsel %vm2615, %v2161, %v2993
  %v3372 = vsel %vm2616, %v1555, %v2994
  %v3373 = vsel %vm2617, %v1557, %v2995
  %v3374 = vsel %vm2618, %v2166, %v2996
  %v3375 = vsel %vm2619, %v1559, %v2997
  %v3376 = vsel %vm2620, %v1561, %v2998
  %v3377 = vsel %vm2621, %v2169, %v2999
  %v3378 = vsel %vm2622, %v1565, %v3000
  %v3379 = vsel %vm2623, %v1567, %v3001
  %v3380 = vsel %vm2624, %v2174, %v3002
  %v3381 = vsel %vm2625, %v1569, %v3003
  %v3382 = vsel %vm2626, %v1571, %v3004
  %v3383 = vsel %vm2627, %v2177, %v3005
  %v3384 = vsel %vm2628, %v1575, %v3006
  %v3385 = vsel %vm2629, %v1577, %v3007
  %v3386 = vsel %vm2630, %v2182, %v3008
  %v3387 = vsel %vm2631, %v1579, %v3009
  %v3388 = vsel %vm2632, %v1581, %v3010
  %v3389 = vsel %vm2633, %v2185, %v3011
  %v3390 = vsel %vm2634, %v1585, %v3012
  %v3391 = vsel %vm2635, %v1587, %v3013
  %v3392 = vsel %vm2636, %v2190, %v3014
  %v3393 = vsel %vm2637, %v1589, %v3015
  %v3394 = vsel %vm2638, %v1591, %v3016
  %v3395 = vsel %vm2639, %v2193, %v3017
  %v3396 = vsel %vm2640, %v1595, %v3018
  %v3397 = vsel %vm2641, %v1597, %v3019
  %v3398 = vsel %vm2642, %v2198, %v3020
  %v3399 = vsel %vm2643, %v1599, %v3021
  %v3400 = vsel %vm2644, %v1601, %v3022
  %v3401 = vsel %vm2645, %v2201, %v3023
  %v3402 = vsel %vm2646, %v1605, %v3024
  %v3403 = vsel %vm2647, %v1607, %v3025
  %v3404 = vsel %vm2648, %v2206, %v3026
  %v3405 = vsel %vm2649, %v1609, %v3027
  %v3406 = vsel %vm2650, %v1611, %v3028
  %v3407 = vsel %vm2651, %v2209, %v3029
  %v3408 = vsel %vm2652, %v1615, %v3030
  %v3409 = vsel %vm2653, %v1617, %v3031
  %v3410 = vsel %vm2654, %v2214, %v3032
  %v3411 = vsel %vm2655, %v1619, %v3033
  %v3412 = vsel %vm2656, %v1621, %v3034
  %v3413 = vsel %vm2657, %v2217, %v3035
  %v3414 = vsel %vm2658, %v1625, %v3036
  %v3415 = vsel %vm2659, %v1627, %v3037
  %v3416 = vsel %vm2660, %v2222, %v3038
  %v3417 = vsel %vm2661, %v1629, %v3039
  %v3418 = vsel %vm2662, %v1631, %v3040
  %v3419 = vsel %vm2663, %v2225, %v3041
  %v3420 = vsel %vm2664, %v1635, %v3042
  %v3421 = vsel %vm2665, %v1637, %v3043
  %v3422 = vsel %vm2666, %v2230, %v3044
  %v3423 = vsel %vm2667, %v1639, %v3045
  %v3424 = vsel %vm2668, %v1641, %v3046
  %v3425 = vsel %vm2669, %v2233, %v3047
  %v3426 = vsel %vm2670, %v1645, %v3048
  %v3427 = vsel %vm2671, %v1647, %v3049
  %v3428 = vsel %vm2672, %v2238, %v3050
  %v3429 = vsel %vm2673, %v1649, %v3051
  %v3430 = vsel %vm2674, %v1651, %v3052
  %v3431 = vsel %vm2675, %v2241, %v3053
  %v3432 = vsel %vm2676, %v1655, %v3054
  %v3433 = vsel %vm2677, %v1657, %v3055
  %v3434 = vsel %vm2678, %v2246, %v3056
  %v3435 = vsel %vm2679, %v1659, %v3057
  %v3436 = vsel %vm2680, %v1661, %v3058
  %v3437 = vsel %vm2681, %v2249, %v3059
  %v3438 = vsel %vm2682, %v1665, %v3060
  %v3439 = vsel %vm2683, %v1667, %v3061
  %v3440 = vsel %vm2684, %v2254, %v3062
  %v3441 = vsel %vm2685, %v1669, %v3063
  %v3442 = vsel %vm2686, %v1671, %v3064
  %v3443 = vsel %vm2687, %v2257, %v3065
  %v3444 = vsel %vm2688, %v1675, %v3066
  %v3445 = vsel %vm2689, %v1677, %v3067
  %v3446 = vsel %vm2690, %v2262, %v3068
  %v3447 = vsel %vm2691, %v1679, %v3069
  %v3448 = vsel %vm2692, %v1681, %v3070
  %v3449 = vsel %vm2693, %v2265, %v3071
  %v3450 = vsel %vm2694, %v1685, %v3072
  %v3451 = vsel %vm2695, %v1687, %v3073
  %v3452 = vsel %vm2696, %v2270, %v3074
  %v3453 = vsel %vm2697, %v1689, %v3075
  %v3454 = vsel %vm2698, %v1691, %v3076
  %v3455 = vsel %vm2699, %v2273, %v3077
  %v3456 = vsel %vm2700, %v1695, %v3078
  %v3457 = vsel %vm2701, %v1697, %v3079
  %v3458 = vsel %vm2702, %v2278, %v3080
  %v3459 = vsel %vm2703, %v1699, %v3081
  %v3460 = vsel %vm2704, %v1701, %v3082
  %v3461 = vsel %vm2705, %v2281, %v3083
  %v3462 = vsel %vm2706, %v1705, %v3084
  %v3463 = vsel %vm2707, %v1707, %v3085
  %v3464 = vsel %vm2708, %v2286, %v3086
  %v3465 = vsel %vm2709, %v1709, %v3087
  %v3466 = vsel %vm2710, %v1711, %v3088
  %v3467 = vsel %vm2711, %v2289, %v3089
  %v3468 = vsel %vm2712, %v1715, %v3090
  %v3469 = vsel %vm2713, %v1717, %v3091
  %v3470 = vsel %vm2714, %v2294, %v3092
  %v3471 = vsel %vm2715, %v1719, %v3093
  %v3472 = vsel %vm2716, %v1721, %v3094
  %v3473 = vsel %vm2717, %v2297, %v3095
  %v3474 = vsel %vm2718, %v1725, %v3096
  %v3475 = vsel %vm2719, %v1727, %v3097
  %v3476 = vsel %vm2720, %v2302, %v3098
  %v3477 = vsel %vm2721, %v1729, %v3099
  %v3478 = vsel %vm2722, %v1731, %v3100
  %v3479 = vsel %vm2723, %v2305, %v3101
  %v3480 = vsel %vm2724, %v1735, %v3102
  %v3481 = vsel %vm2725, %v1737, %v3103
  %v3482 = vsel %vm2726, %v2310, %v3104
  %v3483 = vsel %vm2727, %v1739, %v3105
  %v3484 = vsel %vm2728, %v1741, %v3106
  %v3485 = vsel %vm2729, %v2313, %v3107
  %v3486 = vsel %vm2730, %v1745, %v3108
  %v3487 = vsel %vm2731, %v1747, %v3109
  %v3488 = vsel %vm2732, %v2318, %v3110
  %v3489 = vsel %vm2733, %v1749, %v3111
  %v3490 = vsel %vm2734, %v1751, %v3112
  %v3491 = vsel %vm2735, %v2321, %v3113
  %v3492 = vsel %vm2736, %v1755, %v3114
  %v3493 = vsel %vm2737, %v1757, %v3115
  %v3494 = vsel %vm2738, %v2326, %v3116
  %v3495 = vsel %vm2739, %v1759, %v3117
  %v3496 = vsel %vm2740, %v1761, %v3118
  %v3497 = vsel %vm2741, %v2329, %v3119
  %v3498 = vsel %vm2742, %v1765, %v3120
  %v3499 = vsel %vm2743, %v1767, %v3121
  %v3500 = vsel %vm2744, %v2334, %v3122
  %v3501 = vsel %vm2745, %v1769, %v3123
  %v3502 = vsel %vm2746, %v1771, %v3124
  %v3503 = vsel %vm2747, %v2337, %v3125
  %v3504 = vsel %vm2748, %v1775, %v3126
  %v3505 = vsel %vm2749, %v1777, %v3127
  %v3506 = vsel %vm2750, %v2342, %v3128
  %v3507 = vsel %vm2751, %v1779, %v3129
  %v3508 = vsel %vm2752, %v1781, %v3130
  %v3509 = vsel %vm2753, %v2345, %v3131
  %v3510 = vsel %vm2754, %v1785, %v3132
  %v3511 = vsel %vm2755, %v1787, %v3133
  %v3512 = vsel %vm2756, %v2350, %v3134
  %v3513 = vsel %vm2757, %v1789, %v3135
  %v3514 = vsel %vm2758, %v1791, %v3136
  %v3515 = vsel %vm2759, %v2353, %v3137
  %v3516 = vsel %vm2760, %v1795, %v3138
  %v3517 = vsel %vm2761, %v1797, %v3139
  %v3518 = vsel %vm2762, %v2358, %v3140
  %v3519 = vsel %vm2763, %v1799, %v3141
  %v3520 = vsel %vm2764, %v1801, %v3142
  %v3521 = vsel %vm2765, %v2361, %v3143
  %v3522 = vsel %vm2766, %v1805, %v3144
  %v3523 = vsel %vm2767, %v1807, %v3145
  %v3524 = vsel %vm2768, %v2366, %v3146
  %v3525 = vsel %vm2769, %v1809, %v3147
  %v3526 = vsel %vm2770, %v1811, %v3148
  %v3527 = vsel %vm2771, %v2369, %v3149
  %v3528 = vsel %vm2772, %v1815, %v3150
  %v3529 = vsel %vm2773, %v1817, %v3151
  %v3530 = vsel %vm2774, %v2374, %v3152
  %v3531 = vsel %vm2775, %v1819, %v3153
  %v3532 = vsel %vm2776, %v1821, %v3154
  %v3533 = vsel %vm2777, %v2377, %v3155
  %v3534 = vsel %vm2778, %v1825, %v3156
  %v3535 = vsel %vm2779, %v1827, %v3157
  %v3536 = vsel %vm2780, %v2382, %v3158
  %v3537 = vsel %vm2781, %v1829, %v3159
  %v3538 = vsel %vm2782, %v1831, %v3160
  %v3539 = vsel %vm2783, %v2385, %v3161
  %v3540 = vsel %vm2784, %v1835, %v3162
  %v3541 = vsel %vm2785, %v1837, %v3163
  %v3542 = vsel %vm2786, %v2390, %v3164
  %v3543 = vsel %vm2787, %v1839, %v3165
  %v3544 = vsel %vm2788, %v1841, %v3166
  %v3545 = vsel %vm2789, %v2393, %v3167
  %v3546 = vsel %vm2790, %v1845, %v3168
  %v3547 = vsel %vm2791, %v1847, %v3169
  %v3548 = vsel %vm2792, %v2398, %v3170
  %v3549 = vsel %vm2793, %v1849, %v3171
  %v3550 = vsel %vm2794, %v1851, %v3172
  %v3551 = vsel %vm2795, %v2401, %v3173
  %v3552 = vsel %vm2796, %v1855, %v3174
  %v3553 = vsel %vm2797, %v1857, %v3175
  %v3554 = vsel %vm2798, %v2406, %v3176
  %v3555 = vsel %vm2799, %v1859, %v3177
  %v3556 = vsel %vm2800, %v1861, %v3178
  %v3557 = vsel %vm2801, %v2409, %v3179
  %v3558 = vsel %vm2802, %v1865, %v3180
  %v3559 = vsel %vm2803, %v1867, %v3181
  %v3560 = vsel %vm2804, %v2414, %v3182
  %v3561 = vsel %vm2805, %v1869, %v3183
  %v3562 = vsel %vm2806, %v1871, %v3184
  %v3563 = vsel %vm2807, %v2417, %v3185
  %v3564 = vsel %vm2808, %v1875, %v3186
  %v3565 = vsel %vm2809, %v1877, %v3187
  %v3566 = vsel %vm2810, %v2422, %v3188
  %v3567 = vsel %vm2811, %v1879, %v3189
  %v3568 = vsel %vm2812, %v1881, %v3190
  %v3569 = vsel %vm2813, %v2425, %v3191
  %v3570 = vsel %vm2814, %v1885, %v3192
  %v3571 = vsel %vm2815, %v1887, %v3193
  %v3572 = vsel %vm2816, %v2430, %v3194
  %v3573 = vsel %vm2817, %v1889, %v3195
  %v3574 = vsel %vm2818, %v1891, %v3196
  %v3575 = vsel %vm2819, %v2433, %v3197
  %v3576 = vsel %vm2820, %v1895, %v3198
  %v3577 = vsel %vm2821, %v1897, %v3199
  %v3578 = vsel %vm2822, %v2438, %v3200
  %v3579 = vsel %vm2823, %v1899, %v3201
  %v3580 = vsel %vm2824, %v1901, %v3202
  %v3581 = vsel %vm2825, %v2441, %v3203
  %v3582 = vsel %vm2826, %v1905, %v3204
  %v3583 = vsel %vm2827, %v1907, %v3205
  %v3584 = vsel %vm2828, %v2446, %v3206
  %v3585 = vsel %vm2829, %v1909, %v3207
  %v3586 = vsel %vm2830, %v1911, %v3208
  %v3587 = vsel %vm2831, %v2449, %v3209
  %v3588 = vsel %vm2832, %v1915, %v3210
  %v3589 = vsel %vm2833, %v1917, %v3211
  %v3590 = vsel %vm2834, %v2454, %v3212
  %v3591 = vsel %vm2835, %v1919, %v3213
  %v3592 = vsel %vm2836, %v1921, %v3214
  %v3593 = vsel %vm2837, %v2457, %v3215
  %v3594 = vpack.c.bf16 %v3219, %v3216
  %v3595 = vpack.c.bf16 %v3220, %v3217
  %v3596 = vpack.c.bf16 %v3221, %v3218
  %v3597 = vpack.c.bf16 %v3225, %v3222
  %v3598 = vpack.c.bf16 %v3226, %v3223
  %v3599 = vpack.c.bf16 %v3227, %v3224
  %v3600 = vpack.c.bf16 %v3231, %v3228
  %v3601 = vpack.c.bf16 %v3232, %v3229
  %v3602 = vpack.c.bf16 %v3233, %v3230
  %v3603 = vpack.c.bf16 %v3237, %v3234
  %v3604 = vpack.c.bf16 %v3238, %v3235
  %v3605 = vpack.c.bf16 %v3239, %v3236
  %v3606 = vpack.c.bf16 %v3243, %v3240
  %v3607 = vpack.c.bf16 %v3244, %v3241
  %v3608 = vpack.c.bf16 %v3245, %v3242
  %v3609 = vpack.c.bf16 %v3249, %v3246
  %v3610 = vpack.c.bf16 %v3250, %v3247
  %v3611 = vpack.c.bf16 %v3251, %v3248
  %v3612 = vpack.c.bf16 %v3255, %v3252
  %v3613 = vpack.c.bf16 %v3256, %v3253
  %v3614 = vpack.c.bf16 %v3257, %v3254
  %v3615 = vpack.c.bf16 %v3261, %v3258
  %v3616 = vpack.c.bf16 %v3262, %v3259
  %v3617 = vpack.c.bf16 %v3263, %v3260
  %v3618 = vpack.c.bf16 %v3267, %v3264
  %v3619 = vpack.c.bf16 %v3268, %v3265
  %v3620 = vpack.c.bf16 %v3269, %v3266
  %v3621 = vpack.c.bf16 %v3273, %v3270
  %v3622 = vpack.c.bf16 %v3274, %v3271
  %v3623 = vpack.c.bf16 %v3275, %v3272
  %v3624 = vpack.c.bf16 %v3279, %v3276
  %v3625 = vpack.c.bf16 %v3280, %v3277
  %v3626 = vpack.c.bf16 %v3281, %v3278
  %v3627 = vpack.c.bf16 %v3285, %v3282
  %v3628 = vpack.c.bf16 %v3286, %v3283
  %v3629 = vpack.c.bf16 %v3287, %v3284
  %v3630 = vpack.c.bf16 %v3291, %v3288
  %v3631 = vpack.c.bf16 %v3292, %v3289
  %v3632 = vpack.c.bf16 %v3293, %v3290
  %v3633 = vpack.c.bf16 %v3297, %v3294
  %v3634 = vpack.c.bf16 %v3298, %v3295
  %v3635 = vpack.c.bf16 %v3299, %v3296
  %v3636 = vpack.c.bf16 %v3303, %v3300
  %v3637 = vpack.c.bf16 %v3304, %v3301
  %v3638 = vpack.c.bf16 %v3305, %v3302
  %v3639 = vpack.c.bf16 %v3309, %v3306
  %v3640 = vpack.c.bf16 %v3310, %v3307
  %v3641 = vpack.c.bf16 %v3311, %v3308
  %v3642 = vpack.c.bf16 %v3315, %v3312
  %v3643 = vpack.c.bf16 %v3316, %v3313
  %v3644 = vpack.c.bf16 %v3317, %v3314
  %v3645 = vpack.c.bf16 %v3321, %v3318
  %v3646 = vpack.c.bf16 %v3322, %v3319
  %v3647 = vpack.c.bf16 %v3323, %v3320
  %v3648 = vpack.c.bf16 %v3327, %v3324
  %v3649 = vpack.c.bf16 %v3328, %v3325
  %v3650 = vpack.c.bf16 %v3329, %v3326
  %v3651 = vpack.c.bf16 %v3333, %v3330
  %v3652 = vpack.c.bf16 %v3334, %v3331
  %v3653 = vpack.c.bf16 %v3335, %v3332
  %v3654 = vpack.c.bf16 %v3339, %v3336
  %v3655 = vpack.c.bf16 %v3340, %v3337
  %v3656 = vpack.c.bf16 %v3341, %v3338
  %v3657 = vpack.c.bf16 %v3345, %v3342
  %v3658 = vpack.c.bf16 %v3346, %v3343
  %v3659 = vpack.c.bf16 %v3347, %v3344
  %v3660 = vpack.c.bf16 %v3351, %v3348
  %v3661 = vpack.c.bf16 %v3352, %v3349
  %v3662 = vpack.c.bf16 %v3353, %v3350
  %v3663 = vpack.c.bf16 %v3357, %v3354
  %v3664 = vpack.c.bf16 %v3358, %v3355
  %v3665 = vpack.c.bf16 %v3359, %v3356
  %v3666 = vpack.c.bf16 %v3363, %v3360
  %v3667 = vpack.c.bf16 %v3364, %v3361
  %v3668 = vpack.c.bf16 %v3365, %v3362
  %v3669 = vpack.c.bf16 %v3369, %v3366
  %v3670 = vpack.c.bf16 %v3370, %v3367
  %v3671 = vpack.c.bf16 %v3371, %v3368
  %v3672 = vpack.c.bf16 %v3375, %v3372
  %v3673 = vpack.c.bf16 %v3376, %v3373
  %v3674 = vpack.c.bf16 %v3377, %v3374
  %v3675 = vpack.c.bf16 %v3381, %v3378
  %v3676 = vpack.c.bf16 %v3382, %v3379
  %v3677 = vpack.c.bf16 %v3383, %v3380
  %v3678 = vpack.c.bf16 %v3387, %v3384
  %v3679 = vpack.c.bf16 %v3388, %v3385
  %v3680 = vpack.c.bf16 %v3389, %v3386
  %v3681 = vpack.c.bf16 %v3393, %v3390
  %v3682 = vpack.c.bf16 %v3394, %v3391
  %v3683 = vpack.c.bf16 %v3395, %v3392
  %v3684 = vpack.c.bf16 %v3399, %v3396
  %v3685 = vpack.c.bf16 %v3400, %v3397
  %v3686 = vpack.c.bf16 %v3401, %v3398
  %v3687 = vpack.c.bf16 %v3405, %v3402
  %v3688 = vpack.c.bf16 %v3406, %v3403
  %v3689 = vpack.c.bf16 %v3407, %v3404
  %v3690 = vpack.c.bf16 %v3411, %v3408
  %v3691 = vpack.c.bf16 %v3412, %v3409
  %v3692 = vpack.c.bf16 %v3413, %v3410
  %v3693 = vpack.c.bf16 %v3417, %v3414
  %v3694 = vpack.c.bf16 %v3418, %v3415
  %v3695 = vpack.c.bf16 %v3419, %v3416
  %v3696 = vpack.c.bf16 %v3423, %v3420
  %v3697 = vpack.c.bf16 %v3424, %v3421
  %v3698 = vpack.c.bf16 %v3425, %v3422
  %v3699 = vpack.c.bf16 %v3429, %v3426
  %v3700 = vpack.c.bf16 %v3430, %v3427
  %v3701 = vpack.c.bf16 %v3431, %v3428
  %v3702 = vpack.c.bf16 %v3435, %v3432
  %v3703 = vpack.c.bf16 %v3436, %v3433
  %v3704 = vpack.c.bf16 %v3437, %v3434
  %v3705 = vpack.c.bf16 %v3441, %v3438
  %v3706 = vpack.c.bf16 %v3442, %v3439
  %v3707 = vpack.c.bf16 %v3443, %v3440
  %v3708 = vpack.c.bf16 %v3447, %v3444
  %v3709 = vpack.c.bf16 %v3448, %v3445
  %v3710 = vpack.c.bf16 %v3449, %v3446
  %v3711 = vpack.c.bf16 %v3453, %v3450
  %v3712 = vpack.c.bf16 %v3454, %v3451
  %v3713 = vpack.c.bf16 %v3455, %v3452
  %v3714 = vpack.c.bf16 %v3459, %v3456
  %v3715 = vpack.c.bf16 %v3460, %v3457
  %v3716 = vpack.c.bf16 %v3461, %v3458
  %v3717 = vpack.c.bf16 %v3465, %v3462
  %v3718 = vpack.c.bf16 %v3466, %v3463
  %v3719 = vpack.c.bf16 %v3467, %v3464
  %v3720 = vpack.c.bf16 %v3471, %v3468
  %v3721 = vpack.c.bf16 %v3472, %v3469
  %v3722 = vpack.c.bf16 %v3473, %v3470
  %v3723 = vpack.c.bf16 %v3477, %v3474
  %v3724 = vpack.c.bf16 %v3478, %v3475
  %v3725 = vpack.c.bf16 %v3479, %v3476
  %v3726 = vpack.c.bf16 %v3483, %v3480
  %v3727 = vpack.c.bf16 %v3484, %v3481
  %v3728 = vpack.c.bf16 %v3485, %v3482
  %v3729 = vpack.c.bf16 %v3489, %v3486
  %v3730 = vpack.c.bf16 %v3490, %v3487
  %v3731 = vpack.c.bf16 %v3491, %v3488
  %v3732 = vpack.c.bf16 %v3495, %v3492
  %v3733 = vpack.c.bf16 %v3496, %v3493
  %v3734 = vpack.c.bf16 %v3497, %v3494
  %v3735 = vpack.c.bf16 %v3501, %v3498
  %v3736 = vpack.c.bf16 %v3502, %v3499
  %v3737 = vpack.c.bf16 %v3503, %v3500
  %v3738 = vpack.c.bf16 %v3507, %v3504
  %v3739 = vpack.c.bf16 %v3508, %v3505
  %v3740 = vpack.c.bf16 %v3509, %v3506
  %v3741 = vpack.c.bf16 %v3513, %v3510
  %v3742 = vpack.c.bf16 %v3514, %v3511
  %v3743 = vpack.c.bf16 %v3515, %v3512
  %v3744 = vpack.c.bf16 %v3519, %v3516
  %v3745 = vpack.c.bf16 %v3520, %v3517
  %v3746 = vpack.c.bf16 %v3521, %v3518
  %v3747 = vpack.c.bf16 %v3525, %v3522
  %v3748 = vpack.c.bf16 %v3526, %v3523
  %v3749 = vpack.c.bf16 %v3527, %v3524
  %v3750 = vpack.c.bf16 %v3531, %v3528
  %v3751 = vpack.c.bf16 %v3532, %v3529
  %v3752 = vpack.c.bf16 %v3533, %v3530
  %v3753 = vpack.c.bf16 %v3537, %v3534
  %v3754 = vpack.c.bf16 %v3538, %v3535
  %v3755 = vpack.c.bf16 %v3539, %v3536
  %v3756 = vpack.c.bf16 %v3543, %v3540
  %v3757 = vpack.c.bf16 %v3544, %v3541
  %v3758 = vpack.c.bf16 %v3545, %v3542
  %v3759 = vpack.c.bf16 %v3549, %v3546
  %v3760 = vpack.c.bf16 %v3550, %v3547
  %v3761 = vpack.c.bf16 %v3551, %v3548
  %v3762 = vpack.c.bf16 %v3555, %v3552
  %v3763 = vpack.c.bf16 %v3556, %v3553
  %v3764 = vpack.c.bf16 %v3557, %v3554
  %v3765 = vpack.c.bf16 %v3561, %v3558
  %v3766 = vpack.c.bf16 %v3562, %v3559
  %v3767 = vpack.c.bf16 %v3563, %v3560
  %v3768 = vpack.c.bf16 %v3567, %v3564
  %v3769 = vpack.c.bf16 %v3568, %v3565
  %v3770 = vpack.c.bf16 %v3569, %v3566
  %v3771 = vpack.c.bf16 %v3573, %v3570
  %v3772 = vpack.c.bf16 %v3574, %v3571
  %v3773 = vpack.c.bf16 %v3575, %v3572
  %v3774 = vpack.c.bf16 %v3579, %v3576
  %v3775 = vpack.c.bf16 %v3580, %v3577
  %v3776 = vpack.c.bf16 %v3581, %v3578
  %v3777 = vpack.c.bf16 %v3585, %v3582
  %v3778 = vpack.c.bf16 %v3586, %v3583
  %v3779 = vpack.c.bf16 %v3587, %v3584
  %v3780 = vpack.c.bf16 %v3591, %v3588
  %v3781 = vpack.c.bf16 %v3592, %v3589
  %v3782 = vpack.c.bf16 %v3593, %v3590
  %v3783 = vld [vmem:[%s3] sm:$0xf]
  %v3784 = vld [vmem:[%s3 + $0x4] sm:$0xf]
  %v3785 = vld [vmem:[%s3 + $0x8] sm:$0xf]
  %v3786 = vld [vmem:[%s3 + $0xc] sm:$0xf]
  %v3787 = vld [vmem:[%s3 + $0x10] sm:$0xf]
  %v3788 = vld [vmem:[%s3 + $0x14] sm:$0xf]
  %v3789 = vld [vmem:[%s3 + $0x18] sm:$0xf]
  %v3790 = vld [vmem:[%s3 + $0x1c] sm:$0xf]
  %v3791 = vld [vmem:[%s3 + $0x20] sm:$0xf]
  %v3792 = vld [vmem:[%s3 + $0x24] sm:$0xf]
  %v3793 = vld [vmem:[%s3 + $0x28] sm:$0xf]
  %v3794 = vld [vmem:[%s3 + $0x2c] sm:$0xf]
  %v3795 = vld [vmem:[%s3 + $0x30] sm:$0xf]
  %v3796 = vld [vmem:[%s3 + $0x34] sm:$0xf]
  %v3797 = vld [vmem:[%s3 + $0x38] sm:$0xf]
  %v3798 = vld [vmem:[%s3 + $0x3c] sm:$0xf]
  %v3799 = vld [vmem:[%s3 + $0x40] sm:$0xf]
  %v3800 = vld [vmem:[%s3 + $0x44] sm:$0xf]
  %v3801 = vld [vmem:[%s3 + $0x48] sm:$0xf]
  %v3802 = vld [vmem:[%s3 + $0x4c] sm:$0xf]
  %v3803 = vld [vmem:[%s3 + $0x50] sm:$0xf]
  %v3804 = vld [vmem:[%s3 + $0x54] sm:$0xf]
  %v3805 = vld [vmem:[%s3 + $0x58] sm:$0xf]
  %v3806 = vld [vmem:[%s3 + $0x5c] sm:$0xf]
  %v3807 = vld [vmem:[%s3 + $0x60] sm:$0xf]
  %v3808 = vld [vmem:[%s3 + $0x64] sm:$0xf]
  %v3809 = vld [vmem:[%s3 + $0x68] sm:$0xf]
  %v3810 = vld [vmem:[%s3 + $0x6c] sm:$0xf]
  %v3811 = vld [vmem:[%s3 + $0x70] sm:$0xf]
  %v3812 = vld [vmem:[%s3 + $0x74] sm:$0xf]
  %v3813 = vld [vmem:[%s3 + $0x78] sm:$0xf]
  %v3814 = vld [vmem:[%s3 + $0x7c] sm:$0xf]
  %v3815 = vld [vmem:[%s3 + $0x80] sm:$0xf]
  %v3816 = vld [vmem:[%s3 + $0x84] sm:$0xf]
  %v3817 = vld [vmem:[%s3 + $0x88] sm:$0xf]
  %v3818 = vld [vmem:[%s3 + $0x8c] sm:$0xf]
  %s3819 = scalar_lea.vmem %s3, 144
  %v3820 = vld [vmem:[%s3819] sm:$0xf]
  %v3821 = vld [vmem:[%s3819 + $0x4] sm:$0xf]
  %v3822 = vld [vmem:[%s3819 + $0x8] sm:$0xf]
  %v3823 = vld [vmem:[%s3819 + $0xc] sm:$0xf]
  %v3824 = vld [vmem:[%s3819 + $0x10] sm:$0xf]
  %v3825 = vld [vmem:[%s3819 + $0x14] sm:$0xf]
  %v3826 = vld [vmem:[%s3819 + $0x18] sm:$0xf]
  %v3827 = vld [vmem:[%s3819 + $0x1c] sm:$0xf]
  %v3828 = vld [vmem:[%s3819 + $0x20] sm:$0xf]
  %v3829 = vld [vmem:[%s3819 + $0x24] sm:$0xf]
  %v3830 = vld [vmem:[%s3819 + $0x28] sm:$0xf]
  %v3831 = vld [vmem:[%s3819 + $0x2c] sm:$0xf]
  %v3832 = vld [vmem:[%s3819 + $0x30] sm:$0xf]
  %v3833 = vld [vmem:[%s3819 + $0x34] sm:$0xf]
  %v3834 = vld [vmem:[%s3819 + $0x38] sm:$0xf]
  %v3835 = vld [vmem:[%s3819 + $0x3c] sm:$0xf]
  %v3836 = vld [vmem:[%s3819 + $0x40] sm:$0xf]
  %v3837 = vld [vmem:[%s3819 + $0x44] sm:$0xf]
  %v3838 = vld [vmem:[%s3819 + $0x48] sm:$0xf]
  %v3839 = vld [vmem:[%s3819 + $0x4c] sm:$0xf]
  %v3840 = vld [vmem:[%s3819 + $0x50] sm:$0xf]
  %v3841 = vld [vmem:[%s3819 + $0x54] sm:$0xf]
  %v3842 = vld [vmem:[%s3819 + $0x58] sm:$0xf]
  %v3843 = vld [vmem:[%s3819 + $0x5c] sm:$0xf]
  %v3844 = vld [vmem:[%s3819 + $0x60] sm:$0xf]
  %v3845 = vld [vmem:[%s3819 + $0x64] sm:$0xf]
  %v3846 = vld [vmem:[%s3819 + $0x68] sm:$0xf]
  %v3847 = vld [vmem:[%s3819 + $0x6c] sm:$0xf]
  %v3848 = vld [vmem:[%s3819 + $0x70] sm:$0xf]
  %v3849 = vld [vmem:[%s3819 + $0x74] sm:$0xf]
  %v3850 = vld [vmem:[%s3819 + $0x78] sm:$0xf]
  %v3851 = vld [vmem:[%s3819 + $0x7c] sm:$0xf]
  %v3852 = vld [vmem:[%s3819 + $0x80] sm:$0xf]
  %v3853 = vld [vmem:[%s3819 + $0x84] sm:$0xf]
  %v3854 = vld [vmem:[%s3819 + $0x88] sm:$0xf]
  %v3855 = vld [vmem:[%s3819 + $0x8c] sm:$0xf]
  %v3892 = vunpack.c.l.b16 %v3820
  %v3893 = vunpack.c.l.b16 %v3821
  %v3894 = vunpack.c.l.b16 %v3822
  %v3895 = vunpack.c.l.b16 %v3823
  %v3896 = vunpack.c.l.b16 %v3824
  %v3897 = vunpack.c.l.b16 %v3825
  %v3898 = vunpack.c.l.b16 %v3826
  %v3899 = vunpack.c.l.b16 %v3827
  %v3900 = vunpack.c.l.b16 %v3828
  %v3901 = vunpack.c.l.b16 %v3829
  %v3902 = vunpack.c.l.b16 %v3830
  %v3903 = vunpack.c.l.b16 %v3831
  %v3904 = vunpack.c.l.b16 %v3832
  %v3905 = vunpack.c.l.b16 %v3833
  %v3906 = vunpack.c.l.b16 %v3834
  %v3907 = vunpack.c.l.b16 %v3835
  %v3908 = vunpack.c.l.b16 %v3836
  %v3909 = vunpack.c.l.b16 %v3837
  %v3910 = vunpack.c.l.b16 %v3838
  %v3911 = vunpack.c.l.b16 %v3839
  %v3912 = vunpack.c.l.b16 %v3840
  %v3913 = vunpack.c.l.b16 %v3841
  %v3914 = vunpack.c.l.b16 %v3842
  %v3915 = vunpack.c.l.b16 %v3843
  %v3916 = vunpack.c.l.b16 %v3844
  %v3917 = vunpack.c.l.b16 %v3845
  %v3918 = vunpack.c.l.b16 %v3846
  %v3919 = vunpack.c.l.b16 %v3847
  %v3920 = vunpack.c.l.b16 %v3848
  %v3921 = vunpack.c.l.b16 %v3849
  %v3922 = vunpack.c.l.b16 %v3850
  %v3923 = vunpack.c.l.b16 %v3851
  %v3924 = vunpack.c.l.b16 %v3852
  %v3925 = vunpack.c.l.b16 %v3853
  %v3926 = vunpack.c.l.b16 %v3854
  %v3927 = vunpack.c.l.b16 %v3855
  %v3928 = vpack.c.b16 %v3893, %v3892
  %v3929 = vpack.c.b16 %v3895, %v3894
  %v3930 = vpack.c.b16 %v3897, %v3896
  %v3931 = vpack.c.b16 %v3899, %v3898
  %v3932 = vpack.c.b16 %v3901, %v3900
  %v3933 = vpack.c.b16 %v3903, %v3902
  %v3934 = vpack.c.b16 %v3905, %v3904
  %v3935 = vpack.c.b16 %v3907, %v3906
  %v3936 = vpack.c.b16 %v3909, %v3908
  %v3937 = vpack.c.b16 %v3911, %v3910
  %v3938 = vpack.c.b16 %v3913, %v3912
  %v3939 = vpack.c.b16 %v3915, %v3914
  %v3940 = vpack.c.b16 %v3917, %v3916
  %v3941 = vpack.c.b16 %v3919, %v3918
  %v3942 = vpack.c.b16 %v3921, %v3920
  %v3943 = vpack.c.b16 %v3923, %v3922
  %v3944 = vpack.c.b16 %v3925, %v3924
  %v3945 = vpack.c.b16 %v3927, %v3926
  %vm3964 = vcmask 261120
  %v3966 = vsel %vm3964, %v3659, 0
  %v3969 = vsel %vm3964, %v3662, 0
  %v3972 = vsel %vm3964, %v3665, 0
  %v3975 = vsel %vm3964, %v3668, 0
  %v3978 = vsel %vm3964, %v3671, 0
  %v3981 = vsel %vm3964, %v3674, 0
  %v3984 = vsel %vm3964, %v3677, 0
  %v3987 = vsel %vm3964, %v3680, 0
  %v3990 = vsel %vm3964, %v3683, 0
  %v3993 = vsel %vm3964, %v3686, 0
  %v3996 = vsel %vm3964, %v3689, 0
  %v3999 = vsel %vm3964, %v3692, 0
  %v4002 = vsel %vm3964, %v3695, 0
  %v4005 = vsel %vm3964, %v3698, 0
  %v4008 = vsel %vm3964, %v3701, 0
  %v4011 = vsel %vm3964, %v3704, 0
  %v4014 = vsel %vm3964, %v3707, 0
  %v4017 = vsel %vm3964, %v3710, 0
  %v4020 = vsel %vm3964, %v3713, 0
  %v4023 = vsel %vm3964, %v3716, 0
  %v4026 = vsel %vm3964, %v3719, 0
  %4028 = vmatprep.subr.bf16.mxu0 0
  %4029 = vmatpush1.bf16.msra.mxu0 %v3928
  %4030 = vmatprep.subr.bf16.mxu0 0
  %4031 = vmatpush1.bf16.msra.mxu0 %v3929
  %4032 = vmatprep.subr.bf16.mxu0 0
  %4033 = vmatpush1.bf16.msra.mxu0 %v3930
  %4034 = vmatprep.subr.bf16.mxu0 0
  %4035 = vmatpush1.bf16.msra.mxu0 %v3931
  %4036 = vmatprep.subr.bf16.mxu0 0
  %4037 = vmatpush1.bf16.msra.mxu0 %v3932
  %4038 = vmatprep.subr.bf16.mxu0 0
  %4039 = vmatpush1.bf16.msra.mxu0 %v3933
  %4040 = vmatprep.subr.bf16.mxu0 0
  %4041 = vmatpush1.bf16.msra.mxu0 %v3934
  %4042 = vmatprep.subr.bf16.mxu0 0
  %4043 = vmatpush1.bf16.msra.mxu0 %v3935
  %4044 = vmatprep.subr.bf16.mxu0 0
  %4045 = vmatpush1.bf16.msra.mxu0 %v3936
  %4046 = vmatprep.subr.bf16.mxu0 0
  %4047 = vmatpush1.bf16.msra.mxu0 %v3937
  %4048 = vmatprep.subr.bf16.mxu0 0
  %4049 = vmatpush1.bf16.msra.mxu0 %v3938
  %4050 = vmatprep.subr.bf16.mxu0 0
  %4051 = vmatpush1.bf16.msra.mxu0 %v3939
  %4052 = vmatprep.subr.bf16.mxu0 0
  %4053 = vmatpush1.bf16.msra.mxu0 %v3940
  %4054 = vmatprep.subr.bf16.mxu0 0
  %4055 = vmatpush1.bf16.msra.mxu0 %v3941
  %4056 = vmatprep.subr.bf16.mxu0 0
  %4057 = vmatpush1.bf16.msra.mxu0 %v3942
  %4058 = vmatprep.subr.bf16.mxu0 0
  %4059 = vmatpush1.bf16.msra.mxu0 %v3943
  %4060 = vmatprep.mubr.bf16.mxu0 %v3658
  %4061 = vmatmul.mubr.bf16.gmra.mrb[0].mxu0 %v3657
  %v4062 = vpop.f32.mrb[0].mxu0
  %v4063 = vadd.f32 0.0, %v4062
  %v4064 = vpop.f32.mrb[0].mxu0
  %v4065 = vpop.f32.mrb[0].mxu0
  %v4066 = vadd.f32 0.0, %v4065
  %v4067 = vpop.f32.mrb[0].mxu0
  %4068 = vmatprep.mubr.bf16.mxu0 %v3661
  %4069 = vmatmul.mubr.bf16.gmra.mrb[0].mxu0 %v3660
  %v4070 = vpop.f32.mrb[0].mxu0
  %v4071 = vadd.f32 0.0, %v4070
  %v4072 = vpop.f32.mrb[0].mxu0
  %v4073 = vpop.f32.mrb[0].mxu0
  %v4074 = vadd.f32 0.0, %v4073
  %v4075 = vpop.f32.mrb[0].mxu0
  %4076 = vmatprep.mubr.bf16.mxu0 %v3664
  %4077 = vmatmul.mubr.bf16.gmra.mrb[0].mxu0 %v3663
  %v4078 = vpop.f32.mrb[0].mxu0
  %v4079 = vadd.f32 0.0, %v4078
  %v4080 = vpop.f32.mrb[0].mxu0
  %v4081 = vpop.f32.mrb[0].mxu0
  %v4082 = vadd.f32 0.0, %v4081
  %v4083 = vpop.f32.mrb[0].mxu0
  %4084 = vmatprep.mubr.bf16.mxu0 %v3667
  %4085 = vmatmul.mubr.bf16.gmra.mrb[0].mxu0 %v3666
  %v4086 = vpop.f32.mrb[0].mxu0
  %v4087 = vadd.f32 0.0, %v4086
  %v4088 = vpop.f32.mrb[0].mxu0
  %v4089 = vpop.f32.mrb[0].mxu0
  %v4090 = vadd.f32 0.0, %v4089
  %v4091 = vpop.f32.mrb[0].mxu0
  %4092 = vmatprep.mubr.bf16.mxu0 %v3670
  %4093 = vmatmul.mubr.bf16.gmra.mrb[0].mxu0 %v3669
  %v4094 = vpop.f32.mrb[0].mxu0
  %v4095 = vadd.f32 0.0, %v4094
  %v4096 = vpop.f32.mrb[0].mxu0
  %v4097 = vpop.f32.mrb[0].mxu0
  %v4098 = vadd.f32 0.0, %v4097
  %v4099 = vpop.f32.mrb[0].mxu0
  %4100 = vmatprep.mubr.bf16.mxu0 %v3673
  %4101 = vmatmul.mubr.bf16.gmra.mrb[0].mxu0 %v3672
  %v4102 = vpop.f32.mrb[0].mxu0
  %v4103 = vadd.f32 0.0, %v4102
  %v4104 = vpop.f32.mrb[0].mxu0
  %v4105 = vpop.f32.mrb[0].mxu0
  %v4106 = vadd.f32 0.0, %v4105
  %v4107 = vpop.f32.mrb[0].mxu0
  %4108 = vmatprep.mubr.bf16.mxu0 %v3676
  %4109 = vmatmul.mubr.bf16.gmra.mrb[0].mxu0 %v3675
  %v4110 = vpop.f32.mrb[0].mxu0
  %v4111 = vadd.f32 0.0, %v4110
  %v4112 = vpop.f32.mrb[0].mxu0
  %v4113 = vpop.f32.mrb[0].mxu0
  %v4114 = vadd.f32 0.0, %v4113
  %v4115 = vpop.f32.mrb[0].mxu0
  %4116 = vmatprep.mubr.bf16.mxu0 %v3679
  %4117 = vmatmul.mubr.bf16.gmra.mrb[0].mxu0 %v3678
  %v4118 = vpop.f32.mrb[0].mxu0
  %v4119 = vadd.f32 0.0, %v4118
  %v4120 = vpop.f32.mrb[0].mxu0
  %v4121 = vpop.f32.mrb[0].mxu0
  %v4122 = vadd.f32 0.0, %v4121
  %v4123 = vpop.f32.mrb[0].mxu0
  %4124 = vmatprep.mubr.bf16.mxu0 %v3682
  %4125 = vmatmul.mubr.bf16.gmra.mrb[0].mxu0 %v3681
  %v4126 = vpop.f32.mrb[0].mxu0
  %v4127 = vadd.f32 0.0, %v4126
  %v4128 = vpop.f32.mrb[0].mxu0
  %v4129 = vpop.f32.mrb[0].mxu0
  %v4130 = vadd.f32 0.0, %v4129
  %v4131 = vpop.f32.mrb[0].mxu0
  %4132 = vmatprep.mubr.bf16.mxu0 %v3685
  %4133 = vmatmul.mubr.bf16.gmra.mrb[0].mxu0 %v3684
  %v4134 = vpop.f32.mrb[0].mxu0
  %v4135 = vadd.f32 0.0, %v4134
  %v4136 = vpop.f32.mrb[0].mxu0
  %v4137 = vpop.f32.mrb[0].mxu0
  %v4138 = vadd.f32 0.0, %v4137
  %v4139 = vpop.f32.mrb[0].mxu0
  %4140 = vmatprep.mubr.bf16.mxu0 %v3688
  %4141 = vmatmul.mubr.bf16.gmra.mrb[0].mxu0 %v3687
  %v4142 = vpop.f32.mrb[0].mxu0
  %v4143 = vadd.f32 0.0, %v4142
  %v4144 = vpop.f32.mrb[0].mxu0
  %v4145 = vpop.f32.mrb[0].mxu0
  %v4146 = vadd.f32 0.0, %v4145
  %v4147 = vpop.f32.mrb[0].mxu0
  %4148 = vmatprep.mubr.bf16.mxu0 %v3691
  %4149 = vmatmul.mubr.bf16.gmra.mrb[0].mxu0 %v3690
  %v4150 = vpop.f32.mrb[0].mxu0
  %v4151 = vadd.f32 0.0, %v4150
  %v4152 = vpop.f32.mrb[0].mxu0
  %v4153 = vpop.f32.mrb[0].mxu0
  %v4154 = vadd.f32 0.0, %v4153
  %v4155 = vpop.f32.mrb[0].mxu0
  %4156 = vmatprep.mubr.bf16.mxu0 %v3694
  %4157 = vmatmul.mubr.bf16.gmra.mrb[0].mxu0 %v3693
  %v4158 = vpop.f32.mrb[0].mxu0
  %v4159 = vadd.f32 0.0, %v4158
  %v4160 = vpop.f32.mrb[0].mxu0
  %v4161 = vpop.f32.mrb[0].mxu0
  %v4162 = vadd.f32 0.0, %v4161
  %v4163 = vpop.f32.mrb[0].mxu0
  %4164 = vmatprep.mubr.bf16.mxu0 %v3697
  %4165 = vmatmul.mubr.bf16.gmra.mrb[0].mxu0 %v3696
  %v4166 = vpop.f32.mrb[0].mxu0
  %v4167 = vadd.f32 0.0, %v4166
  %v4168 = vpop.f32.mrb[0].mxu0
  %v4169 = vpop.f32.mrb[0].mxu0
  %v4170 = vadd.f32 0.0, %v4169
  %v4171 = vpop.f32.mrb[0].mxu0
  %4172 = vmatprep.mubr.bf16.mxu0 %v3700
  %4173 = vmatmul.mubr.bf16.gmra.mrb[0].mxu0 %v3699
  %v4174 = vpop.f32.mrb[0].mxu0
  %v4175 = vadd.f32 0.0, %v4174
  %v4176 = vpop.f32.mrb[0].mxu0
  %v4177 = vpop.f32.mrb[0].mxu0
  %v4178 = vadd.f32 0.0, %v4177
  %v4179 = vpop.f32.mrb[0].mxu0
  %4180 = vmatprep.mubr.bf16.mxu0 %v3703
  %4181 = vmatmul.mubr.bf16.gmra.mrb[0].mxu0 %v3702
  %v4182 = vpop.f32.mrb[0].mxu0
  %v4183 = vadd.f32 0.0, %v4182
  %v4184 = vpop.f32.mrb[0].mxu0
  %v4185 = vpop.f32.mrb[0].mxu0
  %v4186 = vadd.f32 0.0, %v4185
  %v4187 = vpop.f32.mrb[0].mxu0
  %4188 = vmatprep.mubr.bf16.mxu0 %v3706
  %4189 = vmatmul.mubr.bf16.gmra.mrb[0].mxu0 %v3705
  %v4190 = vpop.f32.mrb[0].mxu0
  %v4191 = vadd.f32 0.0, %v4190
  %v4192 = vpop.f32.mrb[0].mxu0
  %v4193 = vpop.f32.mrb[0].mxu0
  %v4194 = vadd.f32 0.0, %v4193
  %v4195 = vpop.f32.mrb[0].mxu0
  %4196 = vmatprep.mubr.bf16.mxu0 %v3709
  %4197 = vmatmul.mubr.bf16.gmra.mrb[0].mxu0 %v3708
  %v4198 = vpop.f32.mrb[0].mxu0
  %v4199 = vadd.f32 0.0, %v4198
  %v4200 = vpop.f32.mrb[0].mxu0
  %v4201 = vpop.f32.mrb[0].mxu0
  %v4202 = vadd.f32 0.0, %v4201
  %v4203 = vpop.f32.mrb[0].mxu0
  %4204 = vmatprep.mubr.bf16.mxu0 %v3712
  %4205 = vmatmul.mubr.bf16.gmra.mrb[0].mxu0 %v3711
  %v4206 = vpop.f32.mrb[0].mxu0
  %v4207 = vadd.f32 0.0, %v4206
  %v4208 = vpop.f32.mrb[0].mxu0
  %v4209 = vpop.f32.mrb[0].mxu0
  %v4210 = vadd.f32 0.0, %v4209
  %v4211 = vpop.f32.mrb[0].mxu0
  %4212 = vmatprep.mubr.bf16.mxu0 %v3715
  %4213 = vmatmul.mubr.bf16.gmra.mrb[0].mxu0 %v3714
  %v4214 = vpop.f32.mrb[0].mxu0
  %v4215 = vadd.f32 0.0, %v4214
  %v4216 = vpop.f32.mrb[0].mxu0
  %v4217 = vpop.f32.mrb[0].mxu0
  %v4218 = vadd.f32 0.0, %v4217
  %v4219 = vpop.f32.mrb[0].mxu0
  %4220 = vmatprep.mubr.bf16.mxu0 %v3718
  %4221 = vmatmul.mubr.bf16.gmra.mrb[0].mxu0 %v3717
  %v4222 = vpop.f32.mrb[0].mxu0
  %v4223 = vadd.f32 0.0, %v4222
  %v4224 = vpop.f32.mrb[0].mxu0
  %v4225 = vpop.f32.mrb[0].mxu0
  %v4226 = vadd.f32 0.0, %v4225
  %v4227 = vpop.f32.mrb[0].mxu0
  %4228 = vdwg.mxu0
  %4229 = vmatprep.subr.bf16.mxu0 0
  %4230 = vmatpush1.bf16.msra.mxu0 %v3944
  %4231 = vmatprep.subr.bf16.mxu0 0
  %4232 = vmatpush1.bf16.msra.mxu0 %v3945
  %4233 = vmatprep.subr.bf16.mxu0 0
  %4234 = vmatpush1.bf16.msra.mxu0 0
  %4235 = vmatprep.subr.bf16.mxu0 0
  %4236 = vmatpush1.bf16.msra.mxu0 0
  %4237 = vmatprep.subr.bf16.mxu0 0
  %4238 = vmatpush1.bf16.msra.mxu0 0
  %4239 = vmatprep.subr.bf16.mxu0 0
  %4240 = vmatpush1.bf16.msra.mxu0 0
  %4241 = vmatprep.subr.bf16.mxu0 0
  %4242 = vmatpush1.bf16.msra.mxu0 0
  %4243 = vmatprep.subr.bf16.mxu0 0
  %4244 = vmatpush1.bf16.msra.mxu0 0
  %4245 = vmatprep.subr.bf16.mxu0 0
  %4246 = vmatpush1.bf16.msra.mxu0 0
  %4247 = vmatprep.subr.bf16.mxu0 0
  %4248 = vmatpush1.bf16.msra.mxu0 0
  %4249 = vmatprep.subr.bf16.mxu0 0
  %4250 = vmatpush1.bf16.msra.mxu0 0
  %4251 = vmatprep.subr.bf16.mxu0 0
  %4252 = vmatpush1.bf16.msra.mxu0 0
  %4253 = vmatprep.subr.bf16.mxu0 0
  %4254 = vmatpush1.bf16.msra.mxu0 0
  %4255 = vmatprep.subr.bf16.mxu0 0
  %4256 = vmatpush1.bf16.msra.mxu0 0
  %4257 = vmatprep.subr.bf16.mxu0 0
  %4258 = vmatpush1.bf16.msra.mxu0 0
  %4259 = vmatprep.subr.bf16.mxu0 0
  %4260 = vmatpush1.bf16.msra.mxu0 0
  %4261 = vmatprep.mubr.bf16.mxu0 0
  %4262 = vmatmul.mubr.bf16.gmra.mrb[0].mxu0 %v3966
  %v4263 = vpop.f32.mrb[0].mxu0
  %v4264 = vadd.f32 %v4063, %v4263
  %v4265 = vpop.f32.mrb[0].mxu0
  %v4266 = vpop.f32.mrb[0].mxu0
  %v4267 = vadd.f32 %v4066, %v4266
  %v4268 = vpop.f32.mrb[0].mxu0
  %4269 = vmatprep.mubr.bf16.mxu0 0
  %4270 = vmatmul.mubr.bf16.gmra.mrb[0].mxu0 %v3969
  %v4271 = vpop.f32.mrb[0].mxu0
  %v4272 = vadd.f32 %v4071, %v4271
  %v4273 = vpop.f32.mrb[0].mxu0
  %v4274 = vpop.f32.mrb[0].mxu0
  %v4275 = vadd.f32 %v4074, %v4274
  %v4276 = vpop.f32.mrb[0].mxu0
  %4277 = vmatprep.mubr.bf16.mxu0 0
  %4278 = vmatmul.mubr.bf16.gmra.mrb[0].mxu0 %v3972
  %v4279 = vpop.f32.mrb[0].mxu0
  %v4280 = vadd.f32 %v4079, %v4279
  %v4281 = vpop.f32.mrb[0].mxu0
  %v4282 = vpop.f32.mrb[0].mxu0
  %v4283 = vadd.f32 %v4082, %v4282
  %v4284 = vpop.f32.mrb[0].mxu0
  %4285 = vmatprep.mubr.bf16.mxu0 0
  %4286 = vmatmul.mubr.bf16.gmra.mrb[0].mxu0 %v3975
  %v4287 = vpop.f32.mrb[0].mxu0
  %v4288 = vadd.f32 %v4087, %v4287
  %v4289 = vpop.f32.mrb[0].mxu0
  %v4290 = vpop.f32.mrb[0].mxu0
  %v4291 = vadd.f32 %v4090, %v4290
  %v4292 = vpop.f32.mrb[0].mxu0
  %4293 = vmatprep.mubr.bf16.mxu0 0
  %4294 = vmatmul.mubr.bf16.gmra.mrb[0].mxu0 %v3978
  %v4295 = vpop.f32.mrb[0].mxu0
  %v4296 = vadd.f32 %v4095, %v4295
  %v4297 = vpop.f32.mrb[0].mxu0
  %v4298 = vpop.f32.mrb[0].mxu0
  %v4299 = vadd.f32 %v4098, %v4298
  %v4300 = vpop.f32.mrb[0].mxu0
  %4301 = vmatprep.mubr.bf16.mxu0 0
  %4302 = vmatmul.mubr.bf16.gmra.mrb[0].mxu0 %v3981
  %v4303 = vpop.f32.mrb[0].mxu0
  %v4304 = vadd.f32 %v4103, %v4303
  %v4305 = vpop.f32.mrb[0].mxu0
  %v4306 = vpop.f32.mrb[0].mxu0
  %v4307 = vadd.f32 %v4106, %v4306
  %v4308 = vpop.f32.mrb[0].mxu0
  %4309 = vmatprep.mubr.bf16.mxu0 0
  %4310 = vmatmul.mubr.bf16.gmra.mrb[0].mxu0 %v3984
  %v4311 = vpop.f32.mrb[0].mxu0
  %v4312 = vadd.f32 %v4111, %v4311
  %v4313 = vpop.f32.mrb[0].mxu0
  %v4314 = vpop.f32.mrb[0].mxu0
  %v4315 = vadd.f32 %v4114, %v4314
  %v4316 = vpop.f32.mrb[0].mxu0
  %4317 = vmatprep.mubr.bf16.mxu0 0
  %4318 = vmatmul.mubr.bf16.gmra.mrb[0].mxu0 %v3987
  %v4319 = vpop.f32.mrb[0].mxu0
  %v4320 = vadd.f32 %v4119, %v4319
  %v4321 = vpop.f32.mrb[0].mxu0
  %v4322 = vpop.f32.mrb[0].mxu0
  %v4323 = vadd.f32 %v4122, %v4322
  %v4324 = vpop.f32.mrb[0].mxu0
  %4325 = vmatprep.mubr.bf16.mxu0 0
  %4326 = vmatmul.mubr.bf16.gmra.mrb[0].mxu0 %v3990
  %v4327 = vpop.f32.mrb[0].mxu0
  %v4328 = vadd.f32 %v4127, %v4327
  %v4329 = vpop.f32.mrb[0].mxu0
  %v4330 = vpop.f32.mrb[0].mxu0
  %v4331 = vadd.f32 %v4130, %v4330
  %v4332 = vpop.f32.mrb[0].mxu0
  %4333 = vmatprep.mubr.bf16.mxu0 0
  %4334 = vmatmul.mubr.bf16.gmra.mrb[0].mxu0 %v3993
  %v4335 = vpop.f32.mrb[0].mxu0
  %v4336 = vadd.f32 %v4135, %v4335
  %v4337 = vpop.f32.mrb[0].mxu0
  %v4338 = vpop.f32.mrb[0].mxu0
  %v4339 = vadd.f32 %v4138, %v4338
  %v4340 = vpop.f32.mrb[0].mxu0
  %4341 = vmatprep.mubr.bf16.mxu0 0
  %4342 = vmatmul.mubr.bf16.gmra.mrb[0].mxu0 %v3996
  %v4343 = vpop.f32.mrb[0].mxu0
  %v4344 = vadd.f32 %v4143, %v4343
  %v4345 = vpop.f32.mrb[0].mxu0
  %v4346 = vpop.f32.mrb[0].mxu0
  %v4347 = vadd.f32 %v4146, %v4346
  %v4348 = vpop.f32.mrb[0].mxu0
  %4349 = vmatprep.mubr.bf16.mxu0 0
  %4350 = vmatmul.mubr.bf16.gmra.mrb[0].mxu0 %v3999
  %v4351 = vpop.f32.mrb[0].mxu0
  %v4352 = vadd.f32 %v4151, %v4351
  %v4353 = vpop.f32.mrb[0].mxu0
  %v4354 = vpop.f32.mrb[0].mxu0
  %v4355 = vadd.f32 %v4154, %v4354
  %v4356 = vpop.f32.mrb[0].mxu0
  %4357 = vmatprep.mubr.bf16.mxu0 0
  %4358 = vmatmul.mubr.bf16.gmra.mrb[0].mxu0 %v4002
  %v4359 = vpop.f32.mrb[0].mxu0
  %v4360 = vadd.f32 %v4159, %v4359
  %v4361 = vpop.f32.mrb[0].mxu0
  %v4362 = vpop.f32.mrb[0].mxu0
  %v4363 = vadd.f32 %v4162, %v4362
  %v4364 = vpop.f32.mrb[0].mxu0
  %4365 = vmatprep.mubr.bf16.mxu0 0
  %4366 = vmatmul.mubr.bf16.gmra.mrb[0].mxu0 %v4005
  %v4367 = vpop.f32.mrb[0].mxu0
  %v4368 = vadd.f32 %v4167, %v4367
  %v4369 = vpop.f32.mrb[0].mxu0
  %v4370 = vpop.f32.mrb[0].mxu0
  %v4371 = vadd.f32 %v4170, %v4370
  %v4372 = vpop.f32.mrb[0].mxu0
  %4373 = vmatprep.mubr.bf16.mxu0 0
  %4374 = vmatmul.mubr.bf16.gmra.mrb[0].mxu0 %v4008
  %v4375 = vpop.f32.mrb[0].mxu0
  %v4376 = vadd.f32 %v4175, %v4375
  %v4377 = vpop.f32.mrb[0].mxu0
  %v4378 = vpop.f32.mrb[0].mxu0
  %v4379 = vadd.f32 %v4178, %v4378
  %v4380 = vpop.f32.mrb[0].mxu0
  %4381 = vmatprep.mubr.bf16.mxu0 0
  %4382 = vmatmul.mubr.bf16.gmra.mrb[0].mxu0 %v4011
  %v4383 = vpop.f32.mrb[0].mxu0
  %v4384 = vadd.f32 %v4183, %v4383
  %v4385 = vpop.f32.mrb[0].mxu0
  %v4386 = vpop.f32.mrb[0].mxu0
  %v4387 = vadd.f32 %v4186, %v4386
  %v4388 = vpop.f32.mrb[0].mxu0
  %4389 = vmatprep.mubr.bf16.mxu0 0
  %4390 = vmatmul.mubr.bf16.gmra.mrb[0].mxu0 %v4014
  %v4391 = vpop.f32.mrb[0].mxu0
  %v4392 = vadd.f32 %v4191, %v4391
  %v4393 = vpop.f32.mrb[0].mxu0
  %v4394 = vpop.f32.mrb[0].mxu0
  %v4395 = vadd.f32 %v4194, %v4394
  %v4396 = vpop.f32.mrb[0].mxu0
  %4397 = vmatprep.mubr.bf16.mxu0 0
  %4398 = vmatmul.mubr.bf16.gmra.mrb[0].mxu0 %v4017
  %v4399 = vpop.f32.mrb[0].mxu0
  %v4400 = vadd.f32 %v4199, %v4399
  %v4401 = vpop.f32.mrb[0].mxu0
  %v4402 = vpop.f32.mrb[0].mxu0
  %v4403 = vadd.f32 %v4202, %v4402
  %v4404 = vpop.f32.mrb[0].mxu0
  %4405 = vmatprep.mubr.bf16.mxu0 0
  %4406 = vmatmul.mubr.bf16.gmra.mrb[0].mxu0 %v4020
  %v4407 = vpop.f32.mrb[0].mxu0
  %v4408 = vadd.f32 %v4207, %v4407
  %v4409 = vpop.f32.mrb[0].mxu0
  %v4410 = vpop.f32.mrb[0].mxu0
  %v4411 = vadd.f32 %v4210, %v4410
  %v4412 = vpop.f32.mrb[0].mxu0
  %4413 = vmatprep.mubr.bf16.mxu0 0
  %4414 = vmatmul.mubr.bf16.gmra.mrb[0].mxu0 %v4023
  %v4415 = vpop.f32.mrb[0].mxu0
  %v4416 = vadd.f32 %v4215, %v4415
  %v4417 = vpop.f32.mrb[0].mxu0
  %v4418 = vpop.f32.mrb[0].mxu0
  %v4419 = vadd.f32 %v4218, %v4418
  %v4420 = vpop.f32.mrb[0].mxu0
  %4421 = vmatprep.mubr.bf16.mxu0 0
  %4422 = vmatmul.mubr.bf16.gmra.mrb[0].mxu0 %v4026
  %v4423 = vpop.f32.mrb[0].mxu0
  %v4424 = vadd.f32 %v4223, %v4423
  %v4425 = vpop.f32.mrb[0].mxu0
  %v4426 = vpop.f32.mrb[0].mxu0
  %v4427 = vadd.f32 %v4226, %v4426
  %v4428 = vpop.f32.mrb[0].mxu0
  %4429 = vdwg.mxu0
  %v4466 = vunpack.c.l.b16 %v3783
  %v4467 = vunpack.c.l.b16 %v3784
  %v4468 = vunpack.c.l.b16 %v3785
  %v4469 = vunpack.c.l.b16 %v3786
  %v4470 = vunpack.c.l.b16 %v3787
  %v4471 = vunpack.c.l.b16 %v3788
  %v4472 = vunpack.c.l.b16 %v3789
  %v4473 = vunpack.c.l.b16 %v3790
  %v4474 = vunpack.c.l.b16 %v3791
  %v4475 = vunpack.c.l.b16 %v3792
  %v4476 = vunpack.c.l.b16 %v3793
  %v4477 = vunpack.c.l.b16 %v3794
  %v4478 = vunpack.c.l.b16 %v3795
  %v4479 = vunpack.c.l.b16 %v3796
  %v4480 = vunpack.c.l.b16 %v3797
  %v4481 = vunpack.c.l.b16 %v3798
  %v4482 = vunpack.c.l.b16 %v3799
  %v4483 = vunpack.c.l.b16 %v3800
  %v4484 = vunpack.c.l.b16 %v3801
  %v4485 = vunpack.c.l.b16 %v3802
  %v4486 = vunpack.c.l.b16 %v3803
  %v4487 = vunpack.c.l.b16 %v3804
  %v4488 = vunpack.c.l.b16 %v3805
  %v4489 = vunpack.c.l.b16 %v3806
  %v4490 = vunpack.c.l.b16 %v3807
  %v4491 = vunpack.c.l.b16 %v3808
  %v4492 = vunpack.c.l.b16 %v3809
  %v4493 = vunpack.c.l.b16 %v3810
  %v4494 = vunpack.c.l.b16 %v3811
  %v4495 = vunpack.c.l.b16 %v3812
  %v4496 = vunpack.c.l.b16 %v3813
  %v4497 = vunpack.c.l.b16 %v3814
  %v4498 = vunpack.c.l.b16 %v3815
  %v4499 = vunpack.c.l.b16 %v3816
  %v4500 = vunpack.c.l.b16 %v3817
  %v4501 = vunpack.c.l.b16 %v3818
  %v4502 = vpack.c.b16 %v4467, %v4466
  %v4503 = vpack.c.b16 %v4469, %v4468
  %v4504 = vpack.c.b16 %v4471, %v4470
  %v4505 = vpack.c.b16 %v4473, %v4472
  %v4506 = vpack.c.b16 %v4475, %v4474
  %v4507 = vpack.c.b16 %v4477, %v4476
  %v4508 = vpack.c.b16 %v4479, %v4478
  %v4509 = vpack.c.b16 %v4481, %v4480
  %v4510 = vpack.c.b16 %v4483, %v4482
  %v4511 = vpack.c.b16 %v4485, %v4484
  %v4512 = vpack.c.b16 %v4487, %v4486
  %v4513 = vpack.c.b16 %v4489, %v4488
  %v4514 = vpack.c.b16 %v4491, %v4490
  %v4515 = vpack.c.b16 %v4493, %v4492
  %v4516 = vpack.c.b16 %v4495, %v4494
  %v4517 = vpack.c.b16 %v4497, %v4496
  %v4518 = vpack.c.b16 %v4499, %v4498
  %v4519 = vpack.c.b16 %v4501, %v4500
  %v4539 = vsel %vm3964, %v3596, 0
  %v4542 = vsel %vm3964, %v3599, 0
  %v4545 = vsel %vm3964, %v3602, 0
  %v4548 = vsel %vm3964, %v3605, 0
  %v4551 = vsel %vm3964, %v3608, 0
  %v4554 = vsel %vm3964, %v3611, 0
  %v4557 = vsel %vm3964, %v3614, 0
  %v4560 = vsel %vm3964, %v3617, 0
  %v4563 = vsel %vm3964, %v3620, 0
  %v4566 = vsel %vm3964, %v3623, 0
  %v4569 = vsel %vm3964, %v3626, 0
  %v4572 = vsel %vm3964, %v3629, 0
  %v4575 = vsel %vm3964, %v3632, 0
  %v4578 = vsel %vm3964, %v3635, 0
  %v4581 = vsel %vm3964, %v3638, 0
  %v4584 = vsel %vm3964, %v3641, 0
  %v4587 = vsel %vm3964, %v3644, 0
  %v4590 = vsel %vm3964, %v3647, 0
  %v4593 = vsel %vm3964, %v3650, 0
  %v4596 = vsel %vm3964, %v3653, 0
  %v4599 = vsel %vm3964, %v3656, 0
  %4601 = vmatprep.subr.bf16.mxu0 0
  %4602 = vmatpush1.bf16.msra.mxu0 %v4502
  %4603 = vmatprep.subr.bf16.mxu0 0
  %4604 = vmatpush1.bf16.msra.mxu0 %v4503
  %4605 = vmatprep.subr.bf16.mxu0 0
  %4606 = vmatpush1.bf16.msra.mxu0 %v4504
  %4607 = vmatprep.subr.bf16.mxu0 0
  %4608 = vmatpush1.bf16.msra.mxu0 %v4505
  %4609 = vmatprep.subr.bf16.mxu0 0
  %4610 = vmatpush1.bf16.msra.mxu0 %v4506
  %4611 = vmatprep.subr.bf16.mxu0 0
  %4612 = vmatpush1.bf16.msra.mxu0 %v4507
  %4613 = vmatprep.subr.bf16.mxu0 0
  %4614 = vmatpush1.bf16.msra.mxu0 %v4508
  %4615 = vmatprep.subr.bf16.mxu0 0
  %4616 = vmatpush1.bf16.msra.mxu0 %v4509
  %4617 = vmatprep.subr.bf16.mxu0 0
  %4618 = vmatpush1.bf16.msra.mxu0 %v4510
  %4619 = vmatprep.subr.bf16.mxu0 0
  %4620 = vmatpush1.bf16.msra.mxu0 %v4511
  %4621 = vmatprep.subr.bf16.mxu0 0
  %4622 = vmatpush1.bf16.msra.mxu0 %v4512
  %4623 = vmatprep.subr.bf16.mxu0 0
  %4624 = vmatpush1.bf16.msra.mxu0 %v4513
  %4625 = vmatprep.subr.bf16.mxu0 0
  %4626 = vmatpush1.bf16.msra.mxu0 %v4514
  %4627 = vmatprep.subr.bf16.mxu0 0
  %4628 = vmatpush1.bf16.msra.mxu0 %v4515
  %4629 = vmatprep.subr.bf16.mxu0 0
  %4630 = vmatpush1.bf16.msra.mxu0 %v4516
  %4631 = vmatprep.subr.bf16.mxu0 0
  %4632 = vmatpush1.bf16.msra.mxu0 %v4517
  %4633 = vmatprep.mubr.bf16.mxu0 %v3595
  %4634 = vmatmul.mubr.bf16.gmra.mrb[0].mxu0 %v3594
  %v4635 = vpop.f32.mrb[0].mxu0
  %v4636 = vadd.f32 %v4264, %v4635
  %v4637 = vpop.f32.mrb[0].mxu0
  %v4638 = vpop.f32.mrb[0].mxu0
  %v4639 = vadd.f32 %v4267, %v4638
  %v4640 = vpop.f32.mrb[0].mxu0
  %4641 = vmatprep.mubr.bf16.mxu0 %v3598
  %4642 = vmatmul.mubr.bf16.gmra.mrb[0].mxu0 %v3597
  %v4643 = vpop.f32.mrb[0].mxu0
  %v4644 = vadd.f32 %v4272, %v4643
  %v4645 = vpop.f32.mrb[0].mxu0
  %v4646 = vpop.f32.mrb[0].mxu0
  %v4647 = vadd.f32 %v4275, %v4646
  %v4648 = vpop.f32.mrb[0].mxu0
  %4649 = vmatprep.mubr.bf16.mxu0 %v3601
  %4650 = vmatmul.mubr.bf16.gmra.mrb[0].mxu0 %v3600
  %v4651 = vpop.f32.mrb[0].mxu0
  %v4652 = vadd.f32 %v4280, %v4651
  %v4653 = vpop.f32.mrb[0].mxu0
  %v4654 = vpop.f32.mrb[0].mxu0
  %v4655 = vadd.f32 %v4283, %v4654
  %v4656 = vpop.f32.mrb[0].mxu0
  %4657 = vmatprep.mubr.bf16.mxu0 %v3604
  %4658 = vmatmul.mubr.bf16.gmra.mrb[0].mxu0 %v3603
  %v4659 = vpop.f32.mrb[0].mxu0
  %v4660 = vadd.f32 %v4288, %v4659
  %v4661 = vpop.f32.mrb[0].mxu0
  %v4662 = vpop.f32.mrb[0].mxu0
  %v4663 = vadd.f32 %v4291, %v4662
  %v4664 = vpop.f32.mrb[0].mxu0
  %4665 = vmatprep.mubr.bf16.mxu0 %v3607
  %4666 = vmatmul.mubr.bf16.gmra.mrb[0].mxu0 %v3606
  %v4667 = vpop.f32.mrb[0].mxu0
  %v4668 = vadd.f32 %v4296, %v4667
  %v4669 = vpop.f32.mrb[0].mxu0
  %v4670 = vpop.f32.mrb[0].mxu0
  %v4671 = vadd.f32 %v4299, %v4670
  %v4672 = vpop.f32.mrb[0].mxu0
  %4673 = vmatprep.mubr.bf16.mxu0 %v3610
  %4674 = vmatmul.mubr.bf16.gmra.mrb[0].mxu0 %v3609
  %v4675 = vpop.f32.mrb[0].mxu0
  %v4676 = vadd.f32 %v4304, %v4675
  %v4677 = vpop.f32.mrb[0].mxu0
  %v4678 = vpop.f32.mrb[0].mxu0
  %v4679 = vadd.f32 %v4307, %v4678
  %v4680 = vpop.f32.mrb[0].mxu0
  %4681 = vmatprep.mubr.bf16.mxu0 %v3613
  %4682 = vmatmul.mubr.bf16.gmra.mrb[0].mxu0 %v3612
  %v4683 = vpop.f32.mrb[0].mxu0
  %v4684 = vadd.f32 %v4312, %v4683
  %v4685 = vpop.f32.mrb[0].mxu0
  %v4686 = vpop.f32.mrb[0].mxu0
  %v4687 = vadd.f32 %v4315, %v4686
  %v4688 = vpop.f32.mrb[0].mxu0
  %4689 = vmatprep.mubr.bf16.mxu0 %v3616
  %4690 = vmatmul.mubr.bf16.gmra.mrb[0].mxu0 %v3615
  %v4691 = vpop.f32.mrb[0].mxu0
  %v4692 = vadd.f32 %v4320, %v4691
  %v4693 = vpop.f32.mrb[0].mxu0
  %v4694 = vpop.f32.mrb[0].mxu0
  %v4695 = vadd.f32 %v4323, %v4694
  %v4696 = vpop.f32.mrb[0].mxu0
  %4697 = vmatprep.mubr.bf16.mxu0 %v3619
  %4698 = vmatmul.mubr.bf16.gmra.mrb[0].mxu0 %v3618
  %v4699 = vpop.f32.mrb[0].mxu0
  %v4700 = vadd.f32 %v4328, %v4699
  %v4701 = vpop.f32.mrb[0].mxu0
  %v4702 = vpop.f32.mrb[0].mxu0
  %v4703 = vadd.f32 %v4331, %v4702
  %v4704 = vpop.f32.mrb[0].mxu0
  %4705 = vmatprep.mubr.bf16.mxu0 %v3622
  %4706 = vmatmul.mubr.bf16.gmra.mrb[0].mxu0 %v3621
  %v4707 = vpop.f32.mrb[0].mxu0
  %v4708 = vadd.f32 %v4336, %v4707
  %v4709 = vpop.f32.mrb[0].mxu0
  %v4710 = vpop.f32.mrb[0].mxu0
  %v4711 = vadd.f32 %v4339, %v4710
  %v4712 = vpop.f32.mrb[0].mxu0
  %4713 = vmatprep.mubr.bf16.mxu0 %v3625
  %4714 = vmatmul.mubr.bf16.gmra.mrb[0].mxu0 %v3624
  %v4715 = vpop.f32.mrb[0].mxu0
  %v4716 = vadd.f32 %v4344, %v4715
  %v4717 = vpop.f32.mrb[0].mxu0
  %v4718 = vpop.f32.mrb[0].mxu0
  %v4719 = vadd.f32 %v4347, %v4718
  %v4720 = vpop.f32.mrb[0].mxu0
  %4721 = vmatprep.mubr.bf16.mxu0 %v3628
  %4722 = vmatmul.mubr.bf16.gmra.mrb[0].mxu0 %v3627
  %v4723 = vpop.f32.mrb[0].mxu0
  %v4724 = vadd.f32 %v4352, %v4723
  %v4725 = vpop.f32.mrb[0].mxu0
  %v4726 = vpop.f32.mrb[0].mxu0
  %v4727 = vadd.f32 %v4355, %v4726
  %v4728 = vpop.f32.mrb[0].mxu0
  %4729 = vmatprep.mubr.bf16.mxu0 %v3631
  %4730 = vmatmul.mubr.bf16.gmra.mrb[0].mxu0 %v3630
  %v4731 = vpop.f32.mrb[0].mxu0
  %v4732 = vadd.f32 %v4360, %v4731
  %v4733 = vpop.f32.mrb[0].mxu0
  %v4734 = vpop.f32.mrb[0].mxu0
  %v4735 = vadd.f32 %v4363, %v4734
  %v4736 = vpop.f32.mrb[0].mxu0
  %4737 = vmatprep.mubr.bf16.mxu0 %v3634
  %4738 = vmatmul.mubr.bf16.gmra.mrb[0].mxu0 %v3633
  %v4739 = vpop.f32.mrb[0].mxu0
  %v4740 = vadd.f32 %v4368, %v4739
  %v4741 = vpop.f32.mrb[0].mxu0
  %v4742 = vpop.f32.mrb[0].mxu0
  %v4743 = vadd.f32 %v4371, %v4742
  %v4744 = vpop.f32.mrb[0].mxu0
  %4745 = vmatprep.mubr.bf16.mxu0 %v3637
  %4746 = vmatmul.mubr.bf16.gmra.mrb[0].mxu0 %v3636
  %v4747 = vpop.f32.mrb[0].mxu0
  %v4748 = vadd.f32 %v4376, %v4747
  %v4749 = vpop.f32.mrb[0].mxu0
  %v4750 = vpop.f32.mrb[0].mxu0
  %v4751 = vadd.f32 %v4379, %v4750
  %v4752 = vpop.f32.mrb[0].mxu0
  %4753 = vmatprep.mubr.bf16.mxu0 %v3640
  %4754 = vmatmul.mubr.bf16.gmra.mrb[0].mxu0 %v3639
  %v4755 = vpop.f32.mrb[0].mxu0
  %v4756 = vadd.f32 %v4384, %v4755
  %v4757 = vpop.f32.mrb[0].mxu0
  %v4758 = vpop.f32.mrb[0].mxu0
  %v4759 = vadd.f32 %v4387, %v4758
  %v4760 = vpop.f32.mrb[0].mxu0
  %4761 = vmatprep.mubr.bf16.mxu0 %v3643
  %4762 = vmatmul.mubr.bf16.gmra.mrb[0].mxu0 %v3642
  %v4763 = vpop.f32.mrb[0].mxu0
  %v4764 = vadd.f32 %v4392, %v4763
  %v4765 = vpop.f32.mrb[0].mxu0
  %v4766 = vpop.f32.mrb[0].mxu0
  %v4767 = vadd.f32 %v4395, %v4766
  %v4768 = vpop.f32.mrb[0].mxu0
  %4769 = vmatprep.mubr.bf16.mxu0 %v3646
  %4770 = vmatmul.mubr.bf16.gmra.mrb[0].mxu0 %v3645
  %v4771 = vpop.f32.mrb[0].mxu0
  %v4772 = vadd.f32 %v4400, %v4771
  %v4773 = vpop.f32.mrb[0].mxu0
  %v4774 = vpop.f32.mrb[0].mxu0
  %v4775 = vadd.f32 %v4403, %v4774
  %v4776 = vpop.f32.mrb[0].mxu0
  %4777 = vmatprep.mubr.bf16.mxu0 %v3649
  %4778 = vmatmul.mubr.bf16.gmra.mrb[0].mxu0 %v3648
  %v4779 = vpop.f32.mrb[0].mxu0
  %v4780 = vadd.f32 %v4408, %v4779
  %v4781 = vpop.f32.mrb[0].mxu0
  %v4782 = vpop.f32.mrb[0].mxu0
  %v4783 = vadd.f32 %v4411, %v4782
  %v4784 = vpop.f32.mrb[0].mxu0
  %4785 = vmatprep.mubr.bf16.mxu0 %v3652
  %4786 = vmatmul.mubr.bf16.gmra.mrb[0].mxu0 %v3651
  %v4787 = vpop.f32.mrb[0].mxu0
  %v4788 = vadd.f32 %v4416, %v4787
  %v4789 = vpop.f32.mrb[0].mxu0
  %v4790 = vpop.f32.mrb[0].mxu0
  %v4791 = vadd.f32 %v4419, %v4790
  %v4792 = vpop.f32.mrb[0].mxu0
  %4793 = vmatprep.mubr.bf16.mxu0 %v3655
  %4794 = vmatmul.mubr.bf16.gmra.mrb[0].mxu0 %v3654
  %v4795 = vpop.f32.mrb[0].mxu0
  %v4796 = vadd.f32 %v4424, %v4795
  %v4797 = vpop.f32.mrb[0].mxu0
  %v4798 = vpop.f32.mrb[0].mxu0
  %v4799 = vadd.f32 %v4427, %v4798
  %v4800 = vpop.f32.mrb[0].mxu0
  %4801 = vdwg.mxu0
  %4802 = vmatprep.subr.bf16.mxu0 0
  %4803 = vmatpush1.bf16.msra.mxu0 %v4518
  %4804 = vmatprep.subr.bf16.mxu0 0
  %4805 = vmatpush1.bf16.msra.mxu0 %v4519
  %4806 = vmatprep.subr.bf16.mxu0 0
  %4807 = vmatpush1.bf16.msra.mxu0 0
  %4808 = vmatprep.subr.bf16.mxu0 0
  %4809 = vmatpush1.bf16.msra.mxu0 0
  %4810 = vmatprep.subr.bf16.mxu0 0
  %4811 = vmatpush1.bf16.msra.mxu0 0
  %4812 = vmatprep.subr.bf16.mxu0 0
  %4813 = vmatpush1.bf16.msra.mxu0 0
  %4814 = vmatprep.subr.bf16.mxu0 0
  %4815 = vmatpush1.bf16.msra.mxu0 0
  %4816 = vmatprep.subr.bf16.mxu0 0
  %4817 = vmatpush1.bf16.msra.mxu0 0
  %4818 = vmatprep.subr.bf16.mxu0 0
  %4819 = vmatpush1.bf16.msra.mxu0 0
  %4820 = vmatprep.subr.bf16.mxu0 0
  %4821 = vmatpush1.bf16.msra.mxu0 0
  %4822 = vmatprep.subr.bf16.mxu0 0
  %4823 = vmatpush1.bf16.msra.mxu0 0
  %4824 = vmatprep.subr.bf16.mxu0 0
  %4825 = vmatpush1.bf16.msra.mxu0 0
  %4826 = vmatprep.subr.bf16.mxu0 0
  %4827 = vmatpush1.bf16.msra.mxu0 0
  %4828 = vmatprep.subr.bf16.mxu0 0
  %4829 = vmatpush1.bf16.msra.mxu0 0
  %4830 = vmatprep.subr.bf16.mxu0 0
  %4831 = vmatpush1.bf16.msra.mxu0 0
  %4832 = vmatprep.subr.bf16.mxu0 0
  %4833 = vmatpush1.bf16.msra.mxu0 0
  %4834 = vmatprep.mubr.bf16.mxu0 0
  %4835 = vmatmul.mubr.bf16.gmra.mrb[0].mxu0 %v4539
  %v4836 = vpop.f32.mrb[0].mxu0
  %v4837 = vadd.f32 %v4636, %v4836
  %v4838 = vpop.f32.mrb[0].mxu0
  %v4839 = vpop.f32.mrb[0].mxu0
  %v4840 = vadd.f32 %v4639, %v4839
  %v4841 = vpop.f32.mrb[0].mxu0
  %4842 = vmatprep.mubr.bf16.mxu0 0
  %4843 = vmatmul.mubr.bf16.gmra.mrb[0].mxu0 %v4542
  %v4844 = vpop.f32.mrb[0].mxu0
  %v4845 = vadd.f32 %v4644, %v4844
  %v4846 = vpop.f32.mrb[0].mxu0
  %v4847 = vpop.f32.mrb[0].mxu0
  %v4848 = vadd.f32 %v4647, %v4847
  %v4849 = vpop.f32.mrb[0].mxu0
  %4850 = vmatprep.mubr.bf16.mxu0 0
  %4851 = vmatmul.mubr.bf16.gmra.mrb[0].mxu0 %v4545
  %v4852 = vpop.f32.mrb[0].mxu0
  %v4853 = vadd.f32 %v4652, %v4852
  %v4854 = vpop.f32.mrb[0].mxu0
  %v4855 = vpop.f32.mrb[0].mxu0
  %v4856 = vadd.f32 %v4655, %v4855
  %v4857 = vpop.f32.mrb[0].mxu0
  %4858 = vmatprep.mubr.bf16.mxu0 0
  %4859 = vmatmul.mubr.bf16.gmra.mrb[0].mxu0 %v4548
  %v4860 = vpop.f32.mrb[0].mxu0
  %v4861 = vadd.f32 %v4660, %v4860
  %v4862 = vpop.f32.mrb[0].mxu0
  %v4863 = vpop.f32.mrb[0].mxu0
  %v4864 = vadd.f32 %v4663, %v4863
  %v4865 = vpop.f32.mrb[0].mxu0
  %4866 = vmatprep.mubr.bf16.mxu0 0
  %4867 = vmatmul.mubr.bf16.gmra.mrb[0].mxu0 %v4551
  %v4868 = vpop.f32.mrb[0].mxu0
  %v4869 = vadd.f32 %v4668, %v4868
  %v4870 = vpop.f32.mrb[0].mxu0
  %v4871 = vpop.f32.mrb[0].mxu0
  %v4872 = vadd.f32 %v4671, %v4871
  %v4873 = vpop.f32.mrb[0].mxu0
  %4874 = vmatprep.mubr.bf16.mxu0 0
  %4875 = vmatmul.mubr.bf16.gmra.mrb[0].mxu0 %v4554
  %v4876 = vpop.f32.mrb[0].mxu0
  %v4877 = vadd.f32 %v4676, %v4876
  %v4878 = vpop.f32.mrb[0].mxu0
  %v4879 = vpop.f32.mrb[0].mxu0
  %v4880 = vadd.f32 %v4679, %v4879
  %v4881 = vpop.f32.mrb[0].mxu0
  %4882 = vmatprep.mubr.bf16.mxu0 0
  %4883 = vmatmul.mubr.bf16.gmra.mrb[0].mxu0 %v4557
  %v4884 = vpop.f32.mrb[0].mxu0
  %v4885 = vadd.f32 %v4684, %v4884
  %v4886 = vpop.f32.mrb[0].mxu0
  %v4887 = vpop.f32.mrb[0].mxu0
  %v4888 = vadd.f32 %v4687, %v4887
  %v4889 = vpop.f32.mrb[0].mxu0
  %4890 = vmatprep.mubr.bf16.mxu0 0
  %4891 = vmatmul.mubr.bf16.gmra.mrb[0].mxu0 %v4560
  %v4892 = vpop.f32.mrb[0].mxu0
  %v4893 = vadd.f32 %v4692, %v4892
  %v4894 = vpop.f32.mrb[0].mxu0
  %v4895 = vpop.f32.mrb[0].mxu0
  %v4896 = vadd.f32 %v4695, %v4895
  %v4897 = vpop.f32.mrb[0].mxu0
  %4898 = vmatprep.mubr.bf16.mxu0 0
  %4899 = vmatmul.mubr.bf16.gmra.mrb[0].mxu0 %v4563
  %v4900 = vpop.f32.mrb[0].mxu0
  %v4901 = vadd.f32 %v4700, %v4900
  %v4902 = vpop.f32.mrb[0].mxu0
  %v4903 = vpop.f32.mrb[0].mxu0
  %v4904 = vadd.f32 %v4703, %v4903
  %v4905 = vpop.f32.mrb[0].mxu0
  %4906 = vmatprep.mubr.bf16.mxu0 0
  %4907 = vmatmul.mubr.bf16.gmra.mrb[0].mxu0 %v4566
  %v4908 = vpop.f32.mrb[0].mxu0
  %v4909 = vadd.f32 %v4708, %v4908
  %v4910 = vpop.f32.mrb[0].mxu0
  %v4911 = vpop.f32.mrb[0].mxu0
  %v4912 = vadd.f32 %v4711, %v4911
  %v4913 = vpop.f32.mrb[0].mxu0
  %4914 = vmatprep.mubr.bf16.mxu0 0
  %4915 = vmatmul.mubr.bf16.gmra.mrb[0].mxu0 %v4569
  %v4916 = vpop.f32.mrb[0].mxu0
  %v4917 = vadd.f32 %v4716, %v4916
  %v4918 = vpop.f32.mrb[0].mxu0
  %v4919 = vpop.f32.mrb[0].mxu0
  %v4920 = vadd.f32 %v4719, %v4919
  %v4921 = vpop.f32.mrb[0].mxu0
  %4922 = vmatprep.mubr.bf16.mxu0 0
  %4923 = vmatmul.mubr.bf16.gmra.mrb[0].mxu0 %v4572
  %v4924 = vpop.f32.mrb[0].mxu0
  %v4925 = vadd.f32 %v4724, %v4924
  %v4926 = vpop.f32.mrb[0].mxu0
  %v4927 = vpop.f32.mrb[0].mxu0
  %v4928 = vadd.f32 %v4727, %v4927
  %v4929 = vpop.f32.mrb[0].mxu0
  %4930 = vmatprep.mubr.bf16.mxu0 0
  %4931 = vmatmul.mubr.bf16.gmra.mrb[0].mxu0 %v4575
  %v4932 = vpop.f32.mrb[0].mxu0
  %v4933 = vadd.f32 %v4732, %v4932
  %v4934 = vpop.f32.mrb[0].mxu0
  %v4935 = vpop.f32.mrb[0].mxu0
  %v4936 = vadd.f32 %v4735, %v4935
  %v4937 = vpop.f32.mrb[0].mxu0
  %4938 = vmatprep.mubr.bf16.mxu0 0
  %4939 = vmatmul.mubr.bf16.gmra.mrb[0].mxu0 %v4578
  %v4940 = vpop.f32.mrb[0].mxu0
  %v4941 = vadd.f32 %v4740, %v4940
  %v4942 = vpop.f32.mrb[0].mxu0
  %v4943 = vpop.f32.mrb[0].mxu0
  %v4944 = vadd.f32 %v4743, %v4943
  %v4945 = vpop.f32.mrb[0].mxu0
  %4946 = vmatprep.mubr.bf16.mxu0 0
  %4947 = vmatmul.mubr.bf16.gmra.mrb[0].mxu0 %v4581
  %v4948 = vpop.f32.mrb[0].mxu0
  %v4949 = vadd.f32 %v4748, %v4948
  %v4950 = vpop.f32.mrb[0].mxu0
  %v4951 = vpop.f32.mrb[0].mxu0
  %v4952 = vadd.f32 %v4751, %v4951
  %v4953 = vpop.f32.mrb[0].mxu0
  %4954 = vmatprep.mubr.bf16.mxu0 0
  %4955 = vmatmul.mubr.bf16.gmra.mrb[0].mxu0 %v4584
  %v4956 = vpop.f32.mrb[0].mxu0
  %v4957 = vadd.f32 %v4756, %v4956
  %v4958 = vpop.f32.mrb[0].mxu0
  %v4959 = vpop.f32.mrb[0].mxu0
  %v4960 = vadd.f32 %v4759, %v4959
  %v4961 = vpop.f32.mrb[0].mxu0
  %4962 = vmatprep.mubr.bf16.mxu0 0
  %4963 = vmatmul.mubr.bf16.gmra.mrb[0].mxu0 %v4587
  %v4964 = vpop.f32.mrb[0].mxu0
  %v4965 = vadd.f32 %v4764, %v4964
  %v4966 = vpop.f32.mrb[0].mxu0
  %v4967 = vpop.f32.mrb[0].mxu0
  %v4968 = vadd.f32 %v4767, %v4967
  %v4969 = vpop.f32.mrb[0].mxu0
  %4970 = vmatprep.mubr.bf16.mxu0 0
  %4971 = vmatmul.mubr.bf16.gmra.mrb[0].mxu0 %v4590
  %v4972 = vpop.f32.mrb[0].mxu0
  %v4973 = vadd.f32 %v4772, %v4972
  %v4974 = vpop.f32.mrb[0].mxu0
  %v4975 = vpop.f32.mrb[0].mxu0
  %v4976 = vadd.f32 %v4775, %v4975
  %v4977 = vpop.f32.mrb[0].mxu0
  %4978 = vmatprep.mubr.bf16.mxu0 0
  %4979 = vmatmul.mubr.bf16.gmra.mrb[0].mxu0 %v4593
  %v4980 = vpop.f32.mrb[0].mxu0
  %v4981 = vadd.f32 %v4780, %v4980
  %v4982 = vpop.f32.mrb[0].mxu0
  %v4983 = vpop.f32.mrb[0].mxu0
  %v4984 = vadd.f32 %v4783, %v4983
  %v4985 = vpop.f32.mrb[0].mxu0
  %4986 = vmatprep.mubr.bf16.mxu0 0
  %4987 = vmatmul.mubr.bf16.gmra.mrb[0].mxu0 %v4596
  %v4988 = vpop.f32.mrb[0].mxu0
  %v4989 = vadd.f32 %v4788, %v4988
  %v4990 = vpop.f32.mrb[0].mxu0
  %v4991 = vpop.f32.mrb[0].mxu0
  %v4992 = vadd.f32 %v4791, %v4991
  %v4993 = vpop.f32.mrb[0].mxu0
  %4994 = vmatprep.mubr.bf16.mxu0 0
  %4995 = vmatmul.mubr.bf16.gmra.mrb[0].mxu0 %v4599
  %v4996 = vpop.f32.mrb[0].mxu0
  %v4997 = vadd.f32 %v4796, %v4996
  %v4998 = vpop.f32.mrb[0].mxu0
  %v4999 = vpop.f32.mrb[0].mxu0
  %v5000 = vadd.f32 %v4799, %v4999
  %v5001 = vpop.f32.mrb[0].mxu0
  %5002 = vdwg.mxu0
  %s5003 = scalar_lea.vmem %s3, 288
  %v5004 = vld [vmem:[%s5003] sm:$0xf]
  %v5005 = vld [vmem:[%s5003 + $0x4] sm:$0xf]
  %v5006 = vld [vmem:[%s5003 + $0x8] sm:$0xf]
  %v5007 = vld [vmem:[%s5003 + $0xc] sm:$0xf]
  %v5008 = vld [vmem:[%s5003 + $0x10] sm:$0xf]
  %v5009 = vld [vmem:[%s5003 + $0x14] sm:$0xf]
  %v5010 = vld [vmem:[%s5003 + $0x18] sm:$0xf]
  %v5011 = vld [vmem:[%s5003 + $0x1c] sm:$0xf]
  %v5012 = vld [vmem:[%s5003 + $0x20] sm:$0xf]
  %v5013 = vld [vmem:[%s5003 + $0x24] sm:$0xf]
  %v5014 = vld [vmem:[%s5003 + $0x28] sm:$0xf]
  %v5015 = vld [vmem:[%s5003 + $0x2c] sm:$0xf]
  %v5016 = vld [vmem:[%s5003 + $0x30] sm:$0xf]
  %v5017 = vld [vmem:[%s5003 + $0x34] sm:$0xf]
  %v5018 = vld [vmem:[%s5003 + $0x38] sm:$0xf]
  %v5019 = vld [vmem:[%s5003 + $0x3c] sm:$0xf]
  %v5020 = vld [vmem:[%s5003 + $0x40] sm:$0xf]
  %v5021 = vld [vmem:[%s5003 + $0x44] sm:$0xf]
  %v5022 = vld [vmem:[%s5003 + $0x48] sm:$0xf]
  %v5023 = vld [vmem:[%s5003 + $0x4c] sm:$0xf]
  %v5024 = vld [vmem:[%s5003 + $0x50] sm:$0xf]
  %v5025 = vld [vmem:[%s5003 + $0x54] sm:$0xf]
  %v5026 = vld [vmem:[%s5003 + $0x58] sm:$0xf]
  %v5027 = vld [vmem:[%s5003 + $0x5c] sm:$0xf]
  %v5028 = vld [vmem:[%s5003 + $0x60] sm:$0xf]
  %v5029 = vld [vmem:[%s5003 + $0x64] sm:$0xf]
  %v5030 = vld [vmem:[%s5003 + $0x68] sm:$0xf]
  %v5031 = vld [vmem:[%s5003 + $0x6c] sm:$0xf]
  %v5032 = vld [vmem:[%s5003 + $0x70] sm:$0xf]
  %v5033 = vld [vmem:[%s5003 + $0x74] sm:$0xf]
  %v5034 = vld [vmem:[%s5003 + $0x78] sm:$0xf]
  %v5035 = vld [vmem:[%s5003 + $0x7c] sm:$0xf]
  %v5036 = vld [vmem:[%s5003 + $0x80] sm:$0xf]
  %v5037 = vld [vmem:[%s5003 + $0x84] sm:$0xf]
  %v5038 = vld [vmem:[%s5003 + $0x88] sm:$0xf]
  %v5039 = vld [vmem:[%s5003 + $0x8c] sm:$0xf]
  %v5076 = vunpack.c.l.b16 %v5004
  %v5077 = vunpack.c.l.b16 %v5005
  %v5078 = vunpack.c.l.b16 %v5006
  %v5079 = vunpack.c.l.b16 %v5007
  %v5080 = vunpack.c.l.b16 %v5008
  %v5081 = vunpack.c.l.b16 %v5009
  %v5082 = vunpack.c.l.b16 %v5010
  %v5083 = vunpack.c.l.b16 %v5011
  %v5084 = vunpack.c.l.b16 %v5012
  %v5085 = vunpack.c.l.b16 %v5013
  %v5086 = vunpack.c.l.b16 %v5014
  %v5087 = vunpack.c.l.b16 %v5015
  %v5088 = vunpack.c.l.b16 %v5016
  %v5089 = vunpack.c.l.b16 %v5017
  %v5090 = vunpack.c.l.b16 %v5018
  %v5091 = vunpack.c.l.b16 %v5019
  %v5092 = vunpack.c.l.b16 %v5020
  %v5093 = vunpack.c.l.b16 %v5021
  %v5094 = vunpack.c.l.b16 %v5022
  %v5095 = vunpack.c.l.b16 %v5023
  %v5096 = vunpack.c.l.b16 %v5024
  %v5097 = vunpack.c.l.b16 %v5025
  %v5098 = vunpack.c.l.b16 %v5026
  %v5099 = vunpack.c.l.b16 %v5027
  %v5100 = vunpack.c.l.b16 %v5028
  %v5101 = vunpack.c.l.b16 %v5029
  %v5102 = vunpack.c.l.b16 %v5030
  %v5103 = vunpack.c.l.b16 %v5031
  %v5104 = vunpack.c.l.b16 %v5032
  %v5105 = vunpack.c.l.b16 %v5033
  %v5106 = vunpack.c.l.b16 %v5034
  %v5107 = vunpack.c.l.b16 %v5035
  %v5108 = vunpack.c.l.b16 %v5036
  %v5109 = vunpack.c.l.b16 %v5037
  %v5110 = vunpack.c.l.b16 %v5038
  %v5111 = vunpack.c.l.b16 %v5039
  %v5112 = vpack.c.b16 %v5077, %v5076
  %v5113 = vpack.c.b16 %v5079, %v5078
  %v5114 = vpack.c.b16 %v5081, %v5080
  %v5115 = vpack.c.b16 %v5083, %v5082
  %v5116 = vpack.c.b16 %v5085, %v5084
  %v5117 = vpack.c.b16 %v5087, %v5086
  %v5118 = vpack.c.b16 %v5089, %v5088
  %v5119 = vpack.c.b16 %v5091, %v5090
  %v5120 = vpack.c.b16 %v5093, %v5092
  %v5121 = vpack.c.b16 %v5095, %v5094
  %v5122 = vpack.c.b16 %v5097, %v5096
  %v5123 = vpack.c.b16 %v5099, %v5098
  %v5124 = vpack.c.b16 %v5101, %v5100
  %v5125 = vpack.c.b16 %v5103, %v5102
  %v5126 = vpack.c.b16 %v5105, %v5104
  %v5127 = vpack.c.b16 %v5107, %v5106
  %v5128 = vpack.c.b16 %v5109, %v5108
  %v5129 = vpack.c.b16 %v5111, %v5110
  %v5149 = vsel %vm3964, %v3722, 0
  %v5152 = vsel %vm3964, %v3725, 0
  %v5155 = vsel %vm3964, %v3728, 0
  %v5158 = vsel %vm3964, %v3731, 0
  %v5161 = vsel %vm3964, %v3734, 0
  %v5164 = vsel %vm3964, %v3737, 0
  %v5167 = vsel %vm3964, %v3740, 0
  %v5170 = vsel %vm3964, %v3743, 0
  %v5173 = vsel %vm3964, %v3746, 0
  %v5176 = vsel %vm3964, %v3749, 0
  %v5179 = vsel %vm3964, %v3752, 0
  %v5182 = vsel %vm3964, %v3755, 0
  %v5185 = vsel %vm3964, %v3758, 0
  %v5188 = vsel %vm3964, %v3761, 0
  %v5191 = vsel %vm3964, %v3764, 0
  %v5194 = vsel %vm3964, %v3767, 0
  %v5197 = vsel %vm3964, %v3770, 0
  %v5200 = vsel %vm3964, %v3773, 0
  %v5203 = vsel %vm3964, %v3776, 0
  %v5206 = vsel %vm3964, %v3779, 0
  %v5209 = vsel %vm3964, %v3782, 0
  %5211 = vmatprep.subr.bf16.mxu0 0
  %5212 = vmatpush1.bf16.msra.mxu0 %v5112
  %5213 = vmatprep.subr.bf16.mxu0 0
  %5214 = vmatpush1.bf16.msra.mxu0 %v5113
  %5215 = vmatprep.subr.bf16.mxu0 0
  %5216 = vmatpush1.bf16.msra.mxu0 %v5114
  %5217 = vmatprep.subr.bf16.mxu0 0
  %5218 = vmatpush1.bf16.msra.mxu0 %v5115
  %5219 = vmatprep.subr.bf16.mxu0 0
  %5220 = vmatpush1.bf16.msra.mxu0 %v5116
  %5221 = vmatprep.subr.bf16.mxu0 0
  %5222 = vmatpush1.bf16.msra.mxu0 %v5117
  %5223 = vmatprep.subr.bf16.mxu0 0
  %5224 = vmatpush1.bf16.msra.mxu0 %v5118
  %5225 = vmatprep.subr.bf16.mxu0 0
  %5226 = vmatpush1.bf16.msra.mxu0 %v5119
  %5227 = vmatprep.subr.bf16.mxu0 0
  %5228 = vmatpush1.bf16.msra.mxu0 %v5120
  %5229 = vmatprep.subr.bf16.mxu0 0
  %5230 = vmatpush1.bf16.msra.mxu0 %v5121
  %5231 = vmatprep.subr.bf16.mxu0 0
  %5232 = vmatpush1.bf16.msra.mxu0 %v5122
  %5233 = vmatprep.subr.bf16.mxu0 0
  %5234 = vmatpush1.bf16.msra.mxu0 %v5123
  %5235 = vmatprep.subr.bf16.mxu0 0
  %5236 = vmatpush1.bf16.msra.mxu0 %v5124
  %5237 = vmatprep.subr.bf16.mxu0 0
  %5238 = vmatpush1.bf16.msra.mxu0 %v5125
  %5239 = vmatprep.subr.bf16.mxu0 0
  %5240 = vmatpush1.bf16.msra.mxu0 %v5126
  %5241 = vmatprep.subr.bf16.mxu0 0
  %5242 = vmatpush1.bf16.msra.mxu0 %v5127
  %5243 = vmatprep.mubr.bf16.mxu0 %v3721
  %5244 = vmatmul.mubr.bf16.gmra.mrb[0].mxu0 %v3720
  %v5245 = vpop.f32.mrb[0].mxu0
  %v5246 = vadd.f32 0.0, %v5245
  %v5247 = vpop.f32.mrb[0].mxu0
  %v5248 = vpop.f32.mrb[0].mxu0
  %v5249 = vadd.f32 0.0, %v5248
  %v5250 = vpop.f32.mrb[0].mxu0
  %5251 = vmatprep.mubr.bf16.mxu0 %v3724
  %5252 = vmatmul.mubr.bf16.gmra.mrb[0].mxu0 %v3723
  %v5253 = vpop.f32.mrb[0].mxu0
  %v5254 = vadd.f32 0.0, %v5253
  %v5255 = vpop.f32.mrb[0].mxu0
  %v5256 = vpop.f32.mrb[0].mxu0
  %v5257 = vadd.f32 0.0, %v5256
  %v5258 = vpop.f32.mrb[0].mxu0
  %5259 = vmatprep.mubr.bf16.mxu0 %v3727
  %5260 = vmatmul.mubr.bf16.gmra.mrb[0].mxu0 %v3726
  %v5261 = vpop.f32.mrb[0].mxu0
  %v5262 = vadd.f32 0.0, %v5261
  %v5263 = vpop.f32.mrb[0].mxu0
  %v5264 = vpop.f32.mrb[0].mxu0
  %v5265 = vadd.f32 0.0, %v5264
  %v5266 = vpop.f32.mrb[0].mxu0
  %5267 = vmatprep.mubr.bf16.mxu0 %v3730
  %5268 = vmatmul.mubr.bf16.gmra.mrb[0].mxu0 %v3729
  %v5269 = vpop.f32.mrb[0].mxu0
  %v5270 = vadd.f32 0.0, %v5269
  %v5271 = vpop.f32.mrb[0].mxu0
  %v5272 = vpop.f32.mrb[0].mxu0
  %v5273 = vadd.f32 0.0, %v5272
  %v5274 = vpop.f32.mrb[0].mxu0
  %5275 = vmatprep.mubr.bf16.mxu0 %v3733
  %5276 = vmatmul.mubr.bf16.gmra.mrb[0].mxu0 %v3732
  %v5277 = vpop.f32.mrb[0].mxu0
  %v5278 = vadd.f32 0.0, %v5277
  %v5279 = vpop.f32.mrb[0].mxu0
  %v5280 = vpop.f32.mrb[0].mxu0
  %v5281 = vadd.f32 0.0, %v5280
  %v5282 = vpop.f32.mrb[0].mxu0
  %5283 = vmatprep.mubr.bf16.mxu0 %v3736
  %5284 = vmatmul.mubr.bf16.gmra.mrb[0].mxu0 %v3735
  %v5285 = vpop.f32.mrb[0].mxu0
  %v5286 = vadd.f32 0.0, %v5285
  %v5287 = vpop.f32.mrb[0].mxu0
  %v5288 = vpop.f32.mrb[0].mxu0
  %v5289 = vadd.f32 0.0, %v5288
  %v5290 = vpop.f32.mrb[0].mxu0
  %5291 = vmatprep.mubr.bf16.mxu0 %v3739
  %5292 = vmatmul.mubr.bf16.gmra.mrb[0].mxu0 %v3738
  %v5293 = vpop.f32.mrb[0].mxu0
  %v5294 = vadd.f32 0.0, %v5293
  %v5295 = vpop.f32.mrb[0].mxu0
  %v5296 = vpop.f32.mrb[0].mxu0
  %v5297 = vadd.f32 0.0, %v5296
  %v5298 = vpop.f32.mrb[0].mxu0
  %5299 = vmatprep.mubr.bf16.mxu0 %v3742
  %5300 = vmatmul.mubr.bf16.gmra.mrb[0].mxu0 %v3741
  %v5301 = vpop.f32.mrb[0].mxu0
  %v5302 = vadd.f32 0.0, %v5301
  %v5303 = vpop.f32.mrb[0].mxu0
  %v5304 = vpop.f32.mrb[0].mxu0
  %v5305 = vadd.f32 0.0, %v5304
  %v5306 = vpop.f32.mrb[0].mxu0
  %5307 = vmatprep.mubr.bf16.mxu0 %v3745
  %5308 = vmatmul.mubr.bf16.gmra.mrb[0].mxu0 %v3744
  %v5309 = vpop.f32.mrb[0].mxu0
  %v5310 = vadd.f32 0.0, %v5309
  %v5311 = vpop.f32.mrb[0].mxu0
  %v5312 = vpop.f32.mrb[0].mxu0
  %v5313 = vadd.f32 0.0, %v5312
  %v5314 = vpop.f32.mrb[0].mxu0
  %5315 = vmatprep.mubr.bf16.mxu0 %v3748
  %5316 = vmatmul.mubr.bf16.gmra.mrb[0].mxu0 %v3747
  %v5317 = vpop.f32.mrb[0].mxu0
  %v5318 = vadd.f32 0.0, %v5317
  %v5319 = vpop.f32.mrb[0].mxu0
  %v5320 = vpop.f32.mrb[0].mxu0
  %v5321 = vadd.f32 0.0, %v5320
  %v5322 = vpop.f32.mrb[0].mxu0
  %5323 = vmatprep.mubr.bf16.mxu0 %v3751
  %5324 = vmatmul.mubr.bf16.gmra.mrb[0].mxu0 %v3750
  %v5325 = vpop.f32.mrb[0].mxu0
  %v5326 = vadd.f32 0.0, %v5325
  %v5327 = vpop.f32.mrb[0].mxu0
  %v5328 = vpop.f32.mrb[0].mxu0
  %v5329 = vadd.f32 0.0, %v5328
  %v5330 = vpop.f32.mrb[0].mxu0
  %5331 = vmatprep.mubr.bf16.mxu0 %v3754
  %5332 = vmatmul.mubr.bf16.gmra.mrb[0].mxu0 %v3753
  %v5333 = vpop.f32.mrb[0].mxu0
  %v5334 = vadd.f32 0.0, %v5333
  %v5335 = vpop.f32.mrb[0].mxu0
  %v5336 = vpop.f32.mrb[0].mxu0
  %v5337 = vadd.f32 0.0, %v5336
  %v5338 = vpop.f32.mrb[0].mxu0
  %5339 = vmatprep.mubr.bf16.mxu0 %v3757
  %5340 = vmatmul.mubr.bf16.gmra.mrb[0].mxu0 %v3756
  %v5341 = vpop.f32.mrb[0].mxu0
  %v5342 = vadd.f32 0.0, %v5341
  %v5343 = vpop.f32.mrb[0].mxu0
  %v5344 = vpop.f32.mrb[0].mxu0
  %v5345 = vadd.f32 0.0, %v5344
  %v5346 = vpop.f32.mrb[0].mxu0
  %5347 = vmatprep.mubr.bf16.mxu0 %v3760
  %5348 = vmatmul.mubr.bf16.gmra.mrb[0].mxu0 %v3759
  %v5349 = vpop.f32.mrb[0].mxu0
  %v5350 = vadd.f32 0.0, %v5349
  %v5351 = vpop.f32.mrb[0].mxu0
  %v5352 = vpop.f32.mrb[0].mxu0
  %v5353 = vadd.f32 0.0, %v5352
  %v5354 = vpop.f32.mrb[0].mxu0
  %5355 = vmatprep.mubr.bf16.mxu0 %v3763
  %5356 = vmatmul.mubr.bf16.gmra.mrb[0].mxu0 %v3762
  %v5357 = vpop.f32.mrb[0].mxu0
  %v5358 = vadd.f32 0.0, %v5357
  %v5359 = vpop.f32.mrb[0].mxu0
  %v5360 = vpop.f32.mrb[0].mxu0
  %v5361 = vadd.f32 0.0, %v5360
  %v5362 = vpop.f32.mrb[0].mxu0
  %5363 = vmatprep.mubr.bf16.mxu0 %v3766
  %5364 = vmatmul.mubr.bf16.gmra.mrb[0].mxu0 %v3765
  %v5365 = vpop.f32.mrb[0].mxu0
  %v5366 = vadd.f32 0.0, %v5365
  %v5367 = vpop.f32.mrb[0].mxu0
  %v5368 = vpop.f32.mrb[0].mxu0
  %v5369 = vadd.f32 0.0, %v5368
  %v5370 = vpop.f32.mrb[0].mxu0
  %5371 = vmatprep.mubr.bf16.mxu0 %v3769
  %5372 = vmatmul.mubr.bf16.gmra.mrb[0].mxu0 %v3768
  %v5373 = vpop.f32.mrb[0].mxu0
  %v5374 = vadd.f32 0.0, %v5373
  %v5375 = vpop.f32.mrb[0].mxu0
  %v5376 = vpop.f32.mrb[0].mxu0
  %v5377 = vadd.f32 0.0, %v5376
  %v5378 = vpop.f32.mrb[0].mxu0
  %5379 = vmatprep.mubr.bf16.mxu0 %v3772
  %5380 = vmatmul.mubr.bf16.gmra.mrb[0].mxu0 %v3771
  %v5381 = vpop.f32.mrb[0].mxu0
  %v5382 = vadd.f32 0.0, %v5381
  %v5383 = vpop.f32.mrb[0].mxu0
  %v5384 = vpop.f32.mrb[0].mxu0
  %v5385 = vadd.f32 0.0, %v5384
  %v5386 = vpop.f32.mrb[0].mxu0
  %5387 = vmatprep.mubr.bf16.mxu0 %v3775
  %5388 = vmatmul.mubr.bf16.gmra.mrb[0].mxu0 %v3774
  %v5389 = vpop.f32.mrb[0].mxu0
  %v5390 = vadd.f32 0.0, %v5389
  %v5391 = vpop.f32.mrb[0].mxu0
  %v5392 = vpop.f32.mrb[0].mxu0
  %v5393 = vadd.f32 0.0, %v5392
  %v5394 = vpop.f32.mrb[0].mxu0
  %5395 = vmatprep.mubr.bf16.mxu0 %v3778
  %5396 = vmatmul.mubr.bf16.gmra.mrb[0].mxu0 %v3777
  %v5397 = vpop.f32.mrb[0].mxu0
  %v5398 = vadd.f32 0.0, %v5397
  %v5399 = vpop.f32.mrb[0].mxu0
  %v5400 = vpop.f32.mrb[0].mxu0
  %v5401 = vadd.f32 0.0, %v5400
  %v5402 = vpop.f32.mrb[0].mxu0
  %5403 = vmatprep.mubr.bf16.mxu0 %v3781
  %5404 = vmatmul.mubr.bf16.gmra.mrb[0].mxu0 %v3780
  %v5405 = vpop.f32.mrb[0].mxu0
  %v5406 = vadd.f32 0.0, %v5405
  %v5407 = vpop.f32.mrb[0].mxu0
  %v5408 = vpop.f32.mrb[0].mxu0
  %v5409 = vadd.f32 0.0, %v5408
  %v5410 = vpop.f32.mrb[0].mxu0
  %5411 = vdwg.mxu0
  %5412 = vmatprep.subr.bf16.mxu0 0
  %5413 = vmatpush1.bf16.msra.mxu0 %v5128
  %5414 = vmatprep.subr.bf16.mxu0 0
  %5415 = vmatpush1.bf16.msra.mxu0 %v5129
  %5416 = vmatprep.subr.bf16.mxu0 0
  %5417 = vmatpush1.bf16.msra.mxu0 0
  %5418 = vmatprep.subr.bf16.mxu0 0
  %5419 = vmatpush1.bf16.msra.mxu0 0
  %5420 = vmatprep.subr.bf16.mxu0 0
  %5421 = vmatpush1.bf16.msra.mxu0 0
  %5422 = vmatprep.subr.bf16.mxu0 0
  %5423 = vmatpush1.bf16.msra.mxu0 0
  %5424 = vmatprep.subr.bf16.mxu0 0
  %5425 = vmatpush1.bf16.msra.mxu0 0
  %5426 = vmatprep.subr.bf16.mxu0 0
  %5427 = vmatpush1.bf16.msra.mxu0 0
  %5428 = vmatprep.subr.bf16.mxu0 0
  %5429 = vmatpush1.bf16.msra.mxu0 0
  %5430 = vmatprep.subr.bf16.mxu0 0
  %5431 = vmatpush1.bf16.msra.mxu0 0
  %5432 = vmatprep.subr.bf16.mxu0 0
  %5433 = vmatpush1.bf16.msra.mxu0 0
  %5434 = vmatprep.subr.bf16.mxu0 0
  %5435 = vmatpush1.bf16.msra.mxu0 0
  %5436 = vmatprep.subr.bf16.mxu0 0
  %5437 = vmatpush1.bf16.msra.mxu0 0
  %5438 = vmatprep.subr.bf16.mxu0 0
  %5439 = vmatpush1.bf16.msra.mxu0 0
  %5440 = vmatprep.subr.bf16.mxu0 0
  %5441 = vmatpush1.bf16.msra.mxu0 0
  %5442 = vmatprep.subr.bf16.mxu0 0
  %5443 = vmatpush1.bf16.msra.mxu0 0
  %5444 = vmatprep.mubr.bf16.mxu0 0
  %5445 = vmatmul.mubr.bf16.gmra.mrb[0].mxu0 %v5149
  %v5446 = vpop.f32.mrb[0].mxu0
  %v5447 = vadd.f32 %v5246, %v5446
  %v5448 = vpop.f32.mrb[0].mxu0
  %v5449 = vpop.f32.mrb[0].mxu0
  %v5450 = vadd.f32 %v5249, %v5449
  %v5451 = vpop.f32.mrb[0].mxu0
  %5452 = vmatprep.mubr.bf16.mxu0 0
  %5453 = vmatmul.mubr.bf16.gmra.mrb[0].mxu0 %v5152
  %v5454 = vpop.f32.mrb[0].mxu0
  %v5455 = vadd.f32 %v5254, %v5454
  %v5456 = vpop.f32.mrb[0].mxu0
  %v5457 = vpop.f32.mrb[0].mxu0
  %v5458 = vadd.f32 %v5257, %v5457
  %v5459 = vpop.f32.mrb[0].mxu0
  %5460 = vmatprep.mubr.bf16.mxu0 0
  %5461 = vmatmul.mubr.bf16.gmra.mrb[0].mxu0 %v5155
  %v5462 = vpop.f32.mrb[0].mxu0
  %v5463 = vadd.f32 %v5262, %v5462
  %v5464 = vpop.f32.mrb[0].mxu0
  %v5465 = vpop.f32.mrb[0].mxu0
  %v5466 = vadd.f32 %v5265, %v5465
  %v5467 = vpop.f32.mrb[0].mxu0
  %5468 = vmatprep.mubr.bf16.mxu0 0
  %5469 = vmatmul.mubr.bf16.gmra.mrb[0].mxu0 %v5158
  %v5470 = vpop.f32.mrb[0].mxu0
  %v5471 = vadd.f32 %v5270, %v5470
  %v5472 = vpop.f32.mrb[0].mxu0
  %v5473 = vpop.f32.mrb[0].mxu0
  %v5474 = vadd.f32 %v5273, %v5473
  %v5475 = vpop.f32.mrb[0].mxu0
  %5476 = vmatprep.mubr.bf16.mxu0 0
  %5477 = vmatmul.mubr.bf16.gmra.mrb[0].mxu0 %v5161
  %v5478 = vpop.f32.mrb[0].mxu0
  %v5479 = vadd.f32 %v5278, %v5478
  %v5480 = vpop.f32.mrb[0].mxu0
  %v5481 = vpop.f32.mrb[0].mxu0
  %v5482 = vadd.f32 %v5281, %v5481
  %v5483 = vpop.f32.mrb[0].mxu0
  %5484 = vmatprep.mubr.bf16.mxu0 0
  %5485 = vmatmul.mubr.bf16.gmra.mrb[0].mxu0 %v5164
  %v5486 = vpop.f32.mrb[0].mxu0
  %v5487 = vadd.f32 %v5286, %v5486
  %v5488 = vpop.f32.mrb[0].mxu0
  %v5489 = vpop.f32.mrb[0].mxu0
  %v5490 = vadd.f32 %v5289, %v5489
  %v5491 = vpop.f32.mrb[0].mxu0
  %5492 = vmatprep.mubr.bf16.mxu0 0
  %5493 = vmatmul.mubr.bf16.gmra.mrb[0].mxu0 %v5167
  %v5494 = vpop.f32.mrb[0].mxu0
  %v5495 = vadd.f32 %v5294, %v5494
  %v5496 = vpop.f32.mrb[0].mxu0
  %v5497 = vpop.f32.mrb[0].mxu0
  %v5498 = vadd.f32 %v5297, %v5497
  %v5499 = vpop.f32.mrb[0].mxu0
  %5500 = vmatprep.mubr.bf16.mxu0 0
  %5501 = vmatmul.mubr.bf16.gmra.mrb[0].mxu0 %v5170
  %v5502 = vpop.f32.mrb[0].mxu0
  %v5503 = vadd.f32 %v5302, %v5502
  %v5504 = vpop.f32.mrb[0].mxu0
  %v5505 = vpop.f32.mrb[0].mxu0
  %v5506 = vadd.f32 %v5305, %v5505
  %v5507 = vpop.f32.mrb[0].mxu0
  %5508 = vmatprep.mubr.bf16.mxu0 0
  %5509 = vmatmul.mubr.bf16.gmra.mrb[0].mxu0 %v5173
  %v5510 = vpop.f32.mrb[0].mxu0
  %v5511 = vadd.f32 %v5310, %v5510
  %v5512 = vpop.f32.mrb[0].mxu0
  %v5513 = vpop.f32.mrb[0].mxu0
  %v5514 = vadd.f32 %v5313, %v5513
  %v5515 = vpop.f32.mrb[0].mxu0
  %5516 = vmatprep.mubr.bf16.mxu0 0
  %5517 = vmatmul.mubr.bf16.gmra.mrb[0].mxu0 %v5176
  %v5518 = vpop.f32.mrb[0].mxu0
  %v5519 = vadd.f32 %v5318, %v5518
  %v5520 = vpop.f32.mrb[0].mxu0
  %v5521 = vpop.f32.mrb[0].mxu0
  %v5522 = vadd.f32 %v5321, %v5521
  %v5523 = vpop.f32.mrb[0].mxu0
  %5524 = vmatprep.mubr.bf16.mxu0 0
  %5525 = vmatmul.mubr.bf16.gmra.mrb[0].mxu0 %v5179
  %v5526 = vpop.f32.mrb[0].mxu0
  %v5527 = vadd.f32 %v5326, %v5526
  %v5528 = vpop.f32.mrb[0].mxu0
  %v5529 = vpop.f32.mrb[0].mxu0
  %v5530 = vadd.f32 %v5329, %v5529
  %v5531 = vpop.f32.mrb[0].mxu0
  %5532 = vmatprep.mubr.bf16.mxu0 0
  %5533 = vmatmul.mubr.bf16.gmra.mrb[0].mxu0 %v5182
  %v5534 = vpop.f32.mrb[0].mxu0
  %v5535 = vadd.f32 %v5334, %v5534
  %v5536 = vpop.f32.mrb[0].mxu0
  %v5537 = vpop.f32.mrb[0].mxu0
  %v5538 = vadd.f32 %v5337, %v5537
  %v5539 = vpop.f32.mrb[0].mxu0
  %5540 = vmatprep.mubr.bf16.mxu0 0
  %5541 = vmatmul.mubr.bf16.gmra.mrb[0].mxu0 %v5185
  %v5542 = vpop.f32.mrb[0].mxu0
  %v5543 = vadd.f32 %v5342, %v5542
  %v5544 = vpop.f32.mrb[0].mxu0
  %v5545 = vpop.f32.mrb[0].mxu0
  %v5546 = vadd.f32 %v5345, %v5545
  %v5547 = vpop.f32.mrb[0].mxu0
  %5548 = vmatprep.mubr.bf16.mxu0 0
  %5549 = vmatmul.mubr.bf16.gmra.mrb[0].mxu0 %v5188
  %v5550 = vpop.f32.mrb[0].mxu0
  %v5551 = vadd.f32 %v5350, %v5550
  %v5552 = vpop.f32.mrb[0].mxu0
  %v5553 = vpop.f32.mrb[0].mxu0
  %v5554 = vadd.f32 %v5353, %v5553
  %v5555 = vpop.f32.mrb[0].mxu0
  %5556 = vmatprep.mubr.bf16.mxu0 0
  %5557 = vmatmul.mubr.bf16.gmra.mrb[0].mxu0 %v5191
  %v5558 = vpop.f32.mrb[0].mxu0
  %v5559 = vadd.f32 %v5358, %v5558
  %v5560 = vpop.f32.mrb[0].mxu0
  %v5561 = vpop.f32.mrb[0].mxu0
  %v5562 = vadd.f32 %v5361, %v5561
  %v5563 = vpop.f32.mrb[0].mxu0
  %5564 = vmatprep.mubr.bf16.mxu0 0
  %5565 = vmatmul.mubr.bf16.gmra.mrb[0].mxu0 %v5194
  %v5566 = vpop.f32.mrb[0].mxu0
  %v5567 = vadd.f32 %v5366, %v5566
  %v5568 = vpop.f32.mrb[0].mxu0
  %v5569 = vpop.f32.mrb[0].mxu0
  %v5570 = vadd.f32 %v5369, %v5569
  %v5571 = vpop.f32.mrb[0].mxu0
  %5572 = vmatprep.mubr.bf16.mxu0 0
  %5573 = vmatmul.mubr.bf16.gmra.mrb[0].mxu0 %v5197
  %v5574 = vpop.f32.mrb[0].mxu0
  %v5575 = vadd.f32 %v5374, %v5574
  %v5576 = vpop.f32.mrb[0].mxu0
  %v5577 = vpop.f32.mrb[0].mxu0
  %v5578 = vadd.f32 %v5377, %v5577
  %v5579 = vpop.f32.mrb[0].mxu0
  %5580 = vmatprep.mubr.bf16.mxu0 0
  %5581 = vmatmul.mubr.bf16.gmra.mrb[0].mxu0 %v5200
  %v5582 = vpop.f32.mrb[0].mxu0
  %v5583 = vadd.f32 %v5382, %v5582
  %v5584 = vpop.f32.mrb[0].mxu0
  %v5585 = vpop.f32.mrb[0].mxu0
  %v5586 = vadd.f32 %v5385, %v5585
  %v5587 = vpop.f32.mrb[0].mxu0
  %5588 = vmatprep.mubr.bf16.mxu0 0
  %5589 = vmatmul.mubr.bf16.gmra.mrb[0].mxu0 %v5203
  %v5590 = vpop.f32.mrb[0].mxu0
  %v5591 = vadd.f32 %v5390, %v5590
  %v5592 = vpop.f32.mrb[0].mxu0
  %v5593 = vpop.f32.mrb[0].mxu0
  %v5594 = vadd.f32 %v5393, %v5593
  %v5595 = vpop.f32.mrb[0].mxu0
  %5596 = vmatprep.mubr.bf16.mxu0 0
  %5597 = vmatmul.mubr.bf16.gmra.mrb[0].mxu0 %v5206
  %v5598 = vpop.f32.mrb[0].mxu0
  %v5599 = vadd.f32 %v5398, %v5598
  %v5600 = vpop.f32.mrb[0].mxu0
  %v5601 = vpop.f32.mrb[0].mxu0
  %v5602 = vadd.f32 %v5401, %v5601
  %v5603 = vpop.f32.mrb[0].mxu0
  %5604 = vmatprep.mubr.bf16.mxu0 0
  %5605 = vmatmul.mubr.bf16.gmra.mrb[0].mxu0 %v5209
  %v5606 = vpop.f32.mrb[0].mxu0
  %v5607 = vadd.f32 %v5406, %v5606
  %v5608 = vpop.f32.mrb[0].mxu0
  %v5609 = vpop.f32.mrb[0].mxu0
  %v5610 = vadd.f32 %v5409, %v5609
  %v5611 = vpop.f32.mrb[0].mxu0
  %5612 = vdwg.mxu0
  %v5613 = vadd.f32 %v4837, %v5447
  %v5614 = vadd.f32 %v4840, %v5450
  %v5615 = vadd.f32 %v4845, %v5455
  %v5616 = vadd.f32 %v4848, %v5458
  %v5617 = vadd.f32 %v4853, %v5463
  %v5618 = vadd.f32 %v4856, %v5466
  %v5619 = vadd.f32 %v4861, %v5471
  %v5620 = vadd.f32 %v4864, %v5474
  %v5621 = vadd.f32 %v4869, %v5479
  %v5622 = vadd.f32 %v4872, %v5482
  %v5623 = vadd.f32 %v4877, %v5487
  %v5624 = vadd.f32 %v4880, %v5490
  %v5625 = vadd.f32 %v4885, %v5495
  %v5626 = vadd.f32 %v4888, %v5498
  %v5627 = vadd.f32 %v4893, %v5503
  %v5628 = vadd.f32 %v4896, %v5506
  %v5629 = vadd.f32 %v4901, %v5511
  %v5630 = vadd.f32 %v4904, %v5514
  %v5631 = vadd.f32 %v4909, %v5519
  %v5632 = vadd.f32 %v4912, %v5522
  %v5633 = vadd.f32 %v4917, %v5527
  %v5634 = vadd.f32 %v4920, %v5530
  %v5635 = vadd.f32 %v4925, %v5535
  %v5636 = vadd.f32 %v4928, %v5538
  %v5637 = vadd.f32 %v4933, %v5543
  %v5638 = vadd.f32 %v4936, %v5546
  %v5639 = vadd.f32 %v4941, %v5551
  %v5640 = vadd.f32 %v4944, %v5554
  %v5641 = vadd.f32 %v4949, %v5559
  %v5642 = vadd.f32 %v4952, %v5562
  %v5643 = vadd.f32 %v4957, %v5567
  %v5644 = vadd.f32 %v4960, %v5570
  %v5645 = vadd.f32 %v4965, %v5575
  %v5646 = vadd.f32 %v4968, %v5578
  %v5647 = vadd.f32 %v4973, %v5583
  %v5648 = vadd.f32 %v4976, %v5586
  %v5649 = vadd.f32 %v4981, %v5591
  %v5650 = vadd.f32 %v4984, %v5594
  %v5651 = vadd.f32 %v4989, %v5599
  %v5652 = vadd.f32 %v4992, %v5602
  %v5653 = vadd.f32 %v4997, %v5607
  %v5654 = vadd.f32 %v5000, %v5610
  %v5655 = vld [vmem:[%s4] sm:$0x1]
  %v5657 = vlaneseq
  %v5658 = vshrl.u32 %v5657, 7
  %v5659 = vsub.s32 0, %v5658
  %v5660 = vrot.slane %v5655, %v5659
  %v5662 = vadd.f32 %v5613, %v5660
  %v5663 = vadd.f32 %v5614, %v5660
  %v5664 = vadd.f32 %v5615, %v5660
  %v5665 = vadd.f32 %v5616, %v5660
  %v5666 = vadd.f32 %v5617, %v5660
  %v5667 = vadd.f32 %v5618, %v5660
  %v5668 = vadd.f32 %v5619, %v5660
  %v5669 = vadd.f32 %v5620, %v5660
  %v5670 = vadd.f32 %v5621, %v5660
  %v5671 = vadd.f32 %v5622, %v5660
  %v5672 = vadd.f32 %v5623, %v5660
  %v5673 = vadd.f32 %v5624, %v5660
  %v5674 = vadd.f32 %v5625, %v5660
  %v5675 = vadd.f32 %v5626, %v5660
  %v5676 = vadd.f32 %v5627, %v5660
  %v5677 = vadd.f32 %v5628, %v5660
  %v5678 = vadd.f32 %v5629, %v5660
  %v5679 = vadd.f32 %v5630, %v5660
  %v5680 = vadd.f32 %v5631, %v5660
  %v5681 = vadd.f32 %v5632, %v5660
  %v5682 = vadd.f32 %v5633, %v5660
  %v5683 = vadd.f32 %v5634, %v5660
  %v5684 = vadd.f32 %v5635, %v5660
  %v5685 = vadd.f32 %v5636, %v5660
  %v5686 = vadd.f32 %v5637, %v5660
  %v5687 = vadd.f32 %v5638, %v5660
  %v5688 = vadd.f32 %v5639, %v5660
  %v5689 = vadd.f32 %v5640, %v5660
  %v5690 = vadd.f32 %v5641, %v5660
  %v5691 = vadd.f32 %v5642, %v5660
  %v5692 = vadd.f32 %v5643, %v5660
  %v5693 = vadd.f32 %v5644, %v5660
  %v5694 = vadd.f32 %v5645, %v5660
  %v5695 = vadd.f32 %v5646, %v5660
  %v5696 = vadd.f32 %v5647, %v5660
  %v5697 = vadd.f32 %v5648, %v5660
  %v5698 = vadd.f32 %v5649, %v5660
  %v5699 = vadd.f32 %v5650, %v5660
  %v5700 = vadd.f32 %v5651, %v5660
  %v5701 = vadd.f32 %v5652, %v5660
  %v5702 = vadd.f32 %v5653, %v5660
  %v5703 = vadd.f32 %v5654, %v5660
  %vm5704 = vcmp.gt.f32.partialorder %v5662, 0.0
  %vm5705 = vcmp.gt.f32.partialorder %v5663, 0.0
  %vm5706 = vcmp.gt.f32.partialorder %v5664, 0.0
  %vm5707 = vcmp.gt.f32.partialorder %v5665, 0.0
  %vm5708 = vcmp.gt.f32.partialorder %v5666, 0.0
  %vm5709 = vcmp.gt.f32.partialorder %v5667, 0.0
  %vm5710 = vcmp.gt.f32.partialorder %v5668, 0.0
  %vm5711 = vcmp.gt.f32.partialorder %v5669, 0.0
  %vm5712 = vcmp.gt.f32.partialorder %v5670, 0.0
  %vm5713 = vcmp.gt.f32.partialorder %v5671, 0.0
  %vm5714 = vcmp.gt.f32.partialorder %v5672, 0.0
  %vm5715 = vcmp.gt.f32.partialorder %v5673, 0.0
  %vm5716 = vcmp.gt.f32.partialorder %v5674, 0.0
  %vm5717 = vcmp.gt.f32.partialorder %v5675, 0.0
  %vm5718 = vcmp.gt.f32.partialorder %v5676, 0.0
  %vm5719 = vcmp.gt.f32.partialorder %v5677, 0.0
  %vm5720 = vcmp.gt.f32.partialorder %v5678, 0.0
  %vm5721 = vcmp.gt.f32.partialorder %v5679, 0.0
  %vm5722 = vcmp.gt.f32.partialorder %v5680, 0.0
  %vm5723 = vcmp.gt.f32.partialorder %v5681, 0.0
  %vm5724 = vcmp.gt.f32.partialorder %v5682, 0.0
  %vm5725 = vcmp.gt.f32.partialorder %v5683, 0.0
  %vm5726 = vcmp.gt.f32.partialorder %v5684, 0.0
  %vm5727 = vcmp.gt.f32.partialorder %v5685, 0.0
  %vm5728 = vcmp.gt.f32.partialorder %v5686, 0.0
  %vm5729 = vcmp.gt.f32.partialorder %v5687, 0.0
  %vm5730 = vcmp.gt.f32.partialorder %v5688, 0.0
  %vm5731 = vcmp.gt.f32.partialorder %v5689, 0.0
  %vm5732 = vcmp.gt.f32.partialorder %v5690, 0.0
  %vm5733 = vcmp.gt.f32.partialorder %v5691, 0.0
  %vm5734 = vcmp.gt.f32.partialorder %v5692, 0.0
  %vm5735 = vcmp.gt.f32.partialorder %v5693, 0.0
  %vm5736 = vcmp.gt.f32.partialorder %v5694, 0.0
  %vm5737 = vcmp.gt.f32.partialorder %v5695, 0.0
  %vm5738 = vcmp.gt.f32.partialorder %v5696, 0.0
  %vm5739 = vcmp.gt.f32.partialorder %v5697, 0.0
  %vm5740 = vcmp.gt.f32.partialorder %v5698, 0.0
  %vm5741 = vcmp.gt.f32.partialorder %v5699, 0.0
  %vm5742 = vcmp.gt.f32.partialorder %v5700, 0.0
  %vm5743 = vcmp.gt.f32.partialorder %v5701, 0.0
  %vm5744 = vcmp.gt.f32.partialorder %v5702, 0.0
  %vm5745 = vcmp.gt.f32.partialorder %v5703, 0.0
  %v5746 = vmul.f32 %v5662, 0.01
  %v5747 = vmul.f32 %v5663, 0.01
  %v5748 = vmul.f32 %v5664, 0.01
  %v5749 = vmul.f32 %v5665, 0.01
  %v5750 = vmul.f32 %v5666, 0.01
  %v5751 = vmul.f32 %v5667, 0.01
  %v5752 = vmul.f32 %v5668, 0.01
  %v5753 = vmul.f32 %v5669, 0.01
  %v5754 = vmul.f32 %v5670, 0.01
  %v5755 = vmul.f32 %v5671, 0.01
  %v5756 = vmul.f32 %v5672, 0.01
  %v5757 = vmul.f32 %v5673, 0.01
  %v5758 = vmul.f32 %v5674, 0.01
  %v5759 = vmul.f32 %v5675, 0.01
  %v5760 = vmul.f32 %v5676, 0.01
  %v5761 = vmul.f32 %v5677, 0.01
  %v5762 = vmul.f32 %v5678, 0.01
  %v5763 = vmul.f32 %v5679, 0.01
  %v5764 = vmul.f32 %v5680, 0.01
  %v5765 = vmul.f32 %v5681, 0.01
  %v5766 = vmul.f32 %v5682, 0.01
  %v5767 = vmul.f32 %v5683, 0.01
  %v5768 = vmul.f32 %v5684, 0.01
  %v5769 = vmul.f32 %v5685, 0.01
  %v5770 = vmul.f32 %v5686, 0.01
  %v5771 = vmul.f32 %v5687, 0.01
  %v5772 = vmul.f32 %v5688, 0.01
  %v5773 = vmul.f32 %v5689, 0.01
  %v5774 = vmul.f32 %v5690, 0.01
  %v5775 = vmul.f32 %v5691, 0.01
  %v5776 = vmul.f32 %v5692, 0.01
  %v5777 = vmul.f32 %v5693, 0.01
  %v5778 = vmul.f32 %v5694, 0.01
  %v5779 = vmul.f32 %v5695, 0.01
  %v5780 = vmul.f32 %v5696, 0.01
  %v5781 = vmul.f32 %v5697, 0.01
  %v5782 = vmul.f32 %v5698, 0.01
  %v5783 = vmul.f32 %v5699, 0.01
  %v5784 = vmul.f32 %v5700, 0.01
  %v5785 = vmul.f32 %v5701, 0.01
  %v5786 = vmul.f32 %v5702, 0.01
  %v5787 = vmul.f32 %v5703, 0.01
  %v5788 = vsel %vm5704, %v5662, %v5746
  %v5789 = vsel %vm5705, %v5663, %v5747
  %v5790 = vsel %vm5706, %v5664, %v5748
  %v5791 = vsel %vm5707, %v5665, %v5749
  %v5792 = vsel %vm5708, %v5666, %v5750
  %v5793 = vsel %vm5709, %v5667, %v5751
  %v5794 = vsel %vm5710, %v5668, %v5752
  %v5795 = vsel %vm5711, %v5669, %v5753
  %v5796 = vsel %vm5712, %v5670, %v5754
  %v5797 = vsel %vm5713, %v5671, %v5755
  %v5798 = vsel %vm5714, %v5672, %v5756
  %v5799 = vsel %vm5715, %v5673, %v5757
  %v5800 = vsel %vm5716, %v5674, %v5758
  %v5801 = vsel %vm5717, %v5675, %v5759
  %v5802 = vsel %vm5718, %v5676, %v5760
  %v5803 = vsel %vm5719, %v5677, %v5761
  %v5804 = vsel %vm5720, %v5678, %v5762
  %v5805 = vsel %vm5721, %v5679, %v5763
  %v5806 = vsel %vm5722, %v5680, %v5764
  %v5807 = vsel %vm5723, %v5681, %v5765
  %v5808 = vsel %vm5724, %v5682, %v5766
  %v5809 = vsel %vm5725, %v5683, %v5767
  %v5810 = vsel %vm5726, %v5684, %v5768
  %v5811 = vsel %vm5727, %v5685, %v5769
  %v5812 = vsel %vm5728, %v5686, %v5770
  %v5813 = vsel %vm5729, %v5687, %v5771
  %v5814 = vsel %vm5730, %v5688, %v5772
  %v5815 = vsel %vm5731, %v5689, %v5773
  %v5816 = vsel %vm5732, %v5690, %v5774
  %v5817 = vsel %vm5733, %v5691, %v5775
  %v5818 = vsel %vm5734, %v5692, %v5776
  %v5819 = vsel %vm5735, %v5693, %v5777
  %v5820 = vsel %vm5736, %v5694, %v5778
  %v5821 = vsel %vm5737, %v5695, %v5779
  %v5822 = vsel %vm5738, %v5696, %v5780
  %v5823 = vsel %vm5739, %v5697, %v5781
  %v5824 = vsel %vm5740, %v5698, %v5782
  %v5825 = vsel %vm5741, %v5699, %v5783
  %v5826 = vsel %vm5742, %v5700, %v5784
  %v5827 = vsel %vm5743, %v5701, %v5785
  %v5828 = vsel %vm5744, %v5702, %v5786
  %v5829 = vsel %vm5745, %v5703, %v5787
  %v5830 = vpack.c.bf16 %v5789, %v5788
  %v5831 = vpack.c.bf16 %v5791, %v5790
  %v5832 = vpack.c.bf16 %v5793, %v5792
  %v5833 = vpack.c.bf16 %v5795, %v5794
  %v5834 = vpack.c.bf16 %v5797, %v5796
  %v5835 = vpack.c.bf16 %v5799, %v5798
  %v5836 = vpack.c.bf16 %v5801, %v5800
  %v5837 = vpack.c.bf16 %v5803, %v5802
  %v5838 = vpack.c.bf16 %v5805, %v5804
  %v5839 = vpack.c.bf16 %v5807, %v5806
  %v5840 = vpack.c.bf16 %v5809, %v5808
  %v5841 = vpack.c.bf16 %v5811, %v5810
  %v5842 = vpack.c.bf16 %v5813, %v5812
  %v5843 = vpack.c.bf16 %v5815, %v5814
  %v5844 = vpack.c.bf16 %v5817, %v5816
  %v5845 = vpack.c.bf16 %v5819, %v5818
  %v5846 = vpack.c.bf16 %v5821, %v5820
  %v5847 = vpack.c.bf16 %v5823, %v5822
  %v5848 = vpack.c.bf16 %v5825, %v5824
  %v5849 = vpack.c.bf16 %v5827, %v5826
  %v5850 = vpack.c.bf16 %v5829, %v5828
  %v5851 = vld [vmem:[%s5] sm:$0xf]
  %v5852 = vld [vmem:[%s5 + $0x4] sm:$0xf]
  %v5853 = vld [vmem:[%s5 + $0x8] sm:$0xf]
  %v5854 = vld [vmem:[%s5 + $0xc] sm:$0xf]
  %v5855 = vld [vmem:[%s5 + $0x10] sm:$0xf]
  %v5856 = vld [vmem:[%s5 + $0x14] sm:$0xf]
  %v5857 = vld [vmem:[%s5 + $0x18] sm:$0xf]
  %v5858 = vld [vmem:[%s5 + $0x1c] sm:$0xf]
  %v5859 = vld [vmem:[%s5 + $0x20] sm:$0xf]
  %v5860 = vld [vmem:[%s5 + $0x24] sm:$0xf]
  %v5861 = vld [vmem:[%s5 + $0x28] sm:$0xf]
  %v5862 = vld [vmem:[%s5 + $0x2c] sm:$0xf]
  %s5863 = scalar_lea.vmem %s5, 48
  %v5864 = vld [vmem:[%s5863] sm:$0xf]
  %v5865 = vld [vmem:[%s5863 + $0x4] sm:$0xf]
  %v5866 = vld [vmem:[%s5863 + $0x8] sm:$0xf]
  %v5867 = vld [vmem:[%s5863 + $0xc] sm:$0xf]
  %v5868 = vld [vmem:[%s5863 + $0x10] sm:$0xf]
  %v5869 = vld [vmem:[%s5863 + $0x14] sm:$0xf]
  %v5870 = vld [vmem:[%s5863 + $0x18] sm:$0xf]
  %v5871 = vld [vmem:[%s5863 + $0x1c] sm:$0xf]
  %v5872 = vld [vmem:[%s5863 + $0x20] sm:$0xf]
  %v5873 = vld [vmem:[%s5863 + $0x24] sm:$0xf]
  %v5874 = vld [vmem:[%s5863 + $0x28] sm:$0xf]
  %v5875 = vld [vmem:[%s5863 + $0x2c] sm:$0xf]
  %v5888 = vunpack.c.l.b16 %v5864
  %v5889 = vunpack.c.l.b16 %v5865
  %v5890 = vunpack.c.l.b16 %v5866
  %v5891 = vunpack.c.l.b16 %v5867
  %v5892 = vunpack.c.l.b16 %v5868
  %v5893 = vunpack.c.l.b16 %v5869
  %v5894 = vunpack.c.l.b16 %v5870
  %v5895 = vunpack.c.l.b16 %v5871
  %v5896 = vunpack.c.l.b16 %v5872
  %v5897 = vunpack.c.l.b16 %v5873
  %v5898 = vunpack.c.l.b16 %v5874
  %v5899 = vunpack.c.l.b16 %v5875
  %v5900 = vpack.c.b16 %v5889, %v5888
  %v5901 = vpack.c.b16 %v5891, %v5890
  %v5902 = vpack.c.b16 %v5893, %v5892
  %v5903 = vpack.c.b16 %v5895, %v5894
  %v5904 = vpack.c.b16 %v5897, %v5896
  %v5905 = vpack.c.b16 %v5899, %v5898
  %vm5912 = vcmask 785408
  %v5914 = vsel %vm5912, %v5837, 0
  %v5917 = vsel %vm5912, %v5838, 0
  %v5920 = vsel %vm5912, %v5839, 0
  %v5923 = vsel %vm5912, %v5840, 0
  %v5926 = vsel %vm5912, %v5841, 0
  %v5929 = vsel %vm5912, %v5842, 0
  %v5932 = vsel %vm5912, %v5843, 0
  %5934 = vmatprep.subr.bf16.mxu0 0
  %5935 = vmatpush1.bf16.msra.mxu0 %v5900
  %5936 = vmatprep.subr.bf16.mxu0 0
  %5937 = vmatpush1.bf16.msra.mxu0 %v5901
  %5938 = vmatprep.subr.bf16.mxu0 0
  %5939 = vmatpush1.bf16.msra.mxu0 %v5902
  %5940 = vmatprep.subr.bf16.mxu0 0
  %5941 = vmatpush1.bf16.msra.mxu0 %v5903
  %5942 = vmatprep.subr.bf16.mxu0 0
  %5943 = vmatpush1.bf16.msra.mxu0 %v5904
  %5944 = vmatprep.subr.bf16.mxu0 0
  %5945 = vmatpush1.bf16.msra.mxu0 %v5905
  %5946 = vmatprep.subr.bf16.mxu0 0
  %5947 = vmatpush1.bf16.msra.mxu0 0
  %5948 = vmatprep.subr.bf16.mxu0 0
  %5949 = vmatpush1.bf16.msra.mxu0 0
  %5950 = vmatprep.subr.bf16.mxu0 0
  %5951 = vmatpush1.bf16.msra.mxu0 0
  %5952 = vmatprep.subr.bf16.mxu0 0
  %5953 = vmatpush1.bf16.msra.mxu0 0
  %5954 = vmatprep.subr.bf16.mxu0 0
  %5955 = vmatpush1.bf16.msra.mxu0 0
  %5956 = vmatprep.subr.bf16.mxu0 0
  %5957 = vmatpush1.bf16.msra.mxu0 0
  %5958 = vmatprep.subr.bf16.mxu0 0
  %5959 = vmatpush1.bf16.msra.mxu0 0
  %5960 = vmatprep.subr.bf16.mxu0 0
  %5961 = vmatpush1.bf16.msra.mxu0 0
  %5962 = vmatprep.subr.bf16.mxu0 0
  %5963 = vmatpush1.bf16.msra.mxu0 0
  %5964 = vmatprep.subr.bf16.mxu0 0
  %5965 = vmatpush1.bf16.msra.mxu0 0
  %5966 = vmatprep.mubr.bf16.mxu0 0
  %5967 = vmatmul.mubr.bf16.gmra.mrb[0].mxu0 %v5914
  %v5968 = vpop.f32.mrb[0].mxu0
  %v5969 = vadd.f32 0.0, %v5968
  %v5970 = vpop.f32.mrb[0].mxu0
  %v5971 = vpop.f32.mrb[0].mxu0
  %v5972 = vadd.f32 0.0, %v5971
  %v5973 = vpop.f32.mrb[0].mxu0
  %5974 = vmatprep.mubr.bf16.mxu0 0
  %5975 = vmatmul.mubr.bf16.gmra.mrb[0].mxu0 %v5917
  %v5976 = vpop.f32.mrb[0].mxu0
  %v5977 = vadd.f32 0.0, %v5976
  %v5978 = vpop.f32.mrb[0].mxu0
  %v5979 = vpop.f32.mrb[0].mxu0
  %v5980 = vadd.f32 0.0, %v5979
  %v5981 = vpop.f32.mrb[0].mxu0
  %5982 = vmatprep.mubr.bf16.mxu0 0
  %5983 = vmatmul.mubr.bf16.gmra.mrb[0].mxu0 %v5920
  %v5984 = vpop.f32.mrb[0].mxu0
  %v5985 = vadd.f32 0.0, %v5984
  %v5986 = vpop.f32.mrb[0].mxu0
  %v5987 = vpop.f32.mrb[0].mxu0
  %v5988 = vadd.f32 0.0, %v5987
  %v5989 = vpop.f32.mrb[0].mxu0
  %5990 = vmatprep.mubr.bf16.mxu0 0
  %5991 = vmatmul.mubr.bf16.gmra.mrb[0].mxu0 %v5923
  %v5992 = vpop.f32.mrb[0].mxu0
  %v5993 = vadd.f32 0.0, %v5992
  %v5994 = vpop.f32.mrb[0].mxu0
  %v5995 = vpop.f32.mrb[0].mxu0
  %v5996 = vadd.f32 0.0, %v5995
  %v5997 = vpop.f32.mrb[0].mxu0
  %5998 = vmatprep.mubr.bf16.mxu0 0
  %5999 = vmatmul.mubr.bf16.gmra.mrb[0].mxu0 %v5926
  %v6000 = vpop.f32.mrb[0].mxu0
  %v6001 = vadd.f32 0.0, %v6000
  %v6002 = vpop.f32.mrb[0].mxu0
  %v6003 = vpop.f32.mrb[0].mxu0
  %v6004 = vadd.f32 0.0, %v6003
  %v6005 = vpop.f32.mrb[0].mxu0
  %6006 = vmatprep.mubr.bf16.mxu0 0
  %6007 = vmatmul.mubr.bf16.gmra.mrb[0].mxu0 %v5929
  %v6008 = vpop.f32.mrb[0].mxu0
  %v6009 = vadd.f32 0.0, %v6008
  %v6010 = vpop.f32.mrb[0].mxu0
  %v6011 = vpop.f32.mrb[0].mxu0
  %v6012 = vadd.f32 0.0, %v6011
  %v6013 = vpop.f32.mrb[0].mxu0
  %6014 = vmatprep.mubr.bf16.mxu0 0
  %6015 = vmatmul.mubr.bf16.gmra.mrb[0].mxu0 %v5932
  %v6016 = vpop.f32.mrb[0].mxu0
  %v6017 = vadd.f32 0.0, %v6016
  %v6018 = vpop.f32.mrb[0].mxu0
  %v6019 = vpop.f32.mrb[0].mxu0
  %v6020 = vadd.f32 0.0, %v6019
  %v6021 = vpop.f32.mrb[0].mxu0
  %6022 = vdwg.mxu0
  %v6035 = vunpack.c.l.b16 %v5851
  %v6036 = vunpack.c.l.b16 %v5852
  %v6037 = vunpack.c.l.b16 %v5853
  %v6038 = vunpack.c.l.b16 %v5854
  %v6039 = vunpack.c.l.b16 %v5855
  %v6040 = vunpack.c.l.b16 %v5856
  %v6041 = vunpack.c.l.b16 %v5857
  %v6042 = vunpack.c.l.b16 %v5858
  %v6043 = vunpack.c.l.b16 %v5859
  %v6044 = vunpack.c.l.b16 %v5860
  %v6045 = vunpack.c.l.b16 %v5861
  %v6046 = vunpack.c.l.b16 %v5862
  %v6047 = vpack.c.b16 %v6036, %v6035
  %v6048 = vpack.c.b16 %v6038, %v6037
  %v6049 = vpack.c.b16 %v6040, %v6039
  %v6050 = vpack.c.b16 %v6042, %v6041
  %v6051 = vpack.c.b16 %v6044, %v6043
  %v6052 = vpack.c.b16 %v6046, %v6045
  %v6060 = vsel %vm5912, %v5830, 0
  %v6063 = vsel %vm5912, %v5831, 0
  %v6066 = vsel %vm5912, %v5832, 0
  %v6069 = vsel %vm5912, %v5833, 0
  %v6072 = vsel %vm5912, %v5834, 0
  %v6075 = vsel %vm5912, %v5835, 0
  %v6078 = vsel %vm5912, %v5836, 0
  %6080 = vmatprep.subr.bf16.mxu0 0
  %6081 = vmatpush1.bf16.msra.mxu0 %v6047
  %6082 = vmatprep.subr.bf16.mxu0 0
  %6083 = vmatpush1.bf16.msra.mxu0 %v6048
  %6084 = vmatprep.subr.bf16.mxu0 0
  %6085 = vmatpush1.bf16.msra.mxu0 %v6049
  %6086 = vmatprep.subr.bf16.mxu0 0
  %6087 = vmatpush1.bf16.msra.mxu0 %v6050
  %6088 = vmatprep.subr.bf16.mxu0 0
  %6089 = vmatpush1.bf16.msra.mxu0 %v6051
  %6090 = vmatprep.subr.bf16.mxu0 0
  %6091 = vmatpush1.bf16.msra.mxu0 %v6052
  %6092 = vmatprep.subr.bf16.mxu0 0
  %6093 = vmatpush1.bf16.msra.mxu0 0
  %6094 = vmatprep.subr.bf16.mxu0 0
  %6095 = vmatpush1.bf16.msra.mxu0 0
  %6096 = vmatprep.subr.bf16.mxu0 0
  %6097 = vmatpush1.bf16.msra.mxu0 0
  %6098 = vmatprep.subr.bf16.mxu0 0
  %6099 = vmatpush1.bf16.msra.mxu0 0
  %6100 = vmatprep.subr.bf16.mxu0 0
  %6101 = vmatpush1.bf16.msra.mxu0 0
  %6102 = vmatprep.subr.bf16.mxu0 0
  %6103 = vmatpush1.bf16.msra.mxu0 0
  %6104 = vmatprep.subr.bf16.mxu0 0
  %6105 = vmatpush1.bf16.msra.mxu0 0
  %6106 = vmatprep.subr.bf16.mxu0 0
  %6107 = vmatpush1.bf16.msra.mxu0 0
  %6108 = vmatprep.subr.bf16.mxu0 0
  %6109 = vmatpush1.bf16.msra.mxu0 0
  %6110 = vmatprep.subr.bf16.mxu0 0
  %6111 = vmatpush1.bf16.msra.mxu0 0
  %6112 = vmatprep.mubr.bf16.mxu0 0
  %6113 = vmatmul.mubr.bf16.gmra.mrb[0].mxu0 %v6060
  %v6114 = vpop.f32.mrb[0].mxu0
  %v6115 = vadd.f32 %v5969, %v6114
  %v6116 = vpop.f32.mrb[0].mxu0
  %v6117 = vpop.f32.mrb[0].mxu0
  %v6118 = vadd.f32 %v5972, %v6117
  %v6119 = vpop.f32.mrb[0].mxu0
  %6120 = vmatprep.mubr.bf16.mxu0 0
  %6121 = vmatmul.mubr.bf16.gmra.mrb[0].mxu0 %v6063
  %v6122 = vpop.f32.mrb[0].mxu0
  %v6123 = vadd.f32 %v5977, %v6122
  %v6124 = vpop.f32.mrb[0].mxu0
  %v6125 = vpop.f32.mrb[0].mxu0
  %v6126 = vadd.f32 %v5980, %v6125
  %v6127 = vpop.f32.mrb[0].mxu0
  %6128 = vmatprep.mubr.bf16.mxu0 0
  %6129 = vmatmul.mubr.bf16.gmra.mrb[0].mxu0 %v6066
  %v6130 = vpop.f32.mrb[0].mxu0
  %v6131 = vadd.f32 %v5985, %v6130
  %v6132 = vpop.f32.mrb[0].mxu0
  %v6133 = vpop.f32.mrb[0].mxu0
  %v6134 = vadd.f32 %v5988, %v6133
  %v6135 = vpop.f32.mrb[0].mxu0
  %6136 = vmatprep.mubr.bf16.mxu0 0
  %6137 = vmatmul.mubr.bf16.gmra.mrb[0].mxu0 %v6069
  %v6138 = vpop.f32.mrb[0].mxu0
  %v6139 = vadd.f32 %v5993, %v6138
  %v6140 = vpop.f32.mrb[0].mxu0
  %v6141 = vpop.f32.mrb[0].mxu0
  %v6142 = vadd.f32 %v5996, %v6141
  %v6143 = vpop.f32.mrb[0].mxu0
  %6144 = vmatprep.mubr.bf16.mxu0 0
  %6145 = vmatmul.mubr.bf16.gmra.mrb[0].mxu0 %v6072
  %v6146 = vpop.f32.mrb[0].mxu0
  %v6147 = vadd.f32 %v6001, %v6146
  %v6148 = vpop.f32.mrb[0].mxu0
  %v6149 = vpop.f32.mrb[0].mxu0
  %v6150 = vadd.f32 %v6004, %v6149
  %v6151 = vpop.f32.mrb[0].mxu0
  %6152 = vmatprep.mubr.bf16.mxu0 0
  %6153 = vmatmul.mubr.bf16.gmra.mrb[0].mxu0 %v6075
  %v6154 = vpop.f32.mrb[0].mxu0
  %v6155 = vadd.f32 %v6009, %v6154
  %v6156 = vpop.f32.mrb[0].mxu0
  %v6157 = vpop.f32.mrb[0].mxu0
  %v6158 = vadd.f32 %v6012, %v6157
  %v6159 = vpop.f32.mrb[0].mxu0
  %6160 = vmatprep.mubr.bf16.mxu0 0
  %6161 = vmatmul.mubr.bf16.gmra.mrb[0].mxu0 %v6078
  %v6162 = vpop.f32.mrb[0].mxu0
  %v6163 = vadd.f32 %v6017, %v6162
  %v6164 = vpop.f32.mrb[0].mxu0
  %v6165 = vpop.f32.mrb[0].mxu0
  %v6166 = vadd.f32 %v6020, %v6165
  %v6167 = vpop.f32.mrb[0].mxu0
  %6168 = vdwg.mxu0
  %s6169 = scalar_lea.vmem %s5, 96
  %v6170 = vld [vmem:[%s6169] sm:$0xf]
  %v6171 = vld [vmem:[%s6169 + $0x4] sm:$0xf]
  %v6172 = vld [vmem:[%s6169 + $0x8] sm:$0xf]
  %v6173 = vld [vmem:[%s6169 + $0xc] sm:$0xf]
  %v6174 = vld [vmem:[%s6169 + $0x10] sm:$0xf]
  %v6175 = vld [vmem:[%s6169 + $0x14] sm:$0xf]
  %v6176 = vld [vmem:[%s6169 + $0x18] sm:$0xf]
  %v6177 = vld [vmem:[%s6169 + $0x1c] sm:$0xf]
  %v6178 = vld [vmem:[%s6169 + $0x20] sm:$0xf]
  %v6179 = vld [vmem:[%s6169 + $0x24] sm:$0xf]
  %v6180 = vld [vmem:[%s6169 + $0x28] sm:$0xf]
  %v6181 = vld [vmem:[%s6169 + $0x2c] sm:$0xf]
  %v6194 = vunpack.c.l.b16 %v6170
  %v6195 = vunpack.c.l.b16 %v6171
  %v6196 = vunpack.c.l.b16 %v6172
  %v6197 = vunpack.c.l.b16 %v6173
  %v6198 = vunpack.c.l.b16 %v6174
  %v6199 = vunpack.c.l.b16 %v6175
  %v6200 = vunpack.c.l.b16 %v6176
  %v6201 = vunpack.c.l.b16 %v6177
  %v6202 = vunpack.c.l.b16 %v6178
  %v6203 = vunpack.c.l.b16 %v6179
  %v6204 = vunpack.c.l.b16 %v6180
  %v6205 = vunpack.c.l.b16 %v6181
  %v6206 = vpack.c.b16 %v6195, %v6194
  %v6207 = vpack.c.b16 %v6197, %v6196
  %v6208 = vpack.c.b16 %v6199, %v6198
  %v6209 = vpack.c.b16 %v6201, %v6200
  %v6210 = vpack.c.b16 %v6203, %v6202
  %v6211 = vpack.c.b16 %v6205, %v6204
  %v6219 = vsel %vm5912, %v5844, 0
  %v6222 = vsel %vm5912, %v5845, 0
  %v6225 = vsel %vm5912, %v5846, 0
  %v6228 = vsel %vm5912, %v5847, 0
  %v6231 = vsel %vm5912, %v5848, 0
  %v6234 = vsel %vm5912, %v5849, 0
  %v6237 = vsel %vm5912, %v5850, 0
  %6239 = vmatprep.subr.bf16.mxu0 0
  %6240 = vmatpush1.bf16.msra.mxu0 %v6206
  %6241 = vmatprep.subr.bf16.mxu0 0
  %6242 = vmatpush1.bf16.msra.mxu0 %v6207
  %6243 = vmatprep.subr.bf16.mxu0 0
  %6244 = vmatpush1.bf16.msra.mxu0 %v6208
  %6245 = vmatprep.subr.bf16.mxu0 0
  %6246 = vmatpush1.bf16.msra.mxu0 %v6209
  %6247 = vmatprep.subr.bf16.mxu0 0
  %6248 = vmatpush1.bf16.msra.mxu0 %v6210
  %6249 = vmatprep.subr.bf16.mxu0 0
  %6250 = vmatpush1.bf16.msra.mxu0 %v6211
  %6251 = vmatprep.subr.bf16.mxu0 0
  %6252 = vmatpush1.bf16.msra.mxu0 0
  %6253 = vmatprep.subr.bf16.mxu0 0
  %6254 = vmatpush1.bf16.msra.mxu0 0
  %6255 = vmatprep.subr.bf16.mxu0 0
  %6256 = vmatpush1.bf16.msra.mxu0 0
  %6257 = vmatprep.subr.bf16.mxu0 0
  %6258 = vmatpush1.bf16.msra.mxu0 0
  %6259 = vmatprep.subr.bf16.mxu0 0
  %6260 = vmatpush1.bf16.msra.mxu0 0
  %6261 = vmatprep.subr.bf16.mxu0 0
  %6262 = vmatpush1.bf16.msra.mxu0 0
  %6263 = vmatprep.subr.bf16.mxu0 0
  %6264 = vmatpush1.bf16.msra.mxu0 0
  %6265 = vmatprep.subr.bf16.mxu0 0
  %6266 = vmatpush1.bf16.msra.mxu0 0
  %6267 = vmatprep.subr.bf16.mxu0 0
  %6268 = vmatpush1.bf16.msra.mxu0 0
  %6269 = vmatprep.subr.bf16.mxu0 0
  %6270 = vmatpush1.bf16.msra.mxu0 0
  %6271 = vmatprep.mubr.bf16.mxu0 0
  %6272 = vmatmul.mubr.bf16.gmra.mrb[0].mxu0 %v6219
  %v6273 = vpop.f32.mrb[0].mxu0
  %v6274 = vadd.f32 0.0, %v6273
  %v6275 = vpop.f32.mrb[0].mxu0
  %v6276 = vpop.f32.mrb[0].mxu0
  %v6277 = vadd.f32 0.0, %v6276
  %v6278 = vpop.f32.mrb[0].mxu0
  %6279 = vmatprep.mubr.bf16.mxu0 0
  %6280 = vmatmul.mubr.bf16.gmra.mrb[0].mxu0 %v6222
  %v6281 = vpop.f32.mrb[0].mxu0
  %v6282 = vadd.f32 0.0, %v6281
  %v6283 = vpop.f32.mrb[0].mxu0
  %v6284 = vpop.f32.mrb[0].mxu0
  %v6285 = vadd.f32 0.0, %v6284
  %v6286 = vpop.f32.mrb[0].mxu0
  %6287 = vmatprep.mubr.bf16.mxu0 0
  %6288 = vmatmul.mubr.bf16.gmra.mrb[0].mxu0 %v6225
  %v6289 = vpop.f32.mrb[0].mxu0
  %v6290 = vadd.f32 0.0, %v6289
  %v6291 = vpop.f32.mrb[0].mxu0
  %v6292 = vpop.f32.mrb[0].mxu0
  %v6293 = vadd.f32 0.0, %v6292
  %v6294 = vpop.f32.mrb[0].mxu0
  %6295 = vmatprep.mubr.bf16.mxu0 0
  %6296 = vmatmul.mubr.bf16.gmra.mrb[0].mxu0 %v6228
  %v6297 = vpop.f32.mrb[0].mxu0
  %v6298 = vadd.f32 0.0, %v6297
  %v6299 = vpop.f32.mrb[0].mxu0
  %v6300 = vpop.f32.mrb[0].mxu0
  %v6301 = vadd.f32 0.0, %v6300
  %v6302 = vpop.f32.mrb[0].mxu0
  %6303 = vmatprep.mubr.bf16.mxu0 0
  %6304 = vmatmul.mubr.bf16.gmra.mrb[0].mxu0 %v6231
  %v6305 = vpop.f32.mrb[0].mxu0
  %v6306 = vadd.f32 0.0, %v6305
  %v6307 = vpop.f32.mrb[0].mxu0
  %v6308 = vpop.f32.mrb[0].mxu0
  %v6309 = vadd.f32 0.0, %v6308
  %v6310 = vpop.f32.mrb[0].mxu0
  %6311 = vmatprep.mubr.bf16.mxu0 0
  %6312 = vmatmul.mubr.bf16.gmra.mrb[0].mxu0 %v6234
  %v6313 = vpop.f32.mrb[0].mxu0
  %v6314 = vadd.f32 0.0, %v6313
  %v6315 = vpop.f32.mrb[0].mxu0
  %v6316 = vpop.f32.mrb[0].mxu0
  %v6317 = vadd.f32 0.0, %v6316
  %v6318 = vpop.f32.mrb[0].mxu0
  %6319 = vmatprep.mubr.bf16.mxu0 0
  %6320 = vmatmul.mubr.bf16.gmra.mrb[0].mxu0 %v6237
  %v6321 = vpop.f32.mrb[0].mxu0
  %v6322 = vadd.f32 0.0, %v6321
  %v6323 = vpop.f32.mrb[0].mxu0
  %v6324 = vpop.f32.mrb[0].mxu0
  %v6325 = vadd.f32 0.0, %v6324
  %v6326 = vpop.f32.mrb[0].mxu0
  %6327 = vdwg.mxu0
  %v6328 = vadd.f32 %v6115, %v6274
  %v6329 = vadd.f32 %v6118, %v6277
  %v6330 = vadd.f32 %v6123, %v6282
  %v6331 = vadd.f32 %v6126, %v6285
  %v6332 = vadd.f32 %v6131, %v6290
  %v6333 = vadd.f32 %v6134, %v6293
  %v6334 = vadd.f32 %v6139, %v6298
  %v6335 = vadd.f32 %v6142, %v6301
  %v6336 = vadd.f32 %v6147, %v6306
  %v6337 = vadd.f32 %v6150, %v6309
  %v6338 = vadd.f32 %v6155, %v6314
  %v6339 = vadd.f32 %v6158, %v6317
  %v6340 = vadd.f32 %v6163, %v6322
  %v6341 = vadd.f32 %v6166, %v6325
  %v6342 = vld [vmem:[%s6] sm:$0x1]
  %v6344 = vlaneseq
  %v6345 = vshrl.u32 %v6344, 7
  %v6346 = vsub.s32 0, %v6345
  %v6347 = vrot.slane %v6342, %v6346
  %v6349 = vadd.f32 %v6328, %v6347
  %v6350 = vadd.f32 %v6329, %v6347
  %v6351 = vadd.f32 %v6330, %v6347
  %v6352 = vadd.f32 %v6331, %v6347
  %v6353 = vadd.f32 %v6332, %v6347
  %v6354 = vadd.f32 %v6333, %v6347
  %v6355 = vadd.f32 %v6334, %v6347
  %v6356 = vadd.f32 %v6335, %v6347
  %v6357 = vadd.f32 %v6336, %v6347
  %v6358 = vadd.f32 %v6337, %v6347
  %v6359 = vadd.f32 %v6338, %v6347
  %v6360 = vadd.f32 %v6339, %v6347
  %v6361 = vadd.f32 %v6340, %v6347
  %v6362 = vadd.f32 %v6341, %v6347
  %vm6363 = vcmp.gt.f32.partialorder %v6349, 0.0
  %vm6364 = vcmp.gt.f32.partialorder %v6350, 0.0
  %vm6365 = vcmp.gt.f32.partialorder %v6351, 0.0
  %vm6366 = vcmp.gt.f32.partialorder %v6352, 0.0
  %vm6367 = vcmp.gt.f32.partialorder %v6353, 0.0
  %vm6368 = vcmp.gt.f32.partialorder %v6354, 0.0
  %vm6369 = vcmp.gt.f32.partialorder %v6355, 0.0
  %vm6370 = vcmp.gt.f32.partialorder %v6356, 0.0
  %vm6371 = vcmp.gt.f32.partialorder %v6357, 0.0
  %vm6372 = vcmp.gt.f32.partialorder %v6358, 0.0
  %vm6373 = vcmp.gt.f32.partialorder %v6359, 0.0
  %vm6374 = vcmp.gt.f32.partialorder %v6360, 0.0
  %vm6375 = vcmp.gt.f32.partialorder %v6361, 0.0
  %vm6376 = vcmp.gt.f32.partialorder %v6362, 0.0
  %v6377 = vmul.f32 %v6349, 0.01
  %v6378 = vmul.f32 %v6350, 0.01
  %v6379 = vmul.f32 %v6351, 0.01
  %v6380 = vmul.f32 %v6352, 0.01
  %v6381 = vmul.f32 %v6353, 0.01
  %v6382 = vmul.f32 %v6354, 0.01
  %v6383 = vmul.f32 %v6355, 0.01
  %v6384 = vmul.f32 %v6356, 0.01
  %v6385 = vmul.f32 %v6357, 0.01
  %v6386 = vmul.f32 %v6358, 0.01
  %v6387 = vmul.f32 %v6359, 0.01
  %v6388 = vmul.f32 %v6360, 0.01
  %v6389 = vmul.f32 %v6361, 0.01
  %v6390 = vmul.f32 %v6362, 0.01
  %v6391 = vsel %vm6363, %v6349, %v6377
  %v6392 = vsel %vm6364, %v6350, %v6378
  %v6393 = vsel %vm6365, %v6351, %v6379
  %v6394 = vsel %vm6366, %v6352, %v6380
  %v6395 = vsel %vm6367, %v6353, %v6381
  %v6396 = vsel %vm6368, %v6354, %v6382
  %v6397 = vsel %vm6369, %v6355, %v6383
  %v6398 = vsel %vm6370, %v6356, %v6384
  %v6399 = vsel %vm6371, %v6357, %v6385
  %v6400 = vsel %vm6372, %v6358, %v6386
  %v6401 = vsel %vm6373, %v6359, %v6387
  %v6402 = vsel %vm6374, %v6360, %v6388
  %v6403 = vsel %vm6375, %v6361, %v6389
  %v6404 = vsel %vm6376, %v6362, %v6390
  %v6405 = vld [vmem:[%s7] sm:$0xff]
  %v6406 = vld [vmem:[%s7 + $0x8] sm:$0xff]
  %v6407 = vld [vmem:[%s7 + $0x10] sm:$0xff]
  %v6408 = vld [vmem:[%s7 + $0x18] sm:$0xff]
  %v6409 = vld [vmem:[%s7 + $0x20] sm:$0xff]
  %v6410 = vld [vmem:[%s7 + $0x28] sm:$0xff]
  %v6411 = vld [vmem:[%s7 + $0x30] sm:$0xff]
  %v6412 = vld [vmem:[%s7 + $0x38] sm:$0xff]
  %v6413 = vld [vmem:[%s7 + $0x40] sm:$0xff]
  %v6414 = vld [vmem:[%s7 + $0x48] sm:$0xff]
  %v6415 = vld [vmem:[%s7 + $0x50] sm:$0xff]
  %v6416 = vld [vmem:[%s7 + $0x58] sm:$0xff]
  %v6417 = vld [vmem:[%s7 + $0x60] sm:$0xff]
  %v6418 = vld [vmem:[%s7 + $0x68] sm:$0xff]
  %v6419 = vmul.f32 %v6391, %v6405
  %v6420 = vmul.f32 %v6392, %v6406
  %v6421 = vmul.f32 %v6393, %v6407
  %v6422 = vmul.f32 %v6394, %v6408
  %v6423 = vmul.f32 %v6395, %v6409
  %v6424 = vmul.f32 %v6396, %v6410
  %v6425 = vmul.f32 %v6397, %v6411
  %v6426 = vmul.f32 %v6398, %v6412
  %v6427 = vmul.f32 %v6399, %v6413
  %v6428 = vmul.f32 %v6400, %v6414
  %v6429 = vmul.f32 %v6401, %v6415
  %v6430 = vmul.f32 %v6402, %v6416
  %v6431 = vmul.f32 %v6403, %v6417
  %v6432 = vmul.f32 %v6404, %v6418
  %v6433 = vsel %vm3964, %v6419, 0.0
  %6434 = vadd.xlane.f32.xlu0 %v6433
  %v6435 = vpop.xlane.xlu0 %6434
  %v6436 = vsel %vm3964, %v6420, 0.0
  %6437 = vadd.xlane.f32.xlu0 %v6436
  %v6438 = vpop.xlane.xlu0 %6437
  %v6439 = vsel %vm3964, %v6421, 0.0
  %6440 = vadd.xlane.f32.xlu0 %v6439
  %v6441 = vpop.xlane.xlu0 %6440
  %v6442 = vsel %vm3964, %v6422, 0.0
  %6443 = vadd.xlane.f32.xlu0 %v6442
  %v6444 = vpop.xlane.xlu0 %6443
  %v6445 = vsel %vm3964, %v6423, 0.0
  %6446 = vadd.xlane.f32.xlu0 %v6445
  %v6447 = vpop.xlane.xlu0 %6446
  %v6448 = vsel %vm3964, %v6424, 0.0
  %6449 = vadd.xlane.f32.xlu0 %v6448
  %v6450 = vpop.xlane.xlu0 %6449
  %v6451 = vsel %vm3964, %v6425, 0.0
  %6452 = vadd.xlane.f32.xlu0 %v6451
  %v6453 = vpop.xlane.xlu0 %6452
  %v6454 = vsel %vm3964, %v6426, 0.0
  %6455 = vadd.xlane.f32.xlu0 %v6454
  %v6456 = vpop.xlane.xlu0 %6455
  %v6457 = vsel %vm3964, %v6427, 0.0
  %6458 = vadd.xlane.f32.xlu0 %v6457
  %v6459 = vpop.xlane.xlu0 %6458
  %v6460 = vsel %vm3964, %v6428, 0.0
  %6461 = vadd.xlane.f32.xlu0 %v6460
  %v6462 = vpop.xlane.xlu0 %6461
  %v6463 = vsel %vm3964, %v6429, 0.0
  %6464 = vadd.xlane.f32.xlu0 %v6463
  %v6465 = vpop.xlane.xlu0 %6464
  %v6466 = vsel %vm3964, %v6430, 0.0
  %6467 = vadd.xlane.f32.xlu0 %v6466
  %v6468 = vpop.xlane.xlu0 %6467
  %v6469 = vsel %vm3964, %v6431, 0.0
  %6470 = vadd.xlane.f32.xlu0 %v6469
  %v6471 = vpop.xlane.xlu0 %6470
  %v6472 = vsel %vm3964, %v6432, 0.0
  %6473 = vadd.xlane.f32.xlu0 %v6472
  %v6474 = vpop.xlane.xlu0 %6473
  %v6475 = vld [vmem:[%s8] sm:$0x3]
  %s6476 = sld [smem:[#allocation2]]
  %v6477 = vstv %s6476
  %vm6478 = vcmask 916480
  %v6480 = vsel %vm6478, %v6475, 0
  %6482 = vmatprep.subr.mxu0 0.0
  %6483 = vmatpush1.msra.mxu0 %v6435
  %6484 = vmatprep.subr.mxu0 0.0
  %6485 = vmatpush1.msra.mxu0 %v6438
  %6486 = vmatprep.subr.mxu0 0.0
  %6487 = vmatpush1.msra.mxu0 %v6441
  %6488 = vmatprep.subr.mxu0 0.0
  %6489 = vmatpush1.msra.mxu0 %v6444
  %6490 = vmatprep.subr.mxu0 0.0
  %6491 = vmatpush1.msra.mxu0 %v6447
  %6492 = vmatprep.subr.mxu0 0.0
  %6493 = vmatpush1.msra.mxu0 %v6450
  %6494 = vmatprep.subr.mxu0 0.0
  %6495 = vmatpush1.msra.mxu0 %v6453
  %6496 = vmatprep.subr.mxu0 0.0
  %6497 = vmatpush1.msra.mxu0 %v6456
  %6498 = vmatprep.subr.mxu0 0.0
  %6499 = vmatpush1.msra.mxu0 %v6459
  %6500 = vmatprep.subr.mxu0 0.0
  %6501 = vmatpush1.msra.mxu0 %v6462
  %6502 = vmatprep.subr.mxu0 0.0
  %6503 = vmatpush1.msra.mxu0 %v6465
  %6504 = vmatprep.subr.mxu0 0.0
  %6505 = vmatpush1.msra.mxu0 %v6468
  %6506 = vmatprep.subr.mxu0 0.0
  %6507 = vmatpush1.msra.mxu0 %v6471
  %6508 = vmatprep.subr.mxu0 0.0
  %6509 = vmatpush1.msra.mxu0 %v6474
  %6510 = vmatprep.subr.mxu0 0.0
  %6511 = vmatpush1.msra.mxu0 0.0
  %6512 = vmatprep.subr.mxu0 0.0
  %6513 = vmatpush1.msra.mxu0 0.0
  %6514 = vmatprep.subr.mxu0 0.0
  %6515 = vmatpush1.msra.mxu0 0.0
  %6516 = vmatprep.subr.mxu0 0.0
  %6517 = vmatpush1.msra.mxu0 0.0
  %6518 = vmatprep.subr.mxu0 0.0
  %6519 = vmatpush1.msra.mxu0 0.0
  %6520 = vmatprep.subr.mxu0 0.0
  %6521 = vmatpush1.msra.mxu0 0.0
  %6522 = vmatprep.subr.mxu0 0.0
  %6523 = vmatpush1.msra.mxu0 0.0
  %6524 = vmatprep.subr.mxu0 0.0
  %6525 = vmatpush1.msra.mxu0 0.0
  %6526 = vmatprep.subr.mxu0 0.0
  %6527 = vmatpush1.msra.mxu0 0.0
  %6528 = vmatprep.subr.mxu0 0.0
  %6529 = vmatpush1.msra.mxu0 0.0
  %6530 = vmatprep.subr.mxu0 0.0
  %6531 = vmatpush1.msra.mxu0 0.0
  %6532 = vmatprep.subr.mxu0 0.0
  %6533 = vmatpush1.msra.mxu0 0.0
  %6534 = vmatprep.subr.mxu0 0.0
  %6535 = vmatpush1.msra.mxu0 0.0
  %6536 = vmatprep.subr.mxu0 0.0
  %6537 = vmatpush1.msra.mxu0 0.0
  %6538 = vmatprep.subr.mxu0 0.0
  %6539 = vmatpush1.msra.mxu0 0.0
  %6540 = vmatprep.subr.mxu0 0.0
  %6541 = vmatpush1.msra.mxu0 0.0
  %6542 = vmatprep.subr.mxu0 0.0
  %6543 = vmatpush1.msra.mxu0 0.0
  %6544 = vmatprep.subr.mxu0 0.0
  %6545 = vmatpush1.msra.mxu0 0.0
  %6546 = vmatprep.mubr.f32.mxu0 0.0
  %6547 = vmatmul.mubr.f32.gmra.mrb[0].mxu0 %v6480
  %v6548 = vpop.f32.mrb[0].mxu0
  %v6549 = vadd.f32 %v6477, %v6548
  %v6550 = vpop.f32.mrb[0].mxu0
  %6551 = vdwg.mxu0
  %vm6552 = vcmp.gt.f32.partialorder %v6549, 0.0
  %v6553 = vmul.f32 %v6549, 0.01
  %v6554 = vsel %vm6552, %v6549, %v6553
  %vm6555 = vcmask 1024
  %6556 = vst.msk [vmem:[%s10] sm:$0x3] %vm6555, %v6554
  // Predicated region
  $region42: #{forward.1} parent=0 // pred_check
    _
  $region43: #{forward.1} parent=0 // pred_check_branch
    %6558 = sbr.rel (0) target = $region45
  $region44: #{forward.1} parent=0 // pred_region
    _
  $region45: #{forward.1} parent=0 // pred_fallthru
    _
  // Predicated region
  $region46: #{forward.1} parent=0 // pred_check
    _
  $region47: #{forward.1} parent=0 // pred_check_branch
    %6560 = sbr.rel (0) target = $region49
  $region48: #{forward.1} parent=0 // pred_region
    _
  $region49: #{forward.1} parent=0 // pred_fallthru
    _

</llo_original>
